<compile_context>
chip_gen: v7x
topology: tpu7x:2x2x1
jax: 0.10.0
libtpu: 0.0.40
codegen_flags: <defaults>
</compile_context>

<pallas_src>
import functools

import numpy as np
import jax
import jax.numpy as jnp
from jax.experimental import pallas as pl
from jax.experimental.pallas import tpu as pltpu


LANE = 128  # slab width == lane dimension


# ----------------------------- slab layouts ---------------------------------

def _weight_slab_layout(depth, heads, emb, f_pad):
    """Row layout of the packed bf16 matmul-weight slab [rows, LANE]."""
    he = heads * emb
    ff = 4 * emb
    assert max(emb, he, ff, f_pad) <= LANE
    layout = {}
    off = 0

    def add(name, rows, cols):
        nonlocal off
        layout[name] = (off, rows, cols)
        off += rows

    add('wval', f_pad, emb)                 # block-diag value proj (+ folded tok emb)
    for l in range(depth):
        add(f'wq{l}', emb, he)              # scale folded in
        add(f'wk{l}', emb, he)              # scale folded in
        add(f'wv{l}', emb, he)
        add(f'wu{l}', he, emb)              # unify heads
        add(f'ff1{l}', emb, ff)
        add(f'ff2{l}', ff, emb)
    add('top', emb, emb)
    rows = ((off + 7) // 8) * 8             # sublane-aligned slab
    return layout, rows


def _param_slab_layout(depth, emb):
    """Row layout of the packed f32 bias / layernorm slab [rows, LANE]."""
    ff = 4 * emb
    layout = {}
    off = 0

    def add(name, cols):
        nonlocal off
        layout[name] = (off, cols)
        off += 1

    for l in range(depth):
        add(f'bu{l}', emb)
        add(f'ln1g{l}', emb)
        add(f'ln1b{l}', emb)
        add(f'ffb1{l}', ff)
        add(f'ffb2{l}', emb)
        add(f'ln2g{l}', emb)
        add(f'ln2b{l}', emb)
    add('topb', emb)
    rows = ((off + 7) // 8) * 8
    return layout, rows


def _pack_weight_slab(params, wval_eff, *, depth, heads, emb, f_pad):
    scale = float(emb) ** -0.25
    he = heads * emb
    layout, rows = _weight_slab_layout(depth, heads, emb, f_pad)
    slab = jnp.zeros((rows, LANE), jnp.float32)

    def put(s, name, mat):
        off, r, c = layout[name]
        return s.at[off:off + r, :c].set(mat.astype(jnp.float32))

    slab = put(slab, 'wval', wval_eff)
    for l in range(depth):
        wqkv = params['wqkv'][l]
        slab = put(slab, f'wq{l}', wqkv[:, 0:he] * scale)
        slab = put(slab, f'wk{l}', wqkv[:, he:2 * he] * scale)
        slab = put(slab, f'wv{l}', wqkv[:, 2 * he:3 * he])
        slab = put(slab, f'wu{l}', params['wu'][l])
        slab = put(slab, f'ff1{l}', params['ff_w1'][l])
        slab = put(slab, f'ff2{l}', params['ff_w2'][l])
    slab = put(slab, 'top', params['top_w'])
    return slab.astype(jnp.bfloat16), layout


def _pack_param_slab(params, *, depth, emb):
    layout, rows = _param_slab_layout(depth, emb)
    slab = jnp.zeros((rows, LANE), jnp.float32)

    def put(s, name, vec):
        off, c = layout[name]
        return s.at[off, :c].set(vec.reshape(-1).astype(jnp.float32))

    for l in range(depth):
        slab = put(slab, f'bu{l}', params['bu'][l])
        slab = put(slab, f'ln1g{l}', params['ln1_g'][l])
        slab = put(slab, f'ln1b{l}', params['ln1_b'][l])
        slab = put(slab, f'ffb1{l}', params['ff_b1'][l])
        slab = put(slab, f'ffb2{l}', params['ff_b2'][l])
        slab = put(slab, f'ln2g{l}', params['ln2_g'][l])
        slab = put(slab, f'ln2b{l}', params['ln2_b'][l])
    slab = put(slab, 'topb', params['top_b'])
    return slab, layout


# ----------------------------- Pallas kernel --------------------------------

def _fused_obs_encoder_kernel(feat_ref, w_ref, p_ref, out_ref, *,
                              depth, heads, emb, bsz, tokens, wlay, play):
    bt = bsz * tokens
    f32, bf16 = jnp.float32, jnp.bfloat16

    def w(name, r0=None, r1=None):           # static ref slice into the weight slab
        off, rows, cols = wlay[name]
        lo = off if r0 is None else off + r0
        hi = off + rows if r1 is None else off + r1
        return w_ref[lo:hi, :cols]

    def p(name):                             # static ref slice into the param slab
        off, cols = play[name]
        return p_ref[off:off + 1, :cols]

    def ln(xv, g, b, eps=1e-5):
        mu = jnp.mean(xv, axis=-1, keepdims=True)
        var = jnp.mean((xv - mu) ** 2, axis=-1, keepdims=True)
        return (xv - mu) * jax.lax.rsqrt(var + eps) * g + b

    # Fused (own|enemy|ally|history) value projections + token embedding: all
    # folded host-side into one block-diagonal weight -> ONE [BT,128]x[128,E]
    # MXU matmul produces the embedded tokens (biases come via indicator cols).
    x = jnp.dot(feat_ref[...], w('wval'), preferred_element_type=f32)      # [BT, E] f32

    for l in range(depth):                   # static python loop (depth is small)
        x16 = x.astype(bf16)
        # q/k already carry the 1/e^(1/4) scale (folded into the weights host-side)
        q = jnp.dot(x16, w(f'wq{l}'), preferred_element_type=f32)          # [BT, H*E]
        k = jnp.dot(x16, w(f'wk{l}'), preferred_element_type=f32)
        v = jnp.dot(x16, w(f'wv{l}'), preferred_element_type=f32)

        att = jnp.zeros((bt, emb), f32)
        for h in range(heads):               # tiny static head loop, no concat
            sl = slice(h * emb, (h + 1) * emb)
            qh = q[:, sl].reshape(bsz, tokens, emb).astype(bf16)
            kh = k[:, sl].reshape(bsz, tokens, emb).astype(bf16)
            vh = v[:, sl].reshape(bsz, tokens, emb).astype(bf16)
            s = jnp.einsum('bqe,bke->bqk', qh, kh, preferred_element_type=f32)
            s = s - jnp.max(s, axis=-1, keepdims=True)
            e = jnp.exp(s)
            prob = e * pl.reciprocal(jnp.sum(e, axis=-1, keepdims=True), approx=True)
            oh = jnp.einsum('bqk,bke->bqe', prob.astype(bf16), vh,
                            preferred_element_type=f32)                    # [B, T, E]
            # accumulate this head through its row-slice of the unify weight
            att = att + jnp.dot(oh.reshape(bt, emb).astype(bf16),
                                w(f'wu{l}', h * emb, (h + 1) * emb),
                                preferred_element_type=f32)
        att = att + p(f'bu{l}')
        x = ln(att + x, p(f'ln1g{l}'), p(f'ln1b{l}'))

        ffh = jnp.dot(x.astype(bf16), w(f'ff1{l}'),
                      preferred_element_type=f32) + p(f'ffb1{l}')
        ffh = jnp.maximum(ffh, 0.0)
        ffo = jnp.dot(ffh.astype(bf16), w(f'ff2{l}'),
                      preferred_element_type=f32) + p(f'ffb2{l}')
        x = ln(ffo + x, p(f'ln2g{l}'), p(f'ln2b{l}'))

    out_ref[...] = (jnp.dot(x.astype(bf16), w('top'), preferred_element_type=f32)
                    + p('topb'))


def fused_obs_encoder_pallas(feat2d, w_slab, p_slab, *, depth, heads, emb,
                             bsz, tokens, wlay, play):
    bt = bsz * tokens
    kernel = functools.partial(_fused_obs_encoder_kernel, depth=depth, heads=heads,
                               emb=emb, bsz=bsz, tokens=tokens, wlay=wlay, play=play)

    def full_spec(shape):
        nd = len(shape)
        return pl.BlockSpec(shape, lambda i, _nd=nd: (0,) * _nd)

    he = heads * emb
    ff = 4 * emb
    flops = 2 * bt * feat2d.shape[1] * emb                       # fused value/token proj
    flops += depth * (2 * bt * emb * 3 * he                      # q/k/v projections
                      + heads * 4 * bsz * tokens * tokens * emb  # q.k^T and p.v
                      + 2 * bt * he * emb                        # head unify
                      + 2 * bt * emb * ff + 2 * bt * ff * emb)   # feed-forward
    flops += 2 * bt * emb * emb                                  # output projection
    transcendentals = depth * heads * bsz * tokens * (tokens + 1)
    bytes_accessed = (feat2d.size * feat2d.dtype.itemsize
                      + w_slab.size * w_slab.dtype.itemsize
                      + p_slab.size * p_slab.dtype.itemsize
                      + bt * emb * 4)
    ce = pl.CostEstimate(flops=int(flops), transcendentals=int(transcendentals),
                         bytes_accessed=int(bytes_accessed))

    # TODO(synk): output stays [BT, 32] (32-lane, masked stores). A lane-dense
    # repack would need a consumer-side layout change; small win at 6 KB.
    return pl.pallas_call(
        kernel,
        out_shape=jax.ShapeDtypeStruct((bt, emb), jnp.float32),
        grid=(1,),
        in_specs=[full_spec(feat2d.shape), full_spec(w_slab.shape),
                  full_spec(p_slab.shape)],
        out_specs=full_spec((bt, emb)),
        compiler_params=pltpu.CompilerParams(dimension_semantics=("arbitrary",)),
        cost_estimate=ce,
    )(feat2d, w_slab, p_slab)


# ----------------------------- host-side glue -------------------------------

def binary_embed(x, bit_num, max_num):
    assert x <= max_num
    return np.array([(x >> (bit_num - 1 - k)) & 1 for k in range(bit_num)],
                    dtype=np.float32)


def decompose_and_wrap(inputs, hidden_state, cfg):
    """Task-decomposer slicing + binary agent-id embedding (shared glue)."""
    obs_dim = cfg['obs_dim']
    la_shape = cfg['last_action_shape']
    n_agents = cfg['n_agents']
    n_en, n_al = cfg['n_enemies'], cfg['n_allies']
    nf_en, nf_al = cfg['obs_nf_en'], cfg['obs_nf_al']
    own_dim = cfg['obs_own_dim']
    nna = cfg['n_actions_no_attack']
    E = cfg['entity_embed_dim']

    obs_inputs = inputs[:, :obs_dim]
    last_action_inputs = inputs[:, obs_dim:obs_dim + la_shape]
    # trailing agent-id one-hot slice of `inputs` is unused (as in the torch module)

    own_obs = obs_inputs[:, :own_dim]
    enemy_feats = jnp.stack(
        [obs_inputs[:, own_dim + i * nf_en: own_dim + (i + 1) * nf_en]
         for i in range(n_en)], axis=1)                                   # [B, n_en, nf_en]
    al0 = own_dim + n_en * nf_en
    ally_feats = jnp.stack(
        [obs_inputs[:, al0 + i * nf_al: al0 + (i + 1) * nf_al]
         for i in range(n_al)], axis=1)                                   # [B, n_al, nf_al]

    B = own_obs.shape[0]
    bs = B // n_agents
    aid = np.stack([binary_embed(i + 1, cfg['id_length'], cfg['max_agent'])
                    for i in range(n_agents)], axis=0)
    aid = jnp.asarray(np.tile(aid, (bs, 1)), dtype=own_obs.dtype)

    attack_action_info = last_action_inputs[:, nna:]                      # [B, n_en]
    compact_action_states = jnp.concatenate(
        [last_action_inputs[:, :nna], attack_action_info.sum(-1, keepdims=True)], axis=-1)

    own_wrapped = jnp.concatenate([own_obs, aid, compact_action_states], axis=-1)
    enemy_wrapped = jnp.concatenate([enemy_feats, attack_action_info[..., None]], axis=-1)
    history = hidden_state.reshape(-1, 1, E)                              # [B, 1, E]
    return own_wrapped, enemy_wrapped, ally_feats, history


def obs_encoder_forward_pallas(params, inputs, hidden_state, cfg):
    own, en, al, hist = decompose_and_wrap(inputs, hidden_state, cfg)
    E = cfg['entity_embed_dim']
    H, D = cfg['head'], cfg['depth']
    B = own.shape[0]
    n_en, n_al = en.shape[1], al.shape[1]
    f_own, f_en, f_al = own.shape[-1], en.shape[-1], al.shape[-1]
    T = 1 + n_en + n_al + 1

    # feature layout inside the 128-lane packed slab
    o_en = f_own
    o_al = o_en + f_en
    o_hist = o_al + f_al
    o_ind = o_hist + E            # own / enemy / ally bias indicator columns
    o_one = o_ind + 3             # always-one column -> token-embedding bias
    F_pack = o_one + 1
    F_pad = LANE                  # pad the contraction dim to a full 128-lane tile
    assert F_pack <= F_pad, "feature packing exceeds one 128-lane tile"
    assert (B * T) % 8 == 0, "B*T should be sublane (8) aligned for layout-friendly reshapes"

    def place(x, off, ind):
        pads = [(0, 0)] * (x.ndim - 1)
        out = jnp.pad(x, pads + [(off, F_pad - off - x.shape[-1])])
        out = out.at[..., o_one].set(1.0)         # every token picks up tok_b
        if ind is not None:
            out = out.at[..., ind].set(1.0)
        return out

    own_tok = place(own, 0, o_ind + 0)[:, None, :]                        # [B, 1, 128]
    en_tok = place(en, o_en, o_ind + 1)                                   # [B, n_en, 128]
    al_tok = place(al, o_al, o_ind + 2)                                   # [B, n_al, 128]
    hist_tok = place(hist[:, 0, :], o_hist, None)[:, None, :]             # [B, 1, 128]
    feat = jnp.concatenate([own_tok, en_tok, al_tok, hist_tok], axis=1)   # [B, T, 128]
    feat2d = feat.reshape(B * T, F_pad).astype(jnp.bfloat16)

    # Block-diagonal value projection folded with the token embedding:
    #   feat @ wval_eff == tok_emb( [own|enemy|ally] value projections ++ history )
    wval = jnp.zeros((F_pad, E), jnp.float32)
    wval = wval.at[0:f_own].set(params['own_w'])
    wval = wval.at[o_en:o_en + f_en].set(params['en_w'])
    wval = wval.at[o_al:o_al + f_al].set(params['al_w'])
    wval = wval.at[o_hist:o_hist + E].set(jnp.eye(E, dtype=jnp.float32))
    wval = wval.at[o_ind + 0].set(params['own_b'][0])
    wval = wval.at[o_ind + 1].set(params['en_b'][0])
    wval = wval.at[o_ind + 2].set(params['al_b'][0])
    wval_eff = wval @ params['tok_w']                     # fold token-embedding weight
    wval_eff = wval_eff.at[o_one].set(params['tok_b'][0])  # + token-embedding bias

    w_slab, wlay = _pack_weight_slab(params, wval_eff, depth=D, heads=H, emb=E, f_pad=F_pad)
    p_slab, play = _pack_param_slab(params, depth=D, emb=E)

    out2d = fused_obs_encoder_pallas(feat2d, w_slab, p_slab,
                                     depth=D, heads=H, emb=E, bsz=B, tokens=T,
                                     wlay=wlay, play=play)
    outputs = out2d.reshape(B, T, E)
    skill_inputs = outputs[:, 0, :]
    h = outputs[:, -1:, :]
    return skill_inputs, h


# ----------------------- pure-JAX reference (for check) --------------------

def _ref_ln(x, g, b, eps=1e-5):
    mu = jnp.mean(x, axis=-1, keepdims=True)
    var = jnp.mean((x - mu) ** 2, axis=-1, keepdims=True)
    return (x - mu) / jnp.sqrt(var + eps) * g + b


def obs_encoder_forward_ref(params, inputs, hidden_state, cfg):
    own, en, al, hist = decompose_and_wrap(inputs, hidden_state, cfg)
    E, H, D = cfg['entity_embed_dim'], cfg['head'], cfg['depth']

    own_hidden = (own @ params['own_w'] + params['own_b'])[:, None, :]
    enemy_hidden = en @ params['en_w'] + params['en_b']
    ally_hidden = al @ params['al_w'] + params['al_b']
    x = jnp.concatenate([own_hidden, enemy_hidden, ally_hidden, hist], axis=1)  # [B,T,E]

    x = x @ params['tok_w'] + params['tok_b']
    scale = 1.0 / (E ** 0.25)
    he = H * E
    for l in range(D):
        qkv = x @ params['wqkv'][l]                                       # [B, T, 3HE]
        heads_out = []
        for h in range(H):
            q = qkv[..., h * E:(h + 1) * E] * scale
            k = qkv[..., he + h * E: he + (h + 1) * E] * scale
            v = qkv[..., 2 * he + h * E: 2 * he + (h + 1) * E]
            s = jnp.einsum('bqe,bke->bqk', q, k)
            p = jax.nn.softmax(s, axis=-1)
            heads_out.append(jnp.einsum('bqk,bke->bqe', p, v))
        att = jnp.concatenate(heads_out, axis=-1) @ params['wu'][l] + params['bu'][l]
        x = _ref_ln(att + x, params['ln1_g'][l], params['ln1_b'][l])
        ff = jax.nn.relu(x @ params['ff_w1'][l] + params['ff_b1'][l])
        ff = ff @ params['ff_w2'][l] + params['ff_b2'][l]
        x = _ref_ln(ff + x, params['ln2_g'][l], params['ln2_b'][l])
    out = x @ params['top_w'] + params['top_b']
    return out[:, 0, :], out[:, -1:, :]


# ----------------------------------- main -----------------------------------

if __name__ == "__main__":
    cfg = dict(
        env='sc2', obs_last_action=True, id_length=4, max_agent=8,
        entity_embed_dim=32, attn_embed_dim=32, head=2, depth=2, skill_dim=4,
        n_agents=3, n_enemies=4, n_allies=2,
        obs_own_dim=10, obs_nf_en=6, obs_nf_al=5, n_actions_no_attack=6,
    )
    cfg['obs_dim'] = (cfg['obs_own_dim'] + cfg['n_enemies'] * cfg['obs_nf_en']
                      + cfg['n_allies'] * cfg['obs_nf_al'])                    # 44
    cfg['last_action_shape'] = cfg['n_actions_no_attack'] + cfg['n_enemies']   # 10
    wrapped_own_dim = (cfg['obs_own_dim'] + cfg['id_length']
                       + cfg['n_actions_no_attack'] + 1)                       # 21
    en_in_dim = cfg['obs_nf_en'] + 1   # +1 attack-action flag (obs_last_action)
    al_in_dim = cfg['obs_nf_al']

    E, H, D = cfg['entity_embed_dim'], cfg['head'], cfg['depth']
    key = jax.random.PRNGKey(0)
    keys = jax.random.split(key, 20)

    def w(k, shape, s=0.1):
        return (s * jax.random.normal(k, shape)).astype(jnp.float32)

    # UPDeT-style transformer params: fused QKV weight [D, E, 3*H*E], head unify
    # [D, H*E, E] with bias.  All Linear weights are [in, out].
    params = {
        'own_w': w(keys[0], (wrapped_own_dim, E)), 'own_b': w(keys[1], (1, E), 0.01),
        'en_w': w(keys[2], (en_in_dim, E)),        'en_b': w(keys[3], (1, E), 0.01),
        'al_w': w(keys[4], (al_in_dim, E)),        'al_b': w(keys[5], (1, E), 0.01),
        'tok_w': w(keys[6], (E, E)), 'tok_b': w(keys[7], (1, E), 0.01),
        'wqkv': w(keys[8], (D, E, 3 * H * E)),
        'wu': w(keys[9], (D, H * E, E)), 'bu': w(keys[10], (D, 1, E), 0.01),
        'ln1_g': jnp.ones((D, 1, E), jnp.float32),
        'ln1_b': jnp.zeros((D, 1, E), jnp.float32),
        'ff_w1': w(keys[11], (D, E, 4 * E)), 'ff_b1': w(keys[12], (D, 1, 4 * E), 0.01),
        'ff_w2': w(keys[13], (D, 4 * E, E)), 'ff_b2': w(keys[14], (D, 1, E), 0.01),
        'ln2_g': jnp.ones((D, 1, E), jnp.float32),
        'ln2_b': jnp.zeros((D, 1, E), jnp.float32),
        'top_w': w(keys[15], (E, E)), 'top_b': w(keys[16], (1, E), 0.01),
    }

    bs = 2
    B = bs * cfg['n_agents']                                               # 6
    in_dim = cfg['obs_dim'] + cfg['last_action_shape'] + cfg['n_agents']   # 57
    inputs = jax.random.normal(keys[17], (B, in_dim), dtype=jnp.float32)
    hidden_state = 0.1 * jax.random.normal(keys[18], (B, E), dtype=jnp.float32)

    skill, h = obs_encoder_forward_pallas(params, inputs, hidden_state, cfg)
    skill = jax.block_until_ready(skill)
    h = jax.block_until_ready(h)

    # correctness check vs. pure-JAX f32 reference of the original (unfused) math
    # (tolerance accounts for bf16 MXU operands + approx softmax reciprocal; all
    #  accumulation stays f32)
    skill_ref, h_ref = obs_encoder_forward_ref(params, inputs, hidden_state, cfg)
    np.testing.assert_allclose(np.asarray(skill), np.asarray(skill_ref),
                               rtol=3e-2, atol=3e-2)
    np.testing.assert_allclose(np.asarray(h), np.asarray(h_ref),
                               rtol=3e-2, atol=3e-2)
    assert skill.shape == (B, E) and h.shape == (B, 1, E)
    print("KERNEL_OK")
</pallas_src>

<mosaic_0001>
module attributes {stable_mosaic.version = 11 : i64} {
  func.func @_fused_obs_encoder_kernel(%arg0: i32, %arg1: memref<48x128xbf16, #tpu.memory_space<vmem>>, %arg2: memref<800x128xbf16, #tpu.memory_space<vmem>>, %arg3: memref<16x128xf32, #tpu.memory_space<vmem>>, %arg4: memref<48x32xf32, #tpu.memory_space<vmem>>) attributes {dimension_semantics = [#tpu.dimension_semantics<arbitrary>], iteration_bounds = array<i64: 1>, scalar_prefetch = 0 : i64, scratch_operands = 0 : i64, tpu.core_type = #tpu.core_type<tc>, window_params = [{pipeline_mode = #tpu.pipeline_mode<synchronous>, transform_indices = @transform_0, window_bounds = array<i64: 48, 128>}, {pipeline_mode = #tpu.pipeline_mode<synchronous>, transform_indices = @transform_1, window_bounds = array<i64: 800, 128>}, {pipeline_mode = #tpu.pipeline_mode<synchronous>, transform_indices = @transform_2, window_bounds = array<i64: 16, 128>}, {pipeline_mode = #tpu.pipeline_mode<synchronous>, transform_indices = @transform_3, window_bounds = array<i64: 48, 32>}]} {
    %c0 = arith.constant 0 : index
    %c0_0 = arith.constant 0 : index
    %0 = vector.load %arg1[%c0, %c0_0] : memref<48x128xbf16, #tpu.memory_space<vmem>>, vector<48x128xbf16>
    %c0_1 = arith.constant 0 : index
    %c0_2 = arith.constant 0 : index
    %1 = vector.load %arg2[%c0_1, %c0_2] : memref<800x128xbf16, #tpu.memory_space<vmem>>, vector<128x32xbf16>
    %cst = arith.constant dense<0.000000e+00> : vector<48x32xf32>
    %2 = tpu.matmul %0, %1, %cst {dimension_numbers = #tpu.dot_dimension_numbers<[1], [0], [0], [1], [0, 0, 1, 1], [], []>} : vector<48x128xbf16>, vector<128x32xbf16>, vector<48x32xf32> -> vector<48x32xf32>
    %3 = arith.truncf %2 : vector<48x32xf32> to vector<48x32xbf16>
    %c128 = arith.constant 128 : index
    %c0_3 = arith.constant 0 : index
    %4 = vector.load %arg2[%c128, %c0_3] : memref<800x128xbf16, #tpu.memory_space<vmem>>, vector<32x64xbf16>
    %cst_4 = arith.constant dense<0.000000e+00> : vector<48x64xf32>
    %5 = tpu.matmul %3, %4, %cst_4 {dimension_numbers = #tpu.dot_dimension_numbers<[1], [0], [0], [1], [0, 0, 1, 1], [], []>} : vector<48x32xbf16>, vector<32x64xbf16>, vector<48x64xf32> -> vector<48x64xf32>
    %c160 = arith.constant 160 : index
    %c0_5 = arith.constant 0 : index
    %6 = vector.load %arg2[%c160, %c0_5] : memref<800x128xbf16, #tpu.memory_space<vmem>>, vector<32x64xbf16>
    %cst_6 = arith.constant dense<0.000000e+00> : vector<48x64xf32>
    %7 = tpu.matmul %3, %6, %cst_6 {dimension_numbers = #tpu.dot_dimension_numbers<[1], [0], [0], [1], [0, 0, 1, 1], [], []>} : vector<48x32xbf16>, vector<32x64xbf16>, vector<48x64xf32> -> vector<48x64xf32>
    %c192 = arith.constant 192 : index
    %c0_7 = arith.constant 0 : index
    %8 = vector.load %arg2[%c192, %c0_7] : memref<800x128xbf16, #tpu.memory_space<vmem>>, vector<32x64xbf16>
    %cst_8 = arith.constant dense<0.000000e+00> : vector<48x64xf32>
    %9 = tpu.matmul %3, %8, %cst_8 {dimension_numbers = #tpu.dot_dimension_numbers<[1], [0], [0], [1], [0, 0, 1, 1], [], []>} : vector<48x32xbf16>, vector<32x64xbf16>, vector<48x64xf32> -> vector<48x64xf32>
    %cst_9 = arith.constant 0.000000e+00 : f32
    %10 = vector.broadcast %cst_9 : f32 to vector<48x32xf32>
    %11 = vector.extract_strided_slice %5 {offsets = [0, 0], sizes = [48, 32], strides = [1, 1]} : vector<48x64xf32> to vector<48x32xf32>
    %12 = vector.shape_cast %11 : vector<48x32xf32> to vector<6x8x32xf32>
    %13 = arith.truncf %12 : vector<6x8x32xf32> to vector<6x8x32xbf16>
    %14 = vector.extract_strided_slice %7 {offsets = [0, 0], sizes = [48, 32], strides = [1, 1]} : vector<48x64xf32> to vector<48x32xf32>
    %15 = vector.shape_cast %14 : vector<48x32xf32> to vector<6x8x32xf32>
    %16 = arith.truncf %15 : vector<6x8x32xf32> to vector<6x8x32xbf16>
    %17 = vector.extract_strided_slice %9 {offsets = [0, 0], sizes = [48, 32], strides = [1, 1]} : vector<48x64xf32> to vector<48x32xf32>
    %18 = vector.shape_cast %17 : vector<48x32xf32> to vector<6x8x32xf32>
    %19 = arith.truncf %18 : vector<6x8x32xf32> to vector<6x8x32xbf16>
    "tpu.trace_start"() <{level = 10 : i32, message = "bqe,bke->bqk"}> : () -> ()
    %cst_10 = arith.constant dense<0.000000e+00> : vector<6x8x8xf32>
    %20 = tpu.matmul %13, %16, %cst_10 {dimension_numbers = #tpu.dot_dimension_numbers<[2], [2], [1], [1], [0, 0, 0, 1, 1, 1], [0], [0]>} : vector<6x8x32xbf16>, vector<6x8x32xbf16>, vector<6x8x8xf32> -> vector<6x8x8xf32>
    "tpu.trace_stop"() : () -> ()
    %cst_11 = arith.constant dense<0xFF800000> : vector<6x8xf32>
    %21 = vector.multi_reduction <maximumf>, %20, %cst_11 [2] : vector<6x8x8xf32> to vector<6x8xf32>
    %22 = vector.shape_cast %21 : vector<6x8xf32> to vector<6x8x1xf32>
    %23 = vector.broadcast %22 : vector<6x8x1xf32> to vector<6x8x8xf32>
    %24 = arith.subf %20, %23 : vector<6x8x8xf32>
    %25 = math.exp %24 : vector<6x8x8xf32>
    %cst_12 = arith.constant dense<0.000000e+00> : vector<6x8xf32>
    %26 = vector.multi_reduction <add>, %25, %cst_12 [2] : vector<6x8x8xf32> to vector<6x8xf32>
    %27 = vector.shape_cast %26 : vector<6x8xf32> to vector<6x8x1xf32>
    %28 = tpu.reciprocal %27 {approx = true} : vector<6x8x1xf32> -> vector<6x8x1xf32>
    %29 = vector.broadcast %28 : vector<6x8x1xf32> to vector<6x8x8xf32>
    %30 = arith.mulf %25, %29 : vector<6x8x8xf32>
    %31 = arith.truncf %30 : vector<6x8x8xf32> to vector<6x8x8xbf16>
    "tpu.trace_start"() <{level = 10 : i32, message = "bqk,bke->bqe"}> : () -> ()
    %cst_13 = arith.constant dense<0.000000e+00> : vector<6x8x32xf32>
    %32 = tpu.matmul %31, %19, %cst_13 {dimension_numbers = #tpu.dot_dimension_numbers<[2], [1], [1], [2], [0, 0, 0, 1, 1, 2], [0], [0]>} : vector<6x8x8xbf16>, vector<6x8x32xbf16>, vector<6x8x32xf32> -> vector<6x8x32xf32>
    "tpu.trace_stop"() : () -> ()
    %33 = vector.shape_cast %32 : vector<6x8x32xf32> to vector<48x32xf32>
    %34 = arith.truncf %33 : vector<48x32xf32> to vector<48x32xbf16>
    %c224 = arith.constant 224 : index
    %c0_14 = arith.constant 0 : index
    %35 = vector.load %arg2[%c224, %c0_14] : memref<800x128xbf16, #tpu.memory_space<vmem>>, vector<32x32xbf16>
    %cst_15 = arith.constant dense<0.000000e+00> : vector<48x32xf32>
    %36 = tpu.matmul %34, %35, %cst_15 {dimension_numbers = #tpu.dot_dimension_numbers<[1], [0], [0], [1], [0, 0, 1, 1], [], []>} : vector<48x32xbf16>, vector<32x32xbf16>, vector<48x32xf32> -> vector<48x32xf32>
    %37 = arith.addf %10, %36 : vector<48x32xf32>
    %38 = vector.extract_strided_slice %5 {offsets = [0, 32], sizes = [48, 32], strides = [1, 1]} : vector<48x64xf32> to vector<48x32xf32>
    %39 = vector.shape_cast %38 : vector<48x32xf32> to vector<6x8x32xf32>
    %40 = arith.truncf %39 : vector<6x8x32xf32> to vector<6x8x32xbf16>
    %41 = vector.extract_strided_slice %7 {offsets = [0, 32], sizes = [48, 32], strides = [1, 1]} : vector<48x64xf32> to vector<48x32xf32>
    %42 = vector.shape_cast %41 : vector<48x32xf32> to vector<6x8x32xf32>
    %43 = arith.truncf %42 : vector<6x8x32xf32> to vector<6x8x32xbf16>
    %44 = vector.extract_strided_slice %9 {offsets = [0, 32], sizes = [48, 32], strides = [1, 1]} : vector<48x64xf32> to vector<48x32xf32>
    %45 = vector.shape_cast %44 : vector<48x32xf32> to vector<6x8x32xf32>
    %46 = arith.truncf %45 : vector<6x8x32xf32> to vector<6x8x32xbf16>
    "tpu.trace_start"() <{level = 10 : i32, message = "bqe,bke->bqk"}> : () -> ()
    %cst_16 = arith.constant dense<0.000000e+00> : vector<6x8x8xf32>
    %47 = tpu.matmul %40, %43, %cst_16 {dimension_numbers = #tpu.dot_dimension_numbers<[2], [2], [1], [1], [0, 0, 0, 1, 1, 1], [0], [0]>} : vector<6x8x32xbf16>, vector<6x8x32xbf16>, vector<6x8x8xf32> -> vector<6x8x8xf32>
    "tpu.trace_stop"() : () -> ()
    %cst_17 = arith.constant dense<0xFF800000> : vector<6x8xf32>
    %48 = vector.multi_reduction <maximumf>, %47, %cst_17 [2] : vector<6x8x8xf32> to vector<6x8xf32>
    %49 = vector.shape_cast %48 : vector<6x8xf32> to vector<6x8x1xf32>
    %50 = vector.broadcast %49 : vector<6x8x1xf32> to vector<6x8x8xf32>
    %51 = arith.subf %47, %50 : vector<6x8x8xf32>
    %52 = math.exp %51 : vector<6x8x8xf32>
    %cst_18 = arith.constant dense<0.000000e+00> : vector<6x8xf32>
    %53 = vector.multi_reduction <add>, %52, %cst_18 [2] : vector<6x8x8xf32> to vector<6x8xf32>
    %54 = vector.shape_cast %53 : vector<6x8xf32> to vector<6x8x1xf32>
    %55 = tpu.reciprocal %54 {approx = true} : vector<6x8x1xf32> -> vector<6x8x1xf32>
    %56 = vector.broadcast %55 : vector<6x8x1xf32> to vector<6x8x8xf32>
    %57 = arith.mulf %52, %56 : vector<6x8x8xf32>
    %58 = arith.truncf %57 : vector<6x8x8xf32> to vector<6x8x8xbf16>
    "tpu.trace_start"() <{level = 10 : i32, message = "bqk,bke->bqe"}> : () -> ()
    %cst_19 = arith.constant dense<0.000000e+00> : vector<6x8x32xf32>
    %59 = tpu.matmul %58, %46, %cst_19 {dimension_numbers = #tpu.dot_dimension_numbers<[2], [1], [1], [2], [0, 0, 0, 1, 1, 2], [0], [0]>} : vector<6x8x8xbf16>, vector<6x8x32xbf16>, vector<6x8x32xf32> -> vector<6x8x32xf32>
    "tpu.trace_stop"() : () -> ()
    %60 = vector.shape_cast %59 : vector<6x8x32xf32> to vector<48x32xf32>
    %61 = arith.truncf %60 : vector<48x32xf32> to vector<48x32xbf16>
    %c256 = arith.constant 256 : index
    %c0_20 = arith.constant 0 : index
    %62 = vector.load %arg2[%c256, %c0_20] : memref<800x128xbf16, #tpu.memory_space<vmem>>, vector<32x32xbf16>
    %cst_21 = arith.constant dense<0.000000e+00> : vector<48x32xf32>
    %63 = tpu.matmul %61, %62, %cst_21 {dimension_numbers = #tpu.dot_dimension_numbers<[1], [0], [0], [1], [0, 0, 1, 1], [], []>} : vector<48x32xbf16>, vector<32x32xbf16>, vector<48x32xf32> -> vector<48x32xf32>
    %64 = arith.addf %37, %63 : vector<48x32xf32>
    %c0_22 = arith.constant 0 : index
    %c0_23 = arith.constant 0 : index
    %65 = vector.load %arg3[%c0_22, %c0_23] : memref<16x128xf32, #tpu.memory_space<vmem>>, vector<1x32xf32>
    %66 = vector.broadcast %65 : vector<1x32xf32> to vector<48x32xf32>
    %67 = arith.addf %64, %66 : vector<48x32xf32>
    %68 = arith.addf %67, %2 : vector<48x32xf32>
    %c1 = arith.constant 1 : index
    %c0_24 = arith.constant 0 : index
    %69 = vector.load %arg3[%c1, %c0_24] : memref<16x128xf32, #tpu.memory_space<vmem>>, vector<1x32xf32>
    %c2 = arith.constant 2 : index
    %c0_25 = arith.constant 0 : index
    %70 = vector.load %arg3[%c2, %c0_25] : memref<16x128xf32, #tpu.memory_space<vmem>>, vector<1x32xf32>
    %cst_26 = arith.constant dense<0.000000e+00> : vector<48xf32>
    %71 = vector.multi_reduction <add>, %68, %cst_26 [1] : vector<48x32xf32> to vector<48xf32>
    %72 = vector.shape_cast %71 : vector<48xf32> to vector<48x1xf32>
    %cst_27 = arith.constant 3.200000e+01 : f32
    %73 = vector.broadcast %cst_27 : f32 to vector<48x1xf32>
    %74 = arith.divf %72, %73 : vector<48x1xf32>
    %75 = vector.broadcast %74 : vector<48x1xf32> to vector<48x32xf32>
    %76 = arith.subf %68, %75 : vector<48x32xf32>
    %77 = arith.mulf %76, %76 : vector<48x32xf32>
    %cst_28 = arith.constant dense<0.000000e+00> : vector<48xf32>
    %78 = vector.multi_reduction <add>, %77, %cst_28 [1] : vector<48x32xf32> to vector<48xf32>
    %79 = vector.shape_cast %78 : vector<48xf32> to vector<48x1xf32>
    %cst_29 = arith.constant 3.200000e+01 : f32
    %80 = vector.broadcast %cst_29 : f32 to vector<48x1xf32>
    %81 = arith.divf %79, %80 : vector<48x1xf32>
    %82 = vector.broadcast %74 : vector<48x1xf32> to vector<48x32xf32>
    %83 = arith.subf %68, %82 : vector<48x32xf32>
    %cst_30 = arith.constant 9.99999974E-6 : f32
    %84 = vector.broadcast %cst_30 : f32 to vector<48x1xf32>
    %85 = arith.addf %81, %84 : vector<48x1xf32>
    %86 = math.rsqrt %85 : vector<48x1xf32>
    %87 = vector.broadcast %86 : vector<48x1xf32> to vector<48x32xf32>
    %88 = arith.mulf %83, %87 : vector<48x32xf32>
    %89 = vector.broadcast %69 : vector<1x32xf32> to vector<48x32xf32>
    %90 = arith.mulf %88, %89 : vector<48x32xf32>
    %91 = vector.broadcast %70 : vector<1x32xf32> to vector<48x32xf32>
    %92 = arith.addf %90, %91 : vector<48x32xf32>
    %93 = arith.truncf %92 : vector<48x32xf32> to vector<48x32xbf16>
    %c288 = arith.constant 288 : index
    %c0_31 = arith.constant 0 : index
    %94 = vector.load %arg2[%c288, %c0_31] : memref<800x128xbf16, #tpu.memory_space<vmem>>, vector<32x128xbf16>
    %cst_32 = arith.constant dense<0.000000e+00> : vector<48x128xf32>
    %95 = tpu.matmul %93, %94, %cst_32 {dimension_numbers = #tpu.dot_dimension_numbers<[1], [0], [0], [1], [0, 0, 1, 1], [], []>} : vector<48x32xbf16>, vector<32x128xbf16>, vector<48x128xf32> -> vector<48x128xf32>
    %c3 = arith.constant 3 : index
    %c0_33 = arith.constant 0 : index
    %96 = vector.load %arg3[%c3, %c0_33] : memref<16x128xf32, #tpu.memory_space<vmem>>, vector<1x128xf32>
    %97 = vector.broadcast %96 : vector<1x128xf32> to vector<48x128xf32>
    %98 = arith.addf %95, %97 : vector<48x128xf32>
    %cst_34 = arith.constant 0.000000e+00 : f32
    %99 = vector.broadcast %cst_34 : f32 to vector<48x128xf32>
    %100 = arith.maximumf %98, %99 : vector<48x128xf32>
    %101 = arith.truncf %100 : vector<48x128xf32> to vector<48x128xbf16>
    %c320 = arith.constant 320 : index
    %c0_35 = arith.constant 0 : index
    %102 = vector.load %arg2[%c320, %c0_35] : memref<800x128xbf16, #tpu.memory_space<vmem>>, vector<128x32xbf16>
    %cst_36 = arith.constant dense<0.000000e+00> : vector<48x32xf32>
    %103 = tpu.matmul %101, %102, %cst_36 {dimension_numbers = #tpu.dot_dimension_numbers<[1], [0], [0], [1], [0, 0, 1, 1], [], []>} : vector<48x128xbf16>, vector<128x32xbf16>, vector<48x32xf32> -> vector<48x32xf32>
    %c4 = arith.constant 4 : index
    %c0_37 = arith.constant 0 : index
    %104 = vector.load %arg3[%c4, %c0_37] : memref<16x128xf32, #tpu.memory_space<vmem>>, vector<1x32xf32>
    %105 = vector.broadcast %104 : vector<1x32xf32> to vector<48x32xf32>
    %106 = arith.addf %103, %105 : vector<48x32xf32>
    %107 = arith.addf %106, %92 : vector<48x32xf32>
    %c5 = arith.constant 5 : index
    %c0_38 = arith.constant 0 : index
    %108 = vector.load %arg3[%c5, %c0_38] : memref<16x128xf32, #tpu.memory_space<vmem>>, vector<1x32xf32>
    %c6 = arith.constant 6 : index
    %c0_39 = arith.constant 0 : index
    %109 = vector.load %arg3[%c6, %c0_39] : memref<16x128xf32, #tpu.memory_space<vmem>>, vector<1x32xf32>
    %cst_40 = arith.constant dense<0.000000e+00> : vector<48xf32>
    %110 = vector.multi_reduction <add>, %107, %cst_40 [1] : vector<48x32xf32> to vector<48xf32>
    %111 = vector.shape_cast %110 : vector<48xf32> to vector<48x1xf32>
    %cst_41 = arith.constant 3.200000e+01 : f32
    %112 = vector.broadcast %cst_41 : f32 to vector<48x1xf32>
    %113 = arith.divf %111, %112 : vector<48x1xf32>
    %114 = vector.broadcast %113 : vector<48x1xf32> to vector<48x32xf32>
    %115 = arith.subf %107, %114 : vector<48x32xf32>
    %116 = arith.mulf %115, %115 : vector<48x32xf32>
    %cst_42 = arith.constant dense<0.000000e+00> : vector<48xf32>
    %117 = vector.multi_reduction <add>, %116, %cst_42 [1] : vector<48x32xf32> to vector<48xf32>
    %118 = vector.shape_cast %117 : vector<48xf32> to vector<48x1xf32>
    %cst_43 = arith.constant 3.200000e+01 : f32
    %119 = vector.broadcast %cst_43 : f32 to vector<48x1xf32>
    %120 = arith.divf %118, %119 : vector<48x1xf32>
    %121 = vector.broadcast %113 : vector<48x1xf32> to vector<48x32xf32>
    %122 = arith.subf %107, %121 : vector<48x32xf32>
    %cst_44 = arith.constant 9.99999974E-6 : f32
    %123 = vector.broadcast %cst_44 : f32 to vector<48x1xf32>
    %124 = arith.addf %120, %123 : vector<48x1xf32>
    %125 = math.rsqrt %124 : vector<48x1xf32>
    %126 = vector.broadcast %125 : vector<48x1xf32> to vector<48x32xf32>
    %127 = arith.mulf %122, %126 : vector<48x32xf32>
    %128 = vector.broadcast %108 : vector<1x32xf32> to vector<48x32xf32>
    %129 = arith.mulf %127, %128 : vector<48x32xf32>
    %130 = vector.broadcast %109 : vector<1x32xf32> to vector<48x32xf32>
    %131 = arith.addf %129, %130 : vector<48x32xf32>
    %132 = arith.truncf %131 : vector<48x32xf32> to vector<48x32xbf16>
    %c448 = arith.constant 448 : index
    %c0_45 = arith.constant 0 : index
    %133 = vector.load %arg2[%c448, %c0_45] : memref<800x128xbf16, #tpu.memory_space<vmem>>, vector<32x64xbf16>
    %cst_46 = arith.constant dense<0.000000e+00> : vector<48x64xf32>
    %134 = tpu.matmul %132, %133, %cst_46 {dimension_numbers = #tpu.dot_dimension_numbers<[1], [0], [0], [1], [0, 0, 1, 1], [], []>} : vector<48x32xbf16>, vector<32x64xbf16>, vector<48x64xf32> -> vector<48x64xf32>
    %c480 = arith.constant 480 : index
    %c0_47 = arith.constant 0 : index
    %135 = vector.load %arg2[%c480, %c0_47] : memref<800x128xbf16, #tpu.memory_space<vmem>>, vector<32x64xbf16>
    %cst_48 = arith.constant dense<0.000000e+00> : vector<48x64xf32>
    %136 = tpu.matmul %132, %135, %cst_48 {dimension_numbers = #tpu.dot_dimension_numbers<[1], [0], [0], [1], [0, 0, 1, 1], [], []>} : vector<48x32xbf16>, vector<32x64xbf16>, vector<48x64xf32> -> vector<48x64xf32>
    %c512 = arith.constant 512 : index
    %c0_49 = arith.constant 0 : index
    %137 = vector.load %arg2[%c512, %c0_49] : memref<800x128xbf16, #tpu.memory_space<vmem>>, vector<32x64xbf16>
    %cst_50 = arith.constant dense<0.000000e+00> : vector<48x64xf32>
    %138 = tpu.matmul %132, %137, %cst_50 {dimension_numbers = #tpu.dot_dimension_numbers<[1], [0], [0], [1], [0, 0, 1, 1], [], []>} : vector<48x32xbf16>, vector<32x64xbf16>, vector<48x64xf32> -> vector<48x64xf32>
    %cst_51 = arith.constant 0.000000e+00 : f32
    %139 = vector.broadcast %cst_51 : f32 to vector<48x32xf32>
    %140 = vector.extract_strided_slice %134 {offsets = [0, 0], sizes = [48, 32], strides = [1, 1]} : vector<48x64xf32> to vector<48x32xf32>
    %141 = vector.shape_cast %140 : vector<48x32xf32> to vector<6x8x32xf32>
    %142 = arith.truncf %141 : vector<6x8x32xf32> to vector<6x8x32xbf16>
    %143 = vector.extract_strided_slice %136 {offsets = [0, 0], sizes = [48, 32], strides = [1, 1]} : vector<48x64xf32> to vector<48x32xf32>
    %144 = vector.shape_cast %143 : vector<48x32xf32> to vector<6x8x32xf32>
    %145 = arith.truncf %144 : vector<6x8x32xf32> to vector<6x8x32xbf16>
    %146 = vector.extract_strided_slice %138 {offsets = [0, 0], sizes = [48, 32], strides = [1, 1]} : vector<48x64xf32> to vector<48x32xf32>
    %147 = vector.shape_cast %146 : vector<48x32xf32> to vector<6x8x32xf32>
    %148 = arith.truncf %147 : vector<6x8x32xf32> to vector<6x8x32xbf16>
    "tpu.trace_start"() <{level = 10 : i32, message = "bqe,bke->bqk"}> : () -> ()
    %cst_52 = arith.constant dense<0.000000e+00> : vector<6x8x8xf32>
    %149 = tpu.matmul %142, %145, %cst_52 {dimension_numbers = #tpu.dot_dimension_numbers<[2], [2], [1], [1], [0, 0, 0, 1, 1, 1], [0], [0]>} : vector<6x8x32xbf16>, vector<6x8x32xbf16>, vector<6x8x8xf32> -> vector<6x8x8xf32>
    "tpu.trace_stop"() : () -> ()
    %cst_53 = arith.constant dense<0xFF800000> : vector<6x8xf32>
    %150 = vector.multi_reduction <maximumf>, %149, %cst_53 [2] : vector<6x8x8xf32> to vector<6x8xf32>
    %151 = vector.shape_cast %150 : vector<6x8xf32> to vector<6x8x1xf32>
    %152 = vector.broadcast %151 : vector<6x8x1xf32> to vector<6x8x8xf32>
    %153 = arith.subf %149, %152 : vector<6x8x8xf32>
    %154 = math.exp %153 : vector<6x8x8xf32>
    %cst_54 = arith.constant dense<0.000000e+00> : vector<6x8xf32>
    %155 = vector.multi_reduction <add>, %154, %cst_54 [2] : vector<6x8x8xf32> to vector<6x8xf32>
    %156 = vector.shape_cast %155 : vector<6x8xf32> to vector<6x8x1xf32>
    %157 = tpu.reciprocal %156 {approx = true} : vector<6x8x1xf32> -> vector<6x8x1xf32>
    %158 = vector.broadcast %157 : vector<6x8x1xf32> to vector<6x8x8xf32>
    %159 = arith.mulf %154, %158 : vector<6x8x8xf32>
    %160 = arith.truncf %159 : vector<6x8x8xf32> to vector<6x8x8xbf16>
    "tpu.trace_start"() <{level = 10 : i32, message = "bqk,bke->bqe"}> : () -> ()
    %cst_55 = arith.constant dense<0.000000e+00> : vector<6x8x32xf32>
    %161 = tpu.matmul %160, %148, %cst_55 {dimension_numbers = #tpu.dot_dimension_numbers<[2], [1], [1], [2], [0, 0, 0, 1, 1, 2], [0], [0]>} : vector<6x8x8xbf16>, vector<6x8x32xbf16>, vector<6x8x32xf32> -> vector<6x8x32xf32>
    "tpu.trace_stop"() : () -> ()
    %162 = vector.shape_cast %161 : vector<6x8x32xf32> to vector<48x32xf32>
    %163 = arith.truncf %162 : vector<48x32xf32> to vector<48x32xbf16>
    %c544 = arith.constant 544 : index
    %c0_56 = arith.constant 0 : index
    %164 = vector.load %arg2[%c544, %c0_56] : memref<800x128xbf16, #tpu.memory_space<vmem>>, vector<32x32xbf16>
    %cst_57 = arith.constant dense<0.000000e+00> : vector<48x32xf32>
    %165 = tpu.matmul %163, %164, %cst_57 {dimension_numbers = #tpu.dot_dimension_numbers<[1], [0], [0], [1], [0, 0, 1, 1], [], []>} : vector<48x32xbf16>, vector<32x32xbf16>, vector<48x32xf32> -> vector<48x32xf32>
    %166 = arith.addf %139, %165 : vector<48x32xf32>
    %167 = vector.extract_strided_slice %134 {offsets = [0, 32], sizes = [48, 32], strides = [1, 1]} : vector<48x64xf32> to vector<48x32xf32>
    %168 = vector.shape_cast %167 : vector<48x32xf32> to vector<6x8x32xf32>
    %169 = arith.truncf %168 : vector<6x8x32xf32> to vector<6x8x32xbf16>
    %170 = vector.extract_strided_slice %136 {offsets = [0, 32], sizes = [48, 32], strides = [1, 1]} : vector<48x64xf32> to vector<48x32xf32>
    %171 = vector.shape_cast %170 : vector<48x32xf32> to vector<6x8x32xf32>
    %172 = arith.truncf %171 : vector<6x8x32xf32> to vector<6x8x32xbf16>
    %173 = vector.extract_strided_slice %138 {offsets = [0, 32], sizes = [48, 32], strides = [1, 1]} : vector<48x64xf32> to vector<48x32xf32>
    %174 = vector.shape_cast %173 : vector<48x32xf32> to vector<6x8x32xf32>
    %175 = arith.truncf %174 : vector<6x8x32xf32> to vector<6x8x32xbf16>
    "tpu.trace_start"() <{level = 10 : i32, message = "bqe,bke->bqk"}> : () -> ()
    %cst_58 = arith.constant dense<0.000000e+00> : vector<6x8x8xf32>
    %176 = tpu.matmul %169, %172, %cst_58 {dimension_numbers = #tpu.dot_dimension_numbers<[2], [2], [1], [1], [0, 0, 0, 1, 1, 1], [0], [0]>} : vector<6x8x32xbf16>, vector<6x8x32xbf16>, vector<6x8x8xf32> -> vector<6x8x8xf32>
    "tpu.trace_stop"() : () -> ()
    %cst_59 = arith.constant dense<0xFF800000> : vector<6x8xf32>
    %177 = vector.multi_reduction <maximumf>, %176, %cst_59 [2] : vector<6x8x8xf32> to vector<6x8xf32>
    %178 = vector.shape_cast %177 : vector<6x8xf32> to vector<6x8x1xf32>
    %179 = vector.broadcast %178 : vector<6x8x1xf32> to vector<6x8x8xf32>
    %180 = arith.subf %176, %179 : vector<6x8x8xf32>
    %181 = math.exp %180 : vector<6x8x8xf32>
    %cst_60 = arith.constant dense<0.000000e+00> : vector<6x8xf32>
    %182 = vector.multi_reduction <add>, %181, %cst_60 [2] : vector<6x8x8xf32> to vector<6x8xf32>
    %183 = vector.shape_cast %182 : vector<6x8xf32> to vector<6x8x1xf32>
    %184 = tpu.reciprocal %183 {approx = true} : vector<6x8x1xf32> -> vector<6x8x1xf32>
    %185 = vector.broadcast %184 : vector<6x8x1xf32> to vector<6x8x8xf32>
    %186 = arith.mulf %181, %185 : vector<6x8x8xf32>
    %187 = arith.truncf %186 : vector<6x8x8xf32> to vector<6x8x8xbf16>
    "tpu.trace_start"() <{level = 10 : i32, message = "bqk,bke->bqe"}> : () -> ()
    %cst_61 = arith.constant dense<0.000000e+00> : vector<6x8x32xf32>
    %188 = tpu.matmul %187, %175, %cst_61 {dimension_numbers = #tpu.dot_dimension_numbers<[2], [1], [1], [2], [0, 0, 0, 1, 1, 2], [0], [0]>} : vector<6x8x8xbf16>, vector<6x8x32xbf16>, vector<6x8x32xf32> -> vector<6x8x32xf32>
    "tpu.trace_stop"() : () -> ()
    %189 = vector.shape_cast %188 : vector<6x8x32xf32> to vector<48x32xf32>
    %190 = arith.truncf %189 : vector<48x32xf32> to vector<48x32xbf16>
    %c576 = arith.constant 576 : index
    %c0_62 = arith.constant 0 : index
    %191 = vector.load %arg2[%c576, %c0_62] : memref<800x128xbf16, #tpu.memory_space<vmem>>, vector<32x32xbf16>
    %cst_63 = arith.constant dense<0.000000e+00> : vector<48x32xf32>
    %192 = tpu.matmul %190, %191, %cst_63 {dimension_numbers = #tpu.dot_dimension_numbers<[1], [0], [0], [1], [0, 0, 1, 1], [], []>} : vector<48x32xbf16>, vector<32x32xbf16>, vector<48x32xf32> -> vector<48x32xf32>
    %193 = arith.addf %166, %192 : vector<48x32xf32>
    %c7 = arith.constant 7 : index
    %c0_64 = arith.constant 0 : index
    %194 = vector.load %arg3[%c7, %c0_64] : memref<16x128xf32, #tpu.memory_space<vmem>>, vector<1x32xf32>
    %195 = vector.broadcast %194 : vector<1x32xf32> to vector<48x32xf32>
    %196 = arith.addf %193, %195 : vector<48x32xf32>
    %197 = arith.addf %196, %131 : vector<48x32xf32>
    %c8 = arith.constant 8 : index
    %c0_65 = arith.constant 0 : index
    %198 = vector.load %arg3[%c8, %c0_65] : memref<16x128xf32, #tpu.memory_space<vmem>>, vector<1x32xf32>
    %c9 = arith.constant 9 : index
    %c0_66 = arith.constant 0 : index
    %199 = vector.load %arg3[%c9, %c0_66] : memref<16x128xf32, #tpu.memory_space<vmem>>, vector<1x32xf32>
    %cst_67 = arith.constant dense<0.000000e+00> : vector<48xf32>
    %200 = vector.multi_reduction <add>, %197, %cst_67 [1] : vector<48x32xf32> to vector<48xf32>
    %201 = vector.shape_cast %200 : vector<48xf32> to vector<48x1xf32>
    %cst_68 = arith.constant 3.200000e+01 : f32
    %202 = vector.broadcast %cst_68 : f32 to vector<48x1xf32>
    %203 = arith.divf %201, %202 : vector<48x1xf32>
    %204 = vector.broadcast %203 : vector<48x1xf32> to vector<48x32xf32>
    %205 = arith.subf %197, %204 : vector<48x32xf32>
    %206 = arith.mulf %205, %205 : vector<48x32xf32>
    %cst_69 = arith.constant dense<0.000000e+00> : vector<48xf32>
    %207 = vector.multi_reduction <add>, %206, %cst_69 [1] : vector<48x32xf32> to vector<48xf32>
    %208 = vector.shape_cast %207 : vector<48xf32> to vector<48x1xf32>
    %cst_70 = arith.constant 3.200000e+01 : f32
    %209 = vector.broadcast %cst_70 : f32 to vector<48x1xf32>
    %210 = arith.divf %208, %209 : vector<48x1xf32>
    %211 = vector.broadcast %203 : vector<48x1xf32> to vector<48x32xf32>
    %212 = arith.subf %197, %211 : vector<48x32xf32>
    %cst_71 = arith.constant 9.99999974E-6 : f32
    %213 = vector.broadcast %cst_71 : f32 to vector<48x1xf32>
    %214 = arith.addf %210, %213 : vector<48x1xf32>
    %215 = math.rsqrt %214 : vector<48x1xf32>
    %216 = vector.broadcast %215 : vector<48x1xf32> to vector<48x32xf32>
    %217 = arith.mulf %212, %216 : vector<48x32xf32>
    %218 = vector.broadcast %198 : vector<1x32xf32> to vector<48x32xf32>
    %219 = arith.mulf %217, %218 : vector<48x32xf32>
    %220 = vector.broadcast %199 : vector<1x32xf32> to vector<48x32xf32>
    %221 = arith.addf %219, %220 : vector<48x32xf32>
    %222 = arith.truncf %221 : vector<48x32xf32> to vector<48x32xbf16>
    %c608 = arith.constant 608 : index
    %c0_72 = arith.constant 0 : index
    %223 = vector.load %arg2[%c608, %c0_72] : memref<800x128xbf16, #tpu.memory_space<vmem>>, vector<32x128xbf16>
    %cst_73 = arith.constant dense<0.000000e+00> : vector<48x128xf32>
    %224 = tpu.matmul %222, %223, %cst_73 {dimension_numbers = #tpu.dot_dimension_numbers<[1], [0], [0], [1], [0, 0, 1, 1], [], []>} : vector<48x32xbf16>, vector<32x128xbf16>, vector<48x128xf32> -> vector<48x128xf32>
    %c10 = arith.constant 10 : index
    %c0_74 = arith.constant 0 : index
    %225 = vector.load %arg3[%c10, %c0_74] : memref<16x128xf32, #tpu.memory_space<vmem>>, vector<1x128xf32>
    %226 = vector.broadcast %225 : vector<1x128xf32> to vector<48x128xf32>
    %227 = arith.addf %224, %226 : vector<48x128xf32>
    %cst_75 = arith.constant 0.000000e+00 : f32
    %228 = vector.broadcast %cst_75 : f32 to vector<48x128xf32>
    %229 = arith.maximumf %227, %228 : vector<48x128xf32>
    %230 = arith.truncf %229 : vector<48x128xf32> to vector<48x128xbf16>
    %c640 = arith.constant 640 : index
    %c0_76 = arith.constant 0 : index
    %231 = vector.load %arg2[%c640, %c0_76] : memref<800x128xbf16, #tpu.memory_space<vmem>>, vector<128x32xbf16>
    %cst_77 = arith.constant dense<0.000000e+00> : vector<48x32xf32>
    %232 = tpu.matmul %230, %231, %cst_77 {dimension_numbers = #tpu.dot_dimension_numbers<[1], [0], [0], [1], [0, 0, 1, 1], [], []>} : vector<48x128xbf16>, vector<128x32xbf16>, vector<48x32xf32> -> vector<48x32xf32>
    %c11 = arith.constant 11 : index
    %c0_78 = arith.constant 0 : index
    %233 = vector.load %arg3[%c11, %c0_78] : memref<16x128xf32, #tpu.memory_space<vmem>>, vector<1x32xf32>
    %234 = vector.broadcast %233 : vector<1x32xf32> to vector<48x32xf32>
    %235 = arith.addf %232, %234 : vector<48x32xf32>
    %236 = arith.addf %235, %221 : vector<48x32xf32>
    %c12 = arith.constant 12 : index
    %c0_79 = arith.constant 0 : index
    %237 = vector.load %arg3[%c12, %c0_79] : memref<16x128xf32, #tpu.memory_space<vmem>>, vector<1x32xf32>
    %c13 = arith.constant 13 : index
    %c0_80 = arith.constant 0 : index
    %238 = vector.load %arg3[%c13, %c0_80] : memref<16x128xf32, #tpu.memory_space<vmem>>, vector<1x32xf32>
    %cst_81 = arith.constant dense<0.000000e+00> : vector<48xf32>
    %239 = vector.multi_reduction <add>, %236, %cst_81 [1] : vector<48x32xf32> to vector<48xf32>
    %240 = vector.shape_cast %239 : vector<48xf32> to vector<48x1xf32>
    %cst_82 = arith.constant 3.200000e+01 : f32
    %241 = vector.broadcast %cst_82 : f32 to vector<48x1xf32>
    %242 = arith.divf %240, %241 : vector<48x1xf32>
    %243 = vector.broadcast %242 : vector<48x1xf32> to vector<48x32xf32>
    %244 = arith.subf %236, %243 : vector<48x32xf32>
    %245 = arith.mulf %244, %244 : vector<48x32xf32>
    %cst_83 = arith.constant dense<0.000000e+00> : vector<48xf32>
    %246 = vector.multi_reduction <add>, %245, %cst_83 [1] : vector<48x32xf32> to vector<48xf32>
    %247 = vector.shape_cast %246 : vector<48xf32> to vector<48x1xf32>
    %cst_84 = arith.constant 3.200000e+01 : f32
    %248 = vector.broadcast %cst_84 : f32 to vector<48x1xf32>
    %249 = arith.divf %247, %248 : vector<48x1xf32>
    %250 = vector.broadcast %242 : vector<48x1xf32> to vector<48x32xf32>
    %251 = arith.subf %236, %250 : vector<48x32xf32>
    %cst_85 = arith.constant 9.99999974E-6 : f32
    %252 = vector.broadcast %cst_85 : f32 to vector<48x1xf32>
    %253 = arith.addf %249, %252 : vector<48x1xf32>
    %254 = math.rsqrt %253 : vector<48x1xf32>
    %255 = vector.broadcast %254 : vector<48x1xf32> to vector<48x32xf32>
    %256 = arith.mulf %251, %255 : vector<48x32xf32>
    %257 = vector.broadcast %237 : vector<1x32xf32> to vector<48x32xf32>
    %258 = arith.mulf %256, %257 : vector<48x32xf32>
    %259 = vector.broadcast %238 : vector<1x32xf32> to vector<48x32xf32>
    %260 = arith.addf %258, %259 : vector<48x32xf32>
    %261 = arith.truncf %260 : vector<48x32xf32> to vector<48x32xbf16>
    %c768 = arith.constant 768 : index
    %c0_86 = arith.constant 0 : index
    %262 = vector.load %arg2[%c768, %c0_86] : memref<800x128xbf16, #tpu.memory_space<vmem>>, vector<32x32xbf16>
    %cst_87 = arith.constant dense<0.000000e+00> : vector<48x32xf32>
    %263 = tpu.matmul %261, %262, %cst_87 {dimension_numbers = #tpu.dot_dimension_numbers<[1], [0], [0], [1], [0, 0, 1, 1], [], []>} : vector<48x32xbf16>, vector<32x32xbf16>, vector<48x32xf32> -> vector<48x32xf32>
    %c14 = arith.constant 14 : index
    %c0_88 = arith.constant 0 : index
    %264 = vector.load %arg3[%c14, %c0_88] : memref<16x128xf32, #tpu.memory_space<vmem>>, vector<1x32xf32>
    %265 = vector.broadcast %264 : vector<1x32xf32> to vector<48x32xf32>
    %266 = arith.addf %263, %265 : vector<48x32xf32>
    %c0_89 = arith.constant 0 : index
    %c0_90 = arith.constant 0 : index
    %267 = vector.load %arg4[%c0_89, %c0_90] : memref<48x32xf32, #tpu.memory_space<vmem>>, vector<48x32xf32>
    tpu.vector_store %arg4[%c0_89, %c0_90], %266 {strides = array<i32>} : memref<48x32xf32, #tpu.memory_space<vmem>>, vector<48x32xf32>,
    return
  }
  func.func @transform_0(%arg0: i32) -> (i32, i32) {
    %c0_i32 = arith.constant 0 : i32
    %c0_i32_0 = arith.constant 0 : i32
    %c0_i32_1 = arith.constant 0 : i32
    return %c0_i32, %c0_i32_0 : i32, i32
  }
  func.func @transform_1(%arg0: i32) -> (i32, i32) {
    %c0_i32 = arith.constant 0 : i32
    %c0_i32_0 = arith.constant 0 : i32
    %c0_i32_1 = arith.constant 0 : i32
    return %c0_i32, %c0_i32_0 : i32, i32
  }
  func.func @transform_2(%arg0: i32) -> (i32, i32) {
    %c0_i32 = arith.constant 0 : i32
    %c0_i32_0 = arith.constant 0 : i32
    %c0_i32_1 = arith.constant 0 : i32
    return %c0_i32, %c0_i32_0 : i32, i32
  }
  func.func @transform_3(%arg0: i32) -> (i32, i32) {
    %c0_i32 = arith.constant 0 : i32
    %c0_i32_0 = arith.constant 0 : i32
    %c0_i32_1 = arith.constant 0 : i32
    return %c0_i32, %c0_i32_0 : i32, i32
  }
}

</mosaic_0001>

<llo_original>
// kernel: tpu_custom_call.1
$region0: #{tpu_custom_call.1}
  #allocation0 [shape = 'u32[]', space=smem, size = 0x4, offset = 0x4, fixed_abs, tag = 'smem constant byte address 0x4 - core index']
  #allocation1 [shape = 'u32[144,128]{1,0:T(1,128)}', space=vmem, size = 0x12000, scoped, tag = 'internal scratch']
  %s0 = inlined_call_operand.hbm [shape: bf16[48,128], index: 0, kind: input, shape index: {}]
  %s1 = inlined_call_operand.hbm [shape: bf16[800,128], index: 1, kind: input, shape index: {}]
  %s2 = inlined_call_operand.hbm [shape: f32[16,128], index: 2, kind: input, shape index: {}]
  %s3 = inlined_call_operand.vmem [shape: f32[48,32], index: 3, kind: output, shape index: {}]
  %s4 = sld [smem:[#allocation0]]
  $region34: #{tpu_custom_call.1} parent=0
    _
  %s6 = ssub.s32 1, %s4
  %s7 = scalar_select 0, %s6, %s4
  $region1: #{tpu_custom_call.1} parent=0
    #allocation2 [shape = 'u8[12288]{0}', space=vmem, size = 0x3000, scoped, tag = 'input window, operand 0, single buffered']
    #allocation3 [shape = 's32[1]{0}', space=sflag, size = 0x4, scoped, tag = 'scoped memory for tpu_custom_call.1']
    #allocation4 [shape = 'u8[204800]{0}', space=vmem, size = 0x32000, scoped, tag = 'input window, operand 1, single buffered']
    #allocation5 [shape = 's32[1]{0}', space=sflag, size = 0x4, scoped, tag = 'scoped memory for tpu_custom_call.1']
    #allocation6 [shape = 'u8[8192]{0}', space=vmem, size = 0x2000, scoped, tag = 'input window, operand 2, single buffered']
    %8 = vsyncpa [#allocation3], 0
    %9 = vsyncpa [#allocation5], 0
    // Predicated region
    $region2: #{tpu_custom_call.1} parent=1 // pred_check
      _
    $region3: #{tpu_custom_call.1} parent=1 // pred_check_branch
      %11 = sbr.rel (0) target = $region5
    $region4: #{tpu_custom_call.1} parent=1 // pred_region
      %s13 = ssub.s32 384, 384
      %14 = vsyncadd [#allocation3], %s13
      %s15 = sshll.u32 [#allocation2], 4
      %s16 = int_to_ptr.vmem [resolvable:$true] %s15
      %21 = dma.hbm_to_vmem [thread:$0]  %s0, 384, %s16, [#allocation3], 64, 64, 4
    $region5: #{tpu_custom_call.1} parent=1 // pred_fallthru
      _
    // Predicated region
    $region6: #{tpu_custom_call.1} parent=1 // pred_check
      _
    $region7: #{tpu_custom_call.1} parent=1 // pred_check_branch
      %23 = sbr.rel (0) target = $region9
    $region8: #{tpu_custom_call.1} parent=1 // pred_region
      %s25 = ssub.s32 6400, 6400
      %26 = vsyncadd [#allocation5], %s25
      %s27 = sshll.u32 [#allocation4], 4
      %s28 = int_to_ptr.vmem [resolvable:$true] %s27
      %33 = dma.hbm_to_vmem [thread:$0]  %s1, 6400, %s28, [#allocation5], 64, 64, 4
    $region9: #{tpu_custom_call.1} parent=1 // pred_fallthru
      _
    // Predicated region
    $region10: #{tpu_custom_call.1} parent=1 // pred_check
      _
    $region11: #{tpu_custom_call.1} parent=1 // pred_check_branch
      %35 = sbr.rel (0) target = $region13
    $region12: #{tpu_custom_call.1} parent=1 // pred_region
      %s37 = ssub.s32 256, 256
      %38 = vsyncadd [#allocation5], %s37
      %s39 = sshll.u32 [#allocation6], 4
      %s40 = int_to_ptr.vmem [resolvable:$true] %s39
      %45 = dma.hbm_to_vmem [thread:$0]  %s2, 256, %s40, [#allocation5], 128, 128, 8
    $region13: #{tpu_custom_call.1} parent=1 // pred_fallthru
      _
    // Predicated region
    $region14: #{tpu_custom_call.1} parent=1 // pred_check
      _
    $region15: #{tpu_custom_call.1} parent=1 // pred_check_branch
      %47 = sbr.rel (0) target = $region17
    $region16: #{tpu_custom_call.1} parent=1 // pred_region
      %48 = dma.done [#allocation3], 384
    $region17: #{tpu_custom_call.1} parent=1 // pred_fallthru
      _
    // Predicated region
    $region18: #{tpu_custom_call.1} parent=1 // pred_check
      _
    $region19: #{tpu_custom_call.1} parent=1 // pred_check_branch
      %50 = sbr.rel (0) target = $region21
    $region20: #{tpu_custom_call.1} parent=1 // pred_region
      %51 = dma.done [#allocation5], 6400
    $region21: #{tpu_custom_call.1} parent=1 // pred_fallthru
      _
    // Predicated region
    $region22: #{tpu_custom_call.1} parent=1 // pred_check
      _
    $region23: #{tpu_custom_call.1} parent=1 // pred_check_branch
      %53 = sbr.rel (0) target = $region25
    $region24: #{tpu_custom_call.1} parent=1 // pred_region
      %54 = dma.done [#allocation5], 256
    $region25: #{tpu_custom_call.1} parent=1 // pred_fallthru
      _
    %v56 = vld [vmem:[#allocation2] sm:$0xf]
    %v57 = vld [vmem:[#allocation2 + $0x4] sm:$0xf]
    %v58 = vld [vmem:[#allocation2 + $0x8] sm:$0xf]
    %v59 = vld [vmem:[#allocation2 + $0xc] sm:$0xf]
    %v60 = vld [vmem:[#allocation2 + $0x10] sm:$0xf]
    %v61 = vld [vmem:[#allocation2 + $0x14] sm:$0xf]
    %v62 = vld [vmem:[#allocation4] sm:$0xf]
    %v63 = vld [vmem:[#allocation4 + $0x4] sm:$0xf]
    %v64 = vld [vmem:[#allocation4 + $0x8] sm:$0xf]
    %v65 = vld [vmem:[#allocation4 + $0xc] sm:$0xf]
    %v66 = vld [vmem:[#allocation4 + $0x10] sm:$0xf]
    %v67 = vld [vmem:[#allocation4 + $0x14] sm:$0xf]
    %v68 = vld [vmem:[#allocation4 + $0x18] sm:$0xf]
    %v69 = vld [vmem:[#allocation4 + $0x1c] sm:$0xf]
    %v70 = vld [vmem:[#allocation4 + $0x20] sm:$0xf]
    %v71 = vld [vmem:[#allocation4 + $0x24] sm:$0xf]
    %v72 = vld [vmem:[#allocation4 + $0x28] sm:$0xf]
    %v73 = vld [vmem:[#allocation4 + $0x2c] sm:$0xf]
    %v74 = vld [vmem:[#allocation4 + $0x30] sm:$0xf]
    %v75 = vld [vmem:[#allocation4 + $0x34] sm:$0xf]
    %v76 = vld [vmem:[#allocation4 + $0x38] sm:$0xf]
    %v77 = vld [vmem:[#allocation4 + $0x3c] sm:$0xf]
    %v84 = vunpack.c.l.b16 %v56
    %v85 = vunpack.c.l.b16 %v57
    %v86 = vunpack.c.l.b16 %v58
    %v87 = vunpack.c.l.b16 %v59
    %v88 = vunpack.c.l.b16 %v60
    %v89 = vunpack.c.l.b16 %v61
    %v90 = vpack.c.b16 %v85, %v84
    %v91 = vpack.c.b16 %v87, %v86
    %v92 = vpack.c.b16 %v89, %v88
    %v112 = vunpack.c.l.b16 %v62
    %v113 = vunpack.c.l.b16 %v63
    %v114 = vunpack.c.l.b16 %v64
    %v115 = vunpack.c.l.b16 %v65
    %v116 = vunpack.c.l.b16 %v66
    %v117 = vunpack.c.l.b16 %v67
    %v118 = vunpack.c.l.b16 %v68
    %v119 = vunpack.c.l.b16 %v69
    %v120 = vunpack.c.l.b16 %v70
    %v121 = vunpack.c.l.b16 %v71
    %v122 = vunpack.c.l.b16 %v72
    %v123 = vunpack.c.l.b16 %v73
    %v124 = vunpack.c.l.b16 %v74
    %v125 = vunpack.c.l.b16 %v75
    %v126 = vunpack.c.l.b16 %v76
    %v127 = vunpack.c.l.b16 %v77
    %v128 = vpack.c.b16 %v113, %v112
    %v129 = vpack.c.b16 %v115, %v114
    %v130 = vpack.c.b16 %v117, %v116
    %v131 = vpack.c.b16 %v119, %v118
    %v132 = vpack.c.b16 %v121, %v120
    %v133 = vpack.c.b16 %v123, %v122
    %v134 = vpack.c.b16 %v125, %v124
    %v135 = vpack.c.b16 %v127, %v126
    %144 = vmatprep.subr.bf16.mxu0 0
    %145 = vmatpush1.bf16.msra.mxu0 %v128
    %146 = vmatprep.subr.bf16.mxu0 0
    %147 = vmatpush1.bf16.msra.mxu0 %v129
    %148 = vmatprep.subr.bf16.mxu0 0
    %149 = vmatpush1.bf16.msra.mxu0 %v130
    %150 = vmatprep.subr.bf16.mxu0 0
    %151 = vmatpush1.bf16.msra.mxu0 %v131
    %152 = vmatprep.subr.bf16.mxu0 0
    %153 = vmatpush1.bf16.msra.mxu0 %v132
    %154 = vmatprep.subr.bf16.mxu0 0
    %155 = vmatpush1.bf16.msra.mxu0 %v133
    %156 = vmatprep.subr.bf16.mxu0 0
    %157 = vmatpush1.bf16.msra.mxu0 %v134
    %158 = vmatprep.subr.bf16.mxu0 0
    %159 = vmatpush1.bf16.msra.mxu0 %v135
    %160 = vmatprep.subr.bf16.mxu0 0
    %161 = vmatpush1.bf16.msra.mxu0 0
    %162 = vmatprep.subr.bf16.mxu0 0
    %163 = vmatpush1.bf16.msra.mxu0 0
    %164 = vmatprep.subr.bf16.mxu0 0
    %165 = vmatpush1.bf16.msra.mxu0 0
    %166 = vmatprep.subr.bf16.mxu0 0
    %167 = vmatpush1.bf16.msra.mxu0 0
    %168 = vmatprep.subr.bf16.mxu0 0
    %169 = vmatpush1.bf16.msra.mxu0 0
    %170 = vmatprep.subr.bf16.mxu0 0
    %171 = vmatpush1.bf16.msra.mxu0 0
    %172 = vmatprep.subr.bf16.mxu0 0
    %173 = vmatpush1.bf16.msra.mxu0 0
    %174 = vmatprep.subr.bf16.mxu0 0
    %175 = vmatpush1.bf16.msra.mxu0 0
    %176 = vmatprep.mubr.bf16.mxu0 0
    %177 = vmatmul.mubr.bf16.gmra.mrb[0].mxu0 %v90
    %v178 = vpop.f32.mrb[0].mxu0
    %v179 = vadd.f32 0.0, %v178
    %v180 = vpop.f32.mrb[0].mxu0
    %v181 = vpop.f32.mrb[0].mxu0
    %v182 = vadd.f32 0.0, %v181
    %v183 = vpop.f32.mrb[0].mxu0
    %184 = vmatprep.mubr.bf16.mxu0 0
    %185 = vmatmul.mubr.bf16.gmra.mrb[0].mxu0 %v91
    %v186 = vpop.f32.mrb[0].mxu0
    %v187 = vadd.f32 0.0, %v186
    %v188 = vpop.f32.mrb[0].mxu0
    %v189 = vpop.f32.mrb[0].mxu0
    %v190 = vadd.f32 0.0, %v189
    %v191 = vpop.f32.mrb[0].mxu0
    %192 = vmatprep.mubr.bf16.mxu0 0
    %193 = vmatmul.mubr.bf16.gmra.mrb[0].mxu0 %v92
    %v194 = vpop.f32.mrb[0].mxu0
    %v195 = vadd.f32 0.0, %v194
    %v196 = vpop.f32.mrb[0].mxu0
    %v197 = vpop.f32.mrb[0].mxu0
    %v198 = vadd.f32 0.0, %v197
    %v199 = vpop.f32.mrb[0].mxu0
    %200 = vdwg.mxu0
    %v201 = vpack.c.bf16 %v182, %v179
    %v202 = vpack.c.bf16 %v190, %v187
    %v203 = vpack.c.bf16 %v198, %v195
    %v204 = vld [vmem:[#allocation4 + $0x40] sm:$0xf]
    %v205 = vld [vmem:[#allocation4 + $0x44] sm:$0xf]
    %v206 = vld [vmem:[#allocation4 + $0x48] sm:$0xf]
    %v207 = vld [vmem:[#allocation4 + $0x4c] sm:$0xf]
    %v212 = vunpack.c.l.b16 %v204
    %v213 = vunpack.c.l.b16 %v205
    %v214 = vunpack.c.l.b16 %v206
    %v215 = vunpack.c.l.b16 %v207
    %v216 = vpack.c.b16 %v213, %v212
    %v217 = vpack.c.b16 %v215, %v214
    %vm220 = vcmask 261120
    %v222 = vsel %vm220, %v201, 0
    %v225 = vsel %vm220, %v202, 0
    %v228 = vsel %vm220, %v203, 0
    %230 = vmatprep.subr.bf16.mxu0 0
    %231 = vmatpush1.bf16.msra.mxu0 %v216
    %232 = vmatprep.subr.bf16.mxu0 0
    %233 = vmatpush1.bf16.msra.mxu0 %v217
    %234 = vmatprep.subr.bf16.mxu0 0
    %235 = vmatpush1.bf16.msra.mxu0 0
    %236 = vmatprep.subr.bf16.mxu0 0
    %237 = vmatpush1.bf16.msra.mxu0 0
    %238 = vmatprep.subr.bf16.mxu0 0
    %239 = vmatpush1.bf16.msra.mxu0 0
    %240 = vmatprep.subr.bf16.mxu0 0
    %241 = vmatpush1.bf16.msra.mxu0 0
    %242 = vmatprep.subr.bf16.mxu0 0
    %243 = vmatpush1.bf16.msra.mxu0 0
    %244 = vmatprep.subr.bf16.mxu0 0
    %245 = vmatpush1.bf16.msra.mxu0 0
    %246 = vmatprep.subr.bf16.mxu0 0
    %247 = vmatpush1.bf16.msra.mxu0 0
    %248 = vmatprep.subr.bf16.mxu0 0
    %249 = vmatpush1.bf16.msra.mxu0 0
    %250 = vmatprep.subr.bf16.mxu0 0
    %251 = vmatpush1.bf16.msra.mxu0 0
    %252 = vmatprep.subr.bf16.mxu0 0
    %253 = vmatpush1.bf16.msra.mxu0 0
    %254 = vmatprep.subr.bf16.mxu0 0
    %255 = vmatpush1.bf16.msra.mxu0 0
    %256 = vmatprep.subr.bf16.mxu0 0
    %257 = vmatpush1.bf16.msra.mxu0 0
    %258 = vmatprep.subr.bf16.mxu0 0
    %259 = vmatpush1.bf16.msra.mxu0 0
    %260 = vmatprep.subr.bf16.mxu0 0
    %261 = vmatpush1.bf16.msra.mxu0 0
    %262 = vmatprep.mubr.bf16.mxu0 0
    %263 = vmatmul.mubr.bf16.gmra.mrb[0].mxu0 %v222
    %v264 = vpop.f32.mrb[0].mxu0
    %v265 = vadd.f32 0.0, %v264
    %v266 = vpop.f32.mrb[0].mxu0
    %v267 = vpop.f32.mrb[0].mxu0
    %v268 = vadd.f32 0.0, %v267
    %v269 = vpop.f32.mrb[0].mxu0
    %270 = vmatprep.mubr.bf16.mxu0 0
    %271 = vmatmul.mubr.bf16.gmra.mrb[0].mxu0 %v225
    %v272 = vpop.f32.mrb[0].mxu0
    %v273 = vadd.f32 0.0, %v272
    %v274 = vpop.f32.mrb[0].mxu0
    %v275 = vpop.f32.mrb[0].mxu0
    %v276 = vadd.f32 0.0, %v275
    %v277 = vpop.f32.mrb[0].mxu0
    %278 = vmatprep.mubr.bf16.mxu0 0
    %279 = vmatmul.mubr.bf16.gmra.mrb[0].mxu0 %v228
    %v280 = vpop.f32.mrb[0].mxu0
    %v281 = vadd.f32 0.0, %v280
    %v282 = vpop.f32.mrb[0].mxu0
    %v283 = vpop.f32.mrb[0].mxu0
    %v284 = vadd.f32 0.0, %v283
    %v285 = vpop.f32.mrb[0].mxu0
    %286 = vdwg.mxu0
    %v287 = vld [vmem:[#allocation4 + $0x50] sm:$0xf]
    %v288 = vld [vmem:[#allocation4 + $0x54] sm:$0xf]
    %v289 = vld [vmem:[#allocation4 + $0x58] sm:$0xf]
    %v290 = vld [vmem:[#allocation4 + $0x5c] sm:$0xf]
    %v295 = vunpack.c.l.b16 %v287
    %v296 = vunpack.c.l.b16 %v288
    %v297 = vunpack.c.l.b16 %v289
    %v298 = vunpack.c.l.b16 %v290
    %v299 = vpack.c.b16 %v296, %v295
    %v300 = vpack.c.b16 %v298, %v297
    %303 = vmatprep.subr.bf16.mxu0 0
    %304 = vmatpush1.bf16.msra.mxu0 %v299
    %305 = vmatprep.subr.bf16.mxu0 0
    %306 = vmatpush1.bf16.msra.mxu0 %v300
    %307 = vmatprep.subr.bf16.mxu0 0
    %308 = vmatpush1.bf16.msra.mxu0 0
    %309 = vmatprep.subr.bf16.mxu0 0
    %310 = vmatpush1.bf16.msra.mxu0 0
    %311 = vmatprep.subr.bf16.mxu0 0
    %312 = vmatpush1.bf16.msra.mxu0 0
    %313 = vmatprep.subr.bf16.mxu0 0
    %314 = vmatpush1.bf16.msra.mxu0 0
    %315 = vmatprep.subr.bf16.mxu0 0
    %316 = vmatpush1.bf16.msra.mxu0 0
    %317 = vmatprep.subr.bf16.mxu0 0
    %318 = vmatpush1.bf16.msra.mxu0 0
    %319 = vmatprep.subr.bf16.mxu0 0
    %320 = vmatpush1.bf16.msra.mxu0 0
    %321 = vmatprep.subr.bf16.mxu0 0
    %322 = vmatpush1.bf16.msra.mxu0 0
    %323 = vmatprep.subr.bf16.mxu0 0
    %324 = vmatpush1.bf16.msra.mxu0 0
    %325 = vmatprep.subr.bf16.mxu0 0
    %326 = vmatpush1.bf16.msra.mxu0 0
    %327 = vmatprep.subr.bf16.mxu0 0
    %328 = vmatpush1.bf16.msra.mxu0 0
    %329 = vmatprep.subr.bf16.mxu0 0
    %330 = vmatpush1.bf16.msra.mxu0 0
    %331 = vmatprep.subr.bf16.mxu0 0
    %332 = vmatpush1.bf16.msra.mxu0 0
    %333 = vmatprep.subr.bf16.mxu0 0
    %334 = vmatpush1.bf16.msra.mxu0 0
    %335 = vmatprep.mubr.bf16.mxu0 0
    %336 = vmatmul.mubr.bf16.gmra.mrb[0].mxu0 %v222
    %v337 = vpop.f32.mrb[0].mxu0
    %v338 = vadd.f32 0.0, %v337
    %v339 = vpop.f32.mrb[0].mxu0
    %v340 = vpop.f32.mrb[0].mxu0
    %v341 = vadd.f32 0.0, %v340
    %v342 = vpop.f32.mrb[0].mxu0
    %343 = vmatprep.mubr.bf16.mxu0 0
    %344 = vmatmul.mubr.bf16.gmra.mrb[0].mxu0 %v225
    %v345 = vpop.f32.mrb[0].mxu0
    %v346 = vadd.f32 0.0, %v345
    %v347 = vpop.f32.mrb[0].mxu0
    %v348 = vpop.f32.mrb[0].mxu0
    %v349 = vadd.f32 0.0, %v348
    %v350 = vpop.f32.mrb[0].mxu0
    %351 = vmatprep.mubr.bf16.mxu0 0
    %352 = vmatmul.mubr.bf16.gmra.mrb[0].mxu0 %v228
    %v353 = vpop.f32.mrb[0].mxu0
    %v354 = vadd.f32 0.0, %v353
    %v355 = vpop.f32.mrb[0].mxu0
    %v356 = vpop.f32.mrb[0].mxu0
    %v357 = vadd.f32 0.0, %v356
    %v358 = vpop.f32.mrb[0].mxu0
    %359 = vdwg.mxu0
    %v360 = vld [vmem:[#allocation4 + $0x60] sm:$0xf]
    %v361 = vld [vmem:[#allocation4 + $0x64] sm:$0xf]
    %v362 = vld [vmem:[#allocation4 + $0x68] sm:$0xf]
    %v363 = vld [vmem:[#allocation4 + $0x6c] sm:$0xf]
    %v368 = vunpack.c.l.b16 %v360
    %v369 = vunpack.c.l.b16 %v361
    %v370 = vunpack.c.l.b16 %v362
    %v371 = vunpack.c.l.b16 %v363
    %v372 = vpack.c.b16 %v369, %v368
    %v373 = vpack.c.b16 %v371, %v370
    %376 = vmatprep.subr.bf16.mxu0 0
    %377 = vmatpush1.bf16.msra.mxu0 %v372
    %378 = vmatprep.subr.bf16.mxu0 0
    %379 = vmatpush1.bf16.msra.mxu0 %v373
    %380 = vmatprep.subr.bf16.mxu0 0
    %381 = vmatpush1.bf16.msra.mxu0 0
    %382 = vmatprep.subr.bf16.mxu0 0
    %383 = vmatpush1.bf16.msra.mxu0 0
    %384 = vmatprep.subr.bf16.mxu0 0
    %385 = vmatpush1.bf16.msra.mxu0 0
    %386 = vmatprep.subr.bf16.mxu0 0
    %387 = vmatpush1.bf16.msra.mxu0 0
    %388 = vmatprep.subr.bf16.mxu0 0
    %389 = vmatpush1.bf16.msra.mxu0 0
    %390 = vmatprep.subr.bf16.mxu0 0
    %391 = vmatpush1.bf16.msra.mxu0 0
    %392 = vmatprep.subr.bf16.mxu0 0
    %393 = vmatpush1.bf16.msra.mxu0 0
    %394 = vmatprep.subr.bf16.mxu0 0
    %395 = vmatpush1.bf16.msra.mxu0 0
    %396 = vmatprep.subr.bf16.mxu0 0
    %397 = vmatpush1.bf16.msra.mxu0 0
    %398 = vmatprep.subr.bf16.mxu0 0
    %399 = vmatpush1.bf16.msra.mxu0 0
    %400 = vmatprep.subr.bf16.mxu0 0
    %401 = vmatpush1.bf16.msra.mxu0 0
    %402 = vmatprep.subr.bf16.mxu0 0
    %403 = vmatpush1.bf16.msra.mxu0 0
    %404 = vmatprep.subr.bf16.mxu0 0
    %405 = vmatpush1.bf16.msra.mxu0 0
    %406 = vmatprep.subr.bf16.mxu0 0
    %407 = vmatpush1.bf16.msra.mxu0 0
    %408 = vmatprep.mubr.bf16.mxu0 0
    %409 = vmatmul.mubr.bf16.gmra.mrb[0].mxu0 %v222
    %v410 = vpop.f32.mrb[0].mxu0
    %v411 = vadd.f32 0.0, %v410
    %v412 = vpop.f32.mrb[0].mxu0
    %v413 = vpop.f32.mrb[0].mxu0
    %v414 = vadd.f32 0.0, %v413
    %v415 = vpop.f32.mrb[0].mxu0
    %416 = vmatprep.mubr.bf16.mxu0 0
    %417 = vmatmul.mubr.bf16.gmra.mrb[0].mxu0 %v225
    %v418 = vpop.f32.mrb[0].mxu0
    %v419 = vadd.f32 0.0, %v418
    %v420 = vpop.f32.mrb[0].mxu0
    %v421 = vpop.f32.mrb[0].mxu0
    %v422 = vadd.f32 0.0, %v421
    %v423 = vpop.f32.mrb[0].mxu0
    %424 = vmatprep.mubr.bf16.mxu0 0
    %425 = vmatmul.mubr.bf16.gmra.mrb[0].mxu0 %v228
    %v426 = vpop.f32.mrb[0].mxu0
    %v427 = vadd.f32 0.0, %v426
    %v428 = vpop.f32.mrb[0].mxu0
    %v429 = vpop.f32.mrb[0].mxu0
    %v430 = vadd.f32 0.0, %v429
    %v431 = vpop.f32.mrb[0].mxu0
    %432 = vdwg.mxu0
    %v433 = vpack.c.bf16 %v265, %v265
    %v434 = vpack.c.bf16 %v268, %v268
    %v435 = vpack.c.bf16 %v273, %v273
    %v436 = vpack.c.bf16 %v276, %v276
    %v437 = vpack.c.bf16 %v281, %v281
    %v438 = vpack.c.bf16 %v284, %v284
    %v439 = vpack.c.bf16 %v338, %v338
    %v440 = vpack.c.bf16 %v341, %v341
    %v441 = vpack.c.bf16 %v346, %v346
    %v442 = vpack.c.bf16 %v349, %v349
    %v443 = vpack.c.bf16 %v354, %v354
    %v444 = vpack.c.bf16 %v357, %v357
    %v445 = vpack.c.bf16 %v411, %v411
    %v446 = vpack.c.bf16 %v414, %v414
    %v447 = vpack.c.bf16 %v419, %v419
    %v448 = vpack.c.bf16 %v422, %v422
    %v449 = vpack.c.bf16 %v427, %v427
    %v450 = vpack.c.bf16 %v430, %v430
    %v452 = vsel %vm220, %v433, 0
    %v455 = vsel %vm220, %v439, 0
    %457 = vmatprep.subr.bf16.mxu0 0
    %458 = vmatpush1.bf16.xpose.msra.mxu0 %v455
    %459 = vmatprep.subr.bf16.mxu0 0
    %460 = vmatpush1.bf16.xpose.msra.mxu0 0
    %461 = vmatprep.subr.bf16.mxu0 0
    %462 = vmatpush1.bf16.xpose.msra.mxu0 0
    %463 = vmatprep.subr.bf16.mxu0 0
    %464 = vmatpush1.bf16.xpose.msra.mxu0 0
    %465 = vmatprep.subr.bf16.mxu0 0
    %466 = vmatpush1.bf16.xpose.msra.mxu0 0
    %467 = vmatprep.subr.bf16.mxu0 0
    %468 = vmatpush1.bf16.xpose.msra.mxu0 0
    %469 = vmatprep.subr.bf16.mxu0 0
    %470 = vmatpush1.bf16.xpose.msra.mxu0 0
    %471 = vmatprep.subr.bf16.mxu0 0
    %472 = vmatpush1.bf16.xpose.msra.mxu0 0
    %473 = vmatprep.subr.bf16.mxu0 0
    %474 = vmatpush1.bf16.xpose.msra.mxu0 0
    %475 = vmatprep.subr.bf16.mxu0 0
    %476 = vmatpush1.bf16.xpose.msra.mxu0 0
    %477 = vmatprep.subr.bf16.mxu0 0
    %478 = vmatpush1.bf16.xpose.msra.mxu0 0
    %479 = vmatprep.subr.bf16.mxu0 0
    %480 = vmatpush1.bf16.xpose.msra.mxu0 0
    %481 = vmatprep.subr.bf16.mxu0 0
    %482 = vmatpush1.bf16.xpose.msra.mxu0 0
    %483 = vmatprep.subr.bf16.mxu0 0
    %484 = vmatpush1.bf16.xpose.msra.mxu0 0
    %485 = vmatprep.subr.bf16.mxu0 0
    %486 = vmatpush1.bf16.xpose.msra.mxu0 0
    %487 = vmatprep.subr.bf16.mxu0 0
    %488 = vmatpush1.bf16.xpose.msra.mxu0 0
    %489 = vmatprep.mubr.bf16.mxu0 0
    %490 = vmatmul.mubr.bf16.gmra.mrb[0].mxu0 %v452
    %v491 = vpop.f32.mrb[0].mxu0
    %v492 = vadd.f32 0.0, %v491
    %v493 = vpop.f32.mrb[0].mxu0
    %v494 = vpop.f32.mrb[0].mxu0
    %v495 = vpop.f32.mrb[0].mxu0
    %496 = vdwg.mxu0
    %v498 = vsel %vm220, %v434, 0
    %v501 = vsel %vm220, %v440, 0
    %503 = vmatprep.subr.bf16.mxu0 0
    %504 = vmatpush1.bf16.xpose.msra.mxu0 %v501
    %505 = vmatprep.subr.bf16.mxu0 0
    %506 = vmatpush1.bf16.xpose.msra.mxu0 0
    %507 = vmatprep.subr.bf16.mxu0 0
    %508 = vmatpush1.bf16.xpose.msra.mxu0 0
    %509 = vmatprep.subr.bf16.mxu0 0
    %510 = vmatpush1.bf16.xpose.msra.mxu0 0
    %511 = vmatprep.subr.bf16.mxu0 0
    %512 = vmatpush1.bf16.xpose.msra.mxu0 0
    %513 = vmatprep.subr.bf16.mxu0 0
    %514 = vmatpush1.bf16.xpose.msra.mxu0 0
    %515 = vmatprep.subr.bf16.mxu0 0
    %516 = vmatpush1.bf16.xpose.msra.mxu0 0
    %517 = vmatprep.subr.bf16.mxu0 0
    %518 = vmatpush1.bf16.xpose.msra.mxu0 0
    %519 = vmatprep.subr.bf16.mxu0 0
    %520 = vmatpush1.bf16.xpose.msra.mxu0 0
    %521 = vmatprep.subr.bf16.mxu0 0
    %522 = vmatpush1.bf16.xpose.msra.mxu0 0
    %523 = vmatprep.subr.bf16.mxu0 0
    %524 = vmatpush1.bf16.xpose.msra.mxu0 0
    %525 = vmatprep.subr.bf16.mxu0 0
    %526 = vmatpush1.bf16.xpose.msra.mxu0 0
    %527 = vmatprep.subr.bf16.mxu0 0
    %528 = vmatpush1.bf16.xpose.msra.mxu0 0
    %529 = vmatprep.subr.bf16.mxu0 0
    %530 = vmatpush1.bf16.xpose.msra.mxu0 0
    %531 = vmatprep.subr.bf16.mxu0 0
    %532 = vmatpush1.bf16.xpose.msra.mxu0 0
    %533 = vmatprep.subr.bf16.mxu0 0
    %534 = vmatpush1.bf16.xpose.msra.mxu0 0
    %535 = vmatprep.mubr.bf16.mxu0 0
    %536 = vmatmul.mubr.bf16.gmra.mrb[0].mxu0 %v498
    %v537 = vpop.f32.mrb[0].mxu0
    %v538 = vadd.f32 0.0, %v537
    %v539 = vpop.f32.mrb[0].mxu0
    %v540 = vpop.f32.mrb[0].mxu0
    %v541 = vpop.f32.mrb[0].mxu0
    %542 = vdwg.mxu0
    %v544 = vsel %vm220, %v435, 0
    %v547 = vsel %vm220, %v441, 0
    %549 = vmatprep.subr.bf16.mxu0 0
    %550 = vmatpush1.bf16.xpose.msra.mxu0 %v547
    %551 = vmatprep.subr.bf16.mxu0 0
    %552 = vmatpush1.bf16.xpose.msra.mxu0 0
    %553 = vmatprep.subr.bf16.mxu0 0
    %554 = vmatpush1.bf16.xpose.msra.mxu0 0
    %555 = vmatprep.subr.bf16.mxu0 0
    %556 = vmatpush1.bf16.xpose.msra.mxu0 0
    %557 = vmatprep.subr.bf16.mxu0 0
    %558 = vmatpush1.bf16.xpose.msra.mxu0 0
    %559 = vmatprep.subr.bf16.mxu0 0
    %560 = vmatpush1.bf16.xpose.msra.mxu0 0
    %561 = vmatprep.subr.bf16.mxu0 0
    %562 = vmatpush1.bf16.xpose.msra.mxu0 0
    %563 = vmatprep.subr.bf16.mxu0 0
    %564 = vmatpush1.bf16.xpose.msra.mxu0 0
    %565 = vmatprep.subr.bf16.mxu0 0
    %566 = vmatpush1.bf16.xpose.msra.mxu0 0
    %567 = vmatprep.subr.bf16.mxu0 0
    %568 = vmatpush1.bf16.xpose.msra.mxu0 0
    %569 = vmatprep.subr.bf16.mxu0 0
    %570 = vmatpush1.bf16.xpose.msra.mxu0 0
    %571 = vmatprep.subr.bf16.mxu0 0
    %572 = vmatpush1.bf16.xpose.msra.mxu0 0
    %573 = vmatprep.subr.bf16.mxu0 0
    %574 = vmatpush1.bf16.xpose.msra.mxu0 0
    %575 = vmatprep.subr.bf16.mxu0 0
    %576 = vmatpush1.bf16.xpose.msra.mxu0 0
    %577 = vmatprep.subr.bf16.mxu0 0
    %578 = vmatpush1.bf16.xpose.msra.mxu0 0
    %579 = vmatprep.subr.bf16.mxu0 0
    %580 = vmatpush1.bf16.xpose.msra.mxu0 0
    %581 = vmatprep.mubr.bf16.mxu0 0
    %582 = vmatmul.mubr.bf16.gmra.mrb[0].mxu0 %v544
    %v583 = vpop.f32.mrb[0].mxu0
    %v584 = vadd.f32 0.0, %v583
    %v585 = vpop.f32.mrb[0].mxu0
    %v586 = vpop.f32.mrb[0].mxu0
    %v587 = vpop.f32.mrb[0].mxu0
    %588 = vdwg.mxu0
    %v590 = vsel %vm220, %v436, 0
    %v593 = vsel %vm220, %v442, 0
    %595 = vmatprep.subr.bf16.mxu0 0
    %596 = vmatpush1.bf16.xpose.msra.mxu0 %v593
    %597 = vmatprep.subr.bf16.mxu0 0
    %598 = vmatpush1.bf16.xpose.msra.mxu0 0
    %599 = vmatprep.subr.bf16.mxu0 0
    %600 = vmatpush1.bf16.xpose.msra.mxu0 0
    %601 = vmatprep.subr.bf16.mxu0 0
    %602 = vmatpush1.bf16.xpose.msra.mxu0 0
    %603 = vmatprep.subr.bf16.mxu0 0
    %604 = vmatpush1.bf16.xpose.msra.mxu0 0
    %605 = vmatprep.subr.bf16.mxu0 0
    %606 = vmatpush1.bf16.xpose.msra.mxu0 0
    %607 = vmatprep.subr.bf16.mxu0 0
    %608 = vmatpush1.bf16.xpose.msra.mxu0 0
    %609 = vmatprep.subr.bf16.mxu0 0
    %610 = vmatpush1.bf16.xpose.msra.mxu0 0
    %611 = vmatprep.subr.bf16.mxu0 0
    %612 = vmatpush1.bf16.xpose.msra.mxu0 0
    %613 = vmatprep.subr.bf16.mxu0 0
    %614 = vmatpush1.bf16.xpose.msra.mxu0 0
    %615 = vmatprep.subr.bf16.mxu0 0
    %616 = vmatpush1.bf16.xpose.msra.mxu0 0
    %617 = vmatprep.subr.bf16.mxu0 0
    %618 = vmatpush1.bf16.xpose.msra.mxu0 0
    %619 = vmatprep.subr.bf16.mxu0 0
    %620 = vmatpush1.bf16.xpose.msra.mxu0 0
    %621 = vmatprep.subr.bf16.mxu0 0
    %622 = vmatpush1.bf16.xpose.msra.mxu0 0
    %623 = vmatprep.subr.bf16.mxu0 0
    %624 = vmatpush1.bf16.xpose.msra.mxu0 0
    %625 = vmatprep.subr.bf16.mxu0 0
    %626 = vmatpush1.bf16.xpose.msra.mxu0 0
    %627 = vmatprep.mubr.bf16.mxu0 0
    %628 = vmatmul.mubr.bf16.gmra.mrb[0].mxu0 %v590
    %v629 = vpop.f32.mrb[0].mxu0
    %v630 = vadd.f32 0.0, %v629
    %v631 = vpop.f32.mrb[0].mxu0
    %v632 = vpop.f32.mrb[0].mxu0
    %v633 = vpop.f32.mrb[0].mxu0
    %634 = vdwg.mxu0
    %v636 = vsel %vm220, %v437, 0
    %v639 = vsel %vm220, %v443, 0
    %641 = vmatprep.subr.bf16.mxu0 0
    %642 = vmatpush1.bf16.xpose.msra.mxu0 %v639
    %643 = vmatprep.subr.bf16.mxu0 0
    %644 = vmatpush1.bf16.xpose.msra.mxu0 0
    %645 = vmatprep.subr.bf16.mxu0 0
    %646 = vmatpush1.bf16.xpose.msra.mxu0 0
    %647 = vmatprep.subr.bf16.mxu0 0
    %648 = vmatpush1.bf16.xpose.msra.mxu0 0
    %649 = vmatprep.subr.bf16.mxu0 0
    %650 = vmatpush1.bf16.xpose.msra.mxu0 0
    %651 = vmatprep.subr.bf16.mxu0 0
    %652 = vmatpush1.bf16.xpose.msra.mxu0 0
    %653 = vmatprep.subr.bf16.mxu0 0
    %654 = vmatpush1.bf16.xpose.msra.mxu0 0
    %655 = vmatprep.subr.bf16.mxu0 0
    %656 = vmatpush1.bf16.xpose.msra.mxu0 0
    %657 = vmatprep.subr.bf16.mxu0 0
    %658 = vmatpush1.bf16.xpose.msra.mxu0 0
    %659 = vmatprep.subr.bf16.mxu0 0
    %660 = vmatpush1.bf16.xpose.msra.mxu0 0
    %661 = vmatprep.subr.bf16.mxu0 0
    %662 = vmatpush1.bf16.xpose.msra.mxu0 0
    %663 = vmatprep.subr.bf16.mxu0 0
    %664 = vmatpush1.bf16.xpose.msra.mxu0 0
    %665 = vmatprep.subr.bf16.mxu0 0
    %666 = vmatpush1.bf16.xpose.msra.mxu0 0
    %667 = vmatprep.subr.bf16.mxu0 0
    %668 = vmatpush1.bf16.xpose.msra.mxu0 0
    %669 = vmatprep.subr.bf16.mxu0 0
    %670 = vmatpush1.bf16.xpose.msra.mxu0 0
    %671 = vmatprep.subr.bf16.mxu0 0
    %672 = vmatpush1.bf16.xpose.msra.mxu0 0
    %673 = vmatprep.mubr.bf16.mxu0 0
    %674 = vmatmul.mubr.bf16.gmra.mrb[0].mxu0 %v636
    %v675 = vpop.f32.mrb[0].mxu0
    %v676 = vadd.f32 0.0, %v675
    %v677 = vpop.f32.mrb[0].mxu0
    %v678 = vpop.f32.mrb[0].mxu0
    %v679 = vpop.f32.mrb[0].mxu0
    %680 = vdwg.mxu0
    %v682 = vsel %vm220, %v438, 0
    %v685 = vsel %vm220, %v444, 0
    %687 = vmatprep.subr.bf16.mxu0 0
    %688 = vmatpush1.bf16.xpose.msra.mxu0 %v685
    %689 = vmatprep.subr.bf16.mxu0 0
    %690 = vmatpush1.bf16.xpose.msra.mxu0 0
    %691 = vmatprep.subr.bf16.mxu0 0
    %692 = vmatpush1.bf16.xpose.msra.mxu0 0
    %693 = vmatprep.subr.bf16.mxu0 0
    %694 = vmatpush1.bf16.xpose.msra.mxu0 0
    %695 = vmatprep.subr.bf16.mxu0 0
    %696 = vmatpush1.bf16.xpose.msra.mxu0 0
    %697 = vmatprep.subr.bf16.mxu0 0
    %698 = vmatpush1.bf16.xpose.msra.mxu0 0
    %699 = vmatprep.subr.bf16.mxu0 0
    %700 = vmatpush1.bf16.xpose.msra.mxu0 0
    %701 = vmatprep.subr.bf16.mxu0 0
    %702 = vmatpush1.bf16.xpose.msra.mxu0 0
    %703 = vmatprep.subr.bf16.mxu0 0
    %704 = vmatpush1.bf16.xpose.msra.mxu0 0
    %705 = vmatprep.subr.bf16.mxu0 0
    %706 = vmatpush1.bf16.xpose.msra.mxu0 0
    %707 = vmatprep.subr.bf16.mxu0 0
    %708 = vmatpush1.bf16.xpose.msra.mxu0 0
    %709 = vmatprep.subr.bf16.mxu0 0
    %710 = vmatpush1.bf16.xpose.msra.mxu0 0
    %711 = vmatprep.subr.bf16.mxu0 0
    %712 = vmatpush1.bf16.xpose.msra.mxu0 0
    %713 = vmatprep.subr.bf16.mxu0 0
    %714 = vmatpush1.bf16.xpose.msra.mxu0 0
    %715 = vmatprep.subr.bf16.mxu0 0
    %716 = vmatpush1.bf16.xpose.msra.mxu0 0
    %717 = vmatprep.subr.bf16.mxu0 0
    %718 = vmatpush1.bf16.xpose.msra.mxu0 0
    %719 = vmatprep.mubr.bf16.mxu0 0
    %720 = vmatmul.mubr.bf16.gmra.mrb[0].mxu0 %v682
    %v721 = vpop.f32.mrb[0].mxu0
    %v722 = vadd.f32 0.0, %v721
    %v723 = vpop.f32.mrb[0].mxu0
    %v724 = vpop.f32.mrb[0].mxu0
    %v725 = vpop.f32.mrb[0].mxu0
    %726 = vdwg.mxu0
    %vm727 = vcmask 64512
    %v728 = vsel %vm727, %v492, -inf
    %729 = vmax.xlane.f32.xlu0 %v728
    %v730 = vpop.xlane.xlu0 %729
    %v731 = vsel %vm727, %v538, -inf
    %732 = vmax.xlane.f32.xlu0 %v731
    %v733 = vpop.xlane.xlu0 %732
    %v734 = vsel %vm727, %v584, -inf
    %735 = vmax.xlane.f32.xlu0 %v734
    %v736 = vpop.xlane.xlu0 %735
    %v737 = vsel %vm727, %v630, -inf
    %738 = vmax.xlane.f32.xlu0 %v737
    %v739 = vpop.xlane.xlu0 %738
    %v740 = vsel %vm727, %v676, -inf
    %741 = vmax.xlane.f32.xlu0 %v740
    %v742 = vpop.xlane.xlu0 %741
    %v743 = vsel %vm727, %v722, -inf
    %744 = vmax.xlane.f32.xlu0 %v743
    %v745 = vpop.xlane.xlu0 %744
    %v746 = vsub.f32 %v492, %v730
    %v747 = vsub.f32 %v538, %v733
    %v748 = vsub.f32 %v584, %v736
    %v749 = vsub.f32 %v630, %v739
    %v750 = vsub.f32 %v676, %v742
    %v751 = vsub.f32 %v722, %v745
    %v752 = vmul.f32 %v746, 1.442695
    %v753 = vpow.pop %v752
    %v754 = vmul.f32 %v747, 1.442695
    %v755 = vpow.pop %v754
    %v756 = vmul.f32 %v748, 1.442695
    %v757 = vpow.pop %v756
    %v758 = vmul.f32 %v749, 1.442695
    %v759 = vpow.pop %v758
    %v760 = vmul.f32 %v750, 1.442695
    %v761 = vpow.pop %v760
    %v762 = vmul.f32 %v751, 1.442695
    %v763 = vpow.pop %v762
    %v764 = vsel %vm727, %v753, 0.0
    %765 = vadd.xlane.f32.xlu0 %v764
    %v766 = vpop.xlane.xlu0 %765
    %v767 = vsel %vm727, %v755, 0.0
    %768 = vadd.xlane.f32.xlu0 %v767
    %v769 = vpop.xlane.xlu0 %768
    %v770 = vsel %vm727, %v757, 0.0
    %771 = vadd.xlane.f32.xlu0 %v770
    %v772 = vpop.xlane.xlu0 %771
    %v773 = vsel %vm727, %v759, 0.0
    %774 = vadd.xlane.f32.xlu0 %v773
    %v775 = vpop.xlane.xlu0 %774
    %v776 = vsel %vm727, %v761, 0.0
    %777 = vadd.xlane.f32.xlu0 %v776
    %v778 = vpop.xlane.xlu0 %777
    %v779 = vsel %vm727, %v763, 0.0
    %780 = vadd.xlane.f32.xlu0 %v779
    %v781 = vpop.xlane.xlu0 %780
    %v782 = vrcp.pop %v766
    %v783 = vrcp.pop %v769
    %v784 = vrcp.pop %v772
    %v785 = vrcp.pop %v775
    %v786 = vrcp.pop %v778
    %v787 = vrcp.pop %v781
    %v788 = vmul.f32 %v753, %v782
    %v789 = vmul.f32 %v755, %v783
    %v790 = vmul.f32 %v757, %v784
    %v791 = vmul.f32 %v759, %v785
    %v792 = vmul.f32 %v761, %v786
    %v793 = vmul.f32 %v763, %v787
    %v794 = vpack.c.bf16 %v788, %v788
    %v795 = vpack.c.bf16 %v789, %v789
    %v796 = vpack.c.bf16 %v790, %v790
    %v797 = vpack.c.bf16 %v791, %v791
    %v798 = vpack.c.bf16 %v792, %v792
    %v799 = vpack.c.bf16 %v793, %v793
    %v801 = vsel %vm727, %v794, 0
    %vm803 = vcmask 1043456
    %v805 = vsel %vm803, %v445, 0
    %807 = vmatprep.subr.bf16.mxu0 0
    %808 = vmatpush1.bf16.msra.mxu0 %v805
    %809 = vmatprep.subr.bf16.mxu0 0
    %810 = vmatpush1.bf16.msra.mxu0 0
    %811 = vmatprep.subr.bf16.mxu0 0
    %812 = vmatpush1.bf16.msra.mxu0 0
    %813 = vmatprep.subr.bf16.mxu0 0
    %814 = vmatpush1.bf16.msra.mxu0 0
    %815 = vmatprep.subr.bf16.mxu0 0
    %816 = vmatpush1.bf16.msra.mxu0 0
    %817 = vmatprep.subr.bf16.mxu0 0
    %818 = vmatpush1.bf16.msra.mxu0 0
    %819 = vmatprep.subr.bf16.mxu0 0
    %820 = vmatpush1.bf16.msra.mxu0 0
    %821 = vmatprep.subr.bf16.mxu0 0
    %822 = vmatpush1.bf16.msra.mxu0 0
    %823 = vmatprep.subr.bf16.mxu0 0
    %824 = vmatpush1.bf16.msra.mxu0 0
    %825 = vmatprep.subr.bf16.mxu0 0
    %826 = vmatpush1.bf16.msra.mxu0 0
    %827 = vmatprep.subr.bf16.mxu0 0
    %828 = vmatpush1.bf16.msra.mxu0 0
    %829 = vmatprep.subr.bf16.mxu0 0
    %830 = vmatpush1.bf16.msra.mxu0 0
    %831 = vmatprep.subr.bf16.mxu0 0
    %832 = vmatpush1.bf16.msra.mxu0 0
    %833 = vmatprep.subr.bf16.mxu0 0
    %834 = vmatpush1.bf16.msra.mxu0 0
    %835 = vmatprep.subr.bf16.mxu0 0
    %836 = vmatpush1.bf16.msra.mxu0 0
    %837 = vmatprep.subr.bf16.mxu0 0
    %838 = vmatpush1.bf16.msra.mxu0 0
    %839 = vmatprep.mubr.bf16.mxu0 0
    %840 = vmatmul.mubr.bf16.gmra.mrb[0].mxu0 %v801
    %v841 = vpop.f32.mrb[0].mxu0
    %v842 = vadd.f32 0.0, %v841
    %v843 = vpop.f32.mrb[0].mxu0
    %v844 = vpop.f32.mrb[0].mxu0
    %v845 = vpop.f32.mrb[0].mxu0
    %846 = vdwg.mxu0
    %v848 = vsel %vm727, %v795, 0
    %v851 = vsel %vm803, %v446, 0
    %853 = vmatprep.subr.bf16.mxu0 0
    %854 = vmatpush1.bf16.msra.mxu0 %v851
    %855 = vmatprep.subr.bf16.mxu0 0
    %856 = vmatpush1.bf16.msra.mxu0 0
    %857 = vmatprep.subr.bf16.mxu0 0
    %858 = vmatpush1.bf16.msra.mxu0 0
    %859 = vmatprep.subr.bf16.mxu0 0
    %860 = vmatpush1.bf16.msra.mxu0 0
    %861 = vmatprep.subr.bf16.mxu0 0
    %862 = vmatpush1.bf16.msra.mxu0 0
    %863 = vmatprep.subr.bf16.mxu0 0
    %864 = vmatpush1.bf16.msra.mxu0 0
    %865 = vmatprep.subr.bf16.mxu0 0
    %866 = vmatpush1.bf16.msra.mxu0 0
    %867 = vmatprep.subr.bf16.mxu0 0
    %868 = vmatpush1.bf16.msra.mxu0 0
    %869 = vmatprep.subr.bf16.mxu0 0
    %870 = vmatpush1.bf16.msra.mxu0 0
    %871 = vmatprep.subr.bf16.mxu0 0
    %872 = vmatpush1.bf16.msra.mxu0 0
    %873 = vmatprep.subr.bf16.mxu0 0
    %874 = vmatpush1.bf16.msra.mxu0 0
    %875 = vmatprep.subr.bf16.mxu0 0
    %876 = vmatpush1.bf16.msra.mxu0 0
    %877 = vmatprep.subr.bf16.mxu0 0
    %878 = vmatpush1.bf16.msra.mxu0 0
    %879 = vmatprep.subr.bf16.mxu0 0
    %880 = vmatpush1.bf16.msra.mxu0 0
    %881 = vmatprep.subr.bf16.mxu0 0
    %882 = vmatpush1.bf16.msra.mxu0 0
    %883 = vmatprep.subr.bf16.mxu0 0
    %884 = vmatpush1.bf16.msra.mxu0 0
    %885 = vmatprep.mubr.bf16.mxu0 0
    %886 = vmatmul.mubr.bf16.gmra.mrb[0].mxu0 %v848
    %v887 = vpop.f32.mrb[0].mxu0
    %v888 = vadd.f32 0.0, %v887
    %v889 = vpop.f32.mrb[0].mxu0
    %v890 = vpop.f32.mrb[0].mxu0
    %v891 = vpop.f32.mrb[0].mxu0
    %892 = vdwg.mxu0
    %v894 = vsel %vm727, %v796, 0
    %v897 = vsel %vm803, %v447, 0
    %899 = vmatprep.subr.bf16.mxu0 0
    %900 = vmatpush1.bf16.msra.mxu0 %v897
    %901 = vmatprep.subr.bf16.mxu0 0
    %902 = vmatpush1.bf16.msra.mxu0 0
    %903 = vmatprep.subr.bf16.mxu0 0
    %904 = vmatpush1.bf16.msra.mxu0 0
    %905 = vmatprep.subr.bf16.mxu0 0
    %906 = vmatpush1.bf16.msra.mxu0 0
    %907 = vmatprep.subr.bf16.mxu0 0
    %908 = vmatpush1.bf16.msra.mxu0 0
    %909 = vmatprep.subr.bf16.mxu0 0
    %910 = vmatpush1.bf16.msra.mxu0 0
    %911 = vmatprep.subr.bf16.mxu0 0
    %912 = vmatpush1.bf16.msra.mxu0 0
    %913 = vmatprep.subr.bf16.mxu0 0
    %914 = vmatpush1.bf16.msra.mxu0 0
    %915 = vmatprep.subr.bf16.mxu0 0
    %916 = vmatpush1.bf16.msra.mxu0 0
    %917 = vmatprep.subr.bf16.mxu0 0
    %918 = vmatpush1.bf16.msra.mxu0 0
    %919 = vmatprep.subr.bf16.mxu0 0
    %920 = vmatpush1.bf16.msra.mxu0 0
    %921 = vmatprep.subr.bf16.mxu0 0
    %922 = vmatpush1.bf16.msra.mxu0 0
    %923 = vmatprep.subr.bf16.mxu0 0
    %924 = vmatpush1.bf16.msra.mxu0 0
    %925 = vmatprep.subr.bf16.mxu0 0
    %926 = vmatpush1.bf16.msra.mxu0 0
    %927 = vmatprep.subr.bf16.mxu0 0
    %928 = vmatpush1.bf16.msra.mxu0 0
    %929 = vmatprep.subr.bf16.mxu0 0
    %930 = vmatpush1.bf16.msra.mxu0 0
    %931 = vmatprep.mubr.bf16.mxu0 0
    %932 = vmatmul.mubr.bf16.gmra.mrb[0].mxu0 %v894
    %v933 = vpop.f32.mrb[0].mxu0
    %v934 = vadd.f32 0.0, %v933
    %v935 = vpop.f32.mrb[0].mxu0
    %v936 = vpop.f32.mrb[0].mxu0
    %v937 = vpop.f32.mrb[0].mxu0
    %938 = vdwg.mxu0
    %v940 = vsel %vm727, %v797, 0
    %v943 = vsel %vm803, %v448, 0
    %945 = vmatprep.subr.bf16.mxu0 0
    %946 = vmatpush1.bf16.msra.mxu0 %v943
    %947 = vmatprep.subr.bf16.mxu0 0
    %948 = vmatpush1.bf16.msra.mxu0 0
    %949 = vmatprep.subr.bf16.mxu0 0
    %950 = vmatpush1.bf16.msra.mxu0 0
    %951 = vmatprep.subr.bf16.mxu0 0
    %952 = vmatpush1.bf16.msra.mxu0 0
    %953 = vmatprep.subr.bf16.mxu0 0
    %954 = vmatpush1.bf16.msra.mxu0 0
    %955 = vmatprep.subr.bf16.mxu0 0
    %956 = vmatpush1.bf16.msra.mxu0 0
    %957 = vmatprep.subr.bf16.mxu0 0
    %958 = vmatpush1.bf16.msra.mxu0 0
    %959 = vmatprep.subr.bf16.mxu0 0
    %960 = vmatpush1.bf16.msra.mxu0 0
    %961 = vmatprep.subr.bf16.mxu0 0
    %962 = vmatpush1.bf16.msra.mxu0 0
    %963 = vmatprep.subr.bf16.mxu0 0
    %964 = vmatpush1.bf16.msra.mxu0 0
    %965 = vmatprep.subr.bf16.mxu0 0
    %966 = vmatpush1.bf16.msra.mxu0 0
    %967 = vmatprep.subr.bf16.mxu0 0
    %968 = vmatpush1.bf16.msra.mxu0 0
    %969 = vmatprep.subr.bf16.mxu0 0
    %970 = vmatpush1.bf16.msra.mxu0 0
    %971 = vmatprep.subr.bf16.mxu0 0
    %972 = vmatpush1.bf16.msra.mxu0 0
    %973 = vmatprep.subr.bf16.mxu0 0
    %974 = vmatpush1.bf16.msra.mxu0 0
    %975 = vmatprep.subr.bf16.mxu0 0
    %976 = vmatpush1.bf16.msra.mxu0 0
    %977 = vmatprep.mubr.bf16.mxu0 0
    %978 = vmatmul.mubr.bf16.gmra.mrb[0].mxu0 %v940
    %v979 = vpop.f32.mrb[0].mxu0
    %v980 = vadd.f32 0.0, %v979
    %v981 = vpop.f32.mrb[0].mxu0
    %v982 = vpop.f32.mrb[0].mxu0
    %v983 = vpop.f32.mrb[0].mxu0
    %984 = vdwg.mxu0
    %v986 = vsel %vm727, %v798, 0
    %v989 = vsel %vm803, %v449, 0
    %991 = vmatprep.subr.bf16.mxu0 0
    %992 = vmatpush1.bf16.msra.mxu0 %v989
    %993 = vmatprep.subr.bf16.mxu0 0
    %994 = vmatpush1.bf16.msra.mxu0 0
    %995 = vmatprep.subr.bf16.mxu0 0
    %996 = vmatpush1.bf16.msra.mxu0 0
    %997 = vmatprep.subr.bf16.mxu0 0
    %998 = vmatpush1.bf16.msra.mxu0 0
    %999 = vmatprep.subr.bf16.mxu0 0
    %1000 = vmatpush1.bf16.msra.mxu0 0
    %1001 = vmatprep.subr.bf16.mxu0 0
    %1002 = vmatpush1.bf16.msra.mxu0 0
    %1003 = vmatprep.subr.bf16.mxu0 0
    %1004 = vmatpush1.bf16.msra.mxu0 0
    %1005 = vmatprep.subr.bf16.mxu0 0
    %1006 = vmatpush1.bf16.msra.mxu0 0
    %1007 = vmatprep.subr.bf16.mxu0 0
    %1008 = vmatpush1.bf16.msra.mxu0 0
    %1009 = vmatprep.subr.bf16.mxu0 0
    %1010 = vmatpush1.bf16.msra.mxu0 0
    %1011 = vmatprep.subr.bf16.mxu0 0
    %1012 = vmatpush1.bf16.msra.mxu0 0
    %1013 = vmatprep.subr.bf16.mxu0 0
    %1014 = vmatpush1.bf16.msra.mxu0 0
    %1015 = vmatprep.subr.bf16.mxu0 0
    %1016 = vmatpush1.bf16.msra.mxu0 0
    %1017 = vmatprep.subr.bf16.mxu0 0
    %1018 = vmatpush1.bf16.msra.mxu0 0
    %1019 = vmatprep.subr.bf16.mxu0 0
    %1020 = vmatpush1.bf16.msra.mxu0 0
    %1021 = vmatprep.subr.bf16.mxu0 0
    %1022 = vmatpush1.bf16.msra.mxu0 0
    %1023 = vmatprep.mubr.bf16.mxu0 0
    %1024 = vmatmul.mubr.bf16.gmra.mrb[0].mxu0 %v986
    %v1025 = vpop.f32.mrb[0].mxu0
    %v1026 = vadd.f32 0.0, %v1025
    %v1027 = vpop.f32.mrb[0].mxu0
    %v1028 = vpop.f32.mrb[0].mxu0
    %v1029 = vpop.f32.mrb[0].mxu0
    %1030 = vdwg.mxu0
    %v1032 = vsel %vm727, %v799, 0
    %v1035 = vsel %vm803, %v450, 0
    %1037 = vmatprep.subr.bf16.mxu0 0
    %1038 = vmatpush1.bf16.msra.mxu0 %v1035
    %1039 = vmatprep.subr.bf16.mxu0 0
    %1040 = vmatpush1.bf16.msra.mxu0 0
    %1041 = vmatprep.subr.bf16.mxu0 0
    %1042 = vmatpush1.bf16.msra.mxu0 0
    %1043 = vmatprep.subr.bf16.mxu0 0
    %1044 = vmatpush1.bf16.msra.mxu0 0
    %1045 = vmatprep.subr.bf16.mxu0 0
    %1046 = vmatpush1.bf16.msra.mxu0 0
    %1047 = vmatprep.subr.bf16.mxu0 0
    %1048 = vmatpush1.bf16.msra.mxu0 0
    %1049 = vmatprep.subr.bf16.mxu0 0
    %1050 = vmatpush1.bf16.msra.mxu0 0
    %1051 = vmatprep.subr.bf16.mxu0 0
    %1052 = vmatpush1.bf16.msra.mxu0 0
    %1053 = vmatprep.subr.bf16.mxu0 0
    %1054 = vmatpush1.bf16.msra.mxu0 0
    %1055 = vmatprep.subr.bf16.mxu0 0
    %1056 = vmatpush1.bf16.msra.mxu0 0
    %1057 = vmatprep.subr.bf16.mxu0 0
    %1058 = vmatpush1.bf16.msra.mxu0 0
    %1059 = vmatprep.subr.bf16.mxu0 0
    %1060 = vmatpush1.bf16.msra.mxu0 0
    %1061 = vmatprep.subr.bf16.mxu0 0
    %1062 = vmatpush1.bf16.msra.mxu0 0
    %1063 = vmatprep.subr.bf16.mxu0 0
    %1064 = vmatpush1.bf16.msra.mxu0 0
    %1065 = vmatprep.subr.bf16.mxu0 0
    %1066 = vmatpush1.bf16.msra.mxu0 0
    %1067 = vmatprep.subr.bf16.mxu0 0
    %1068 = vmatpush1.bf16.msra.mxu0 0
    %1069 = vmatprep.mubr.bf16.mxu0 0
    %1070 = vmatmul.mubr.bf16.gmra.mrb[0].mxu0 %v1032
    %v1071 = vpop.f32.mrb[0].mxu0
    %v1072 = vadd.f32 0.0, %v1071
    %v1073 = vpop.f32.mrb[0].mxu0
    %v1074 = vpop.f32.mrb[0].mxu0
    %v1075 = vpop.f32.mrb[0].mxu0
    %1076 = vdwg.mxu0
    %v1077 = vpack.c.bf16 %v888, %v842
    %v1078 = vpack.c.bf16 %v980, %v934
    %v1079 = vpack.c.bf16 %v1072, %v1026
    %v1080 = vld [vmem:[#allocation4 + $0x70] sm:$0xf]
    %v1081 = vld [vmem:[#allocation4 + $0x74] sm:$0xf]
    %v1082 = vld [vmem:[#allocation4 + $0x78] sm:$0xf]
    %v1083 = vld [vmem:[#allocation4 + $0x7c] sm:$0xf]
    %1085 = vrot.lane.b32.xlu0 %v433, 96
    %v1086 = vpop.permute.xlu0 %1085
    %1088 = vrot.lane.b32.xlu0 %v439, 96
    %v1089 = vpop.permute.xlu0 %1088
    %v1091 = vsel %vm220, %v1086, 0
    %v1094 = vsel %vm220, %v1089, 0
    %1096 = vmatprep.subr.bf16.mxu0 0
    %1097 = vmatpush1.bf16.xpose.msra.mxu0 %v1094
    %1098 = vmatprep.subr.bf16.mxu0 0
    %1099 = vmatpush1.bf16.xpose.msra.mxu0 0
    %1100 = vmatprep.subr.bf16.mxu0 0
    %1101 = vmatpush1.bf16.xpose.msra.mxu0 0
    %1102 = vmatprep.subr.bf16.mxu0 0
    %1103 = vmatpush1.bf16.xpose.msra.mxu0 0
    %1104 = vmatprep.subr.bf16.mxu0 0
    %1105 = vmatpush1.bf16.xpose.msra.mxu0 0
    %1106 = vmatprep.subr.bf16.mxu0 0
    %1107 = vmatpush1.bf16.xpose.msra.mxu0 0
    %1108 = vmatprep.subr.bf16.mxu0 0
    %1109 = vmatpush1.bf16.xpose.msra.mxu0 0
    %1110 = vmatprep.subr.bf16.mxu0 0
    %1111 = vmatpush1.bf16.xpose.msra.mxu0 0
    %1112 = vmatprep.subr.bf16.mxu0 0
    %1113 = vmatpush1.bf16.xpose.msra.mxu0 0
    %1114 = vmatprep.subr.bf16.mxu0 0
    %1115 = vmatpush1.bf16.xpose.msra.mxu0 0
    %1116 = vmatprep.subr.bf16.mxu0 0
    %1117 = vmatpush1.bf16.xpose.msra.mxu0 0
    %1118 = vmatprep.subr.bf16.mxu0 0
    %1119 = vmatpush1.bf16.xpose.msra.mxu0 0
    %1120 = vmatprep.subr.bf16.mxu0 0
    %1121 = vmatpush1.bf16.xpose.msra.mxu0 0
    %1122 = vmatprep.subr.bf16.mxu0 0
    %1123 = vmatpush1.bf16.xpose.msra.mxu0 0
    %1124 = vmatprep.subr.bf16.mxu0 0
    %1125 = vmatpush1.bf16.xpose.msra.mxu0 0
    %1126 = vmatprep.subr.bf16.mxu0 0
    %1127 = vmatpush1.bf16.xpose.msra.mxu0 0
    %1128 = vmatprep.mubr.bf16.mxu0 0
    %1129 = vmatmul.mubr.bf16.gmra.mrb[0].mxu0 %v1091
    %v1130 = vpop.f32.mrb[0].mxu0
    %v1131 = vadd.f32 0.0, %v1130
    %v1132 = vpop.f32.mrb[0].mxu0
    %v1133 = vpop.f32.mrb[0].mxu0
    %v1134 = vpop.f32.mrb[0].mxu0
    %1135 = vdwg.mxu0
    %1137 = vrot.lane.b32.xlu0 %v434, 96
    %v1138 = vpop.permute.xlu0 %1137
    %1140 = vrot.lane.b32.xlu0 %v440, 96
    %v1141 = vpop.permute.xlu0 %1140
    %v1143 = vsel %vm220, %v1138, 0
    %v1146 = vsel %vm220, %v1141, 0
    %1148 = vmatprep.subr.bf16.mxu0 0
    %1149 = vmatpush1.bf16.xpose.msra.mxu0 %v1146
    %1150 = vmatprep.subr.bf16.mxu0 0
    %1151 = vmatpush1.bf16.xpose.msra.mxu0 0
    %1152 = vmatprep.subr.bf16.mxu0 0
    %1153 = vmatpush1.bf16.xpose.msra.mxu0 0
    %1154 = vmatprep.subr.bf16.mxu0 0
    %1155 = vmatpush1.bf16.xpose.msra.mxu0 0
    %1156 = vmatprep.subr.bf16.mxu0 0
    %1157 = vmatpush1.bf16.xpose.msra.mxu0 0
    %1158 = vmatprep.subr.bf16.mxu0 0
    %1159 = vmatpush1.bf16.xpose.msra.mxu0 0
    %1160 = vmatprep.subr.bf16.mxu0 0
    %1161 = vmatpush1.bf16.xpose.msra.mxu0 0
    %1162 = vmatprep.subr.bf16.mxu0 0
    %1163 = vmatpush1.bf16.xpose.msra.mxu0 0
    %1164 = vmatprep.subr.bf16.mxu0 0
    %1165 = vmatpush1.bf16.xpose.msra.mxu0 0
    %1166 = vmatprep.subr.bf16.mxu0 0
    %1167 = vmatpush1.bf16.xpose.msra.mxu0 0
    %1168 = vmatprep.subr.bf16.mxu0 0
    %1169 = vmatpush1.bf16.xpose.msra.mxu0 0
    %1170 = vmatprep.subr.bf16.mxu0 0
    %1171 = vmatpush1.bf16.xpose.msra.mxu0 0
    %1172 = vmatprep.subr.bf16.mxu0 0
    %1173 = vmatpush1.bf16.xpose.msra.mxu0 0
    %1174 = vmatprep.subr.bf16.mxu0 0
    %1175 = vmatpush1.bf16.xpose.msra.mxu0 0
    %1176 = vmatprep.subr.bf16.mxu0 0
    %1177 = vmatpush1.bf16.xpose.msra.mxu0 0
    %1178 = vmatprep.subr.bf16.mxu0 0
    %1179 = vmatpush1.bf16.xpose.msra.mxu0 0
    %1180 = vmatprep.mubr.bf16.mxu0 0
    %1181 = vmatmul.mubr.bf16.gmra.mrb[0].mxu0 %v1143
    %v1182 = vpop.f32.mrb[0].mxu0
    %v1183 = vadd.f32 0.0, %v1182
    %v1184 = vpop.f32.mrb[0].mxu0
    %v1185 = vpop.f32.mrb[0].mxu0
    %v1186 = vpop.f32.mrb[0].mxu0
    %1187 = vdwg.mxu0
    %1189 = vrot.lane.b32.xlu0 %v435, 96
    %v1190 = vpop.permute.xlu0 %1189
    %1192 = vrot.lane.b32.xlu0 %v441, 96
    %v1193 = vpop.permute.xlu0 %1192
    %v1195 = vsel %vm220, %v1190, 0
    %v1198 = vsel %vm220, %v1193, 0
    %1200 = vmatprep.subr.bf16.mxu0 0
    %1201 = vmatpush1.bf16.xpose.msra.mxu0 %v1198
    %1202 = vmatprep.subr.bf16.mxu0 0
    %1203 = vmatpush1.bf16.xpose.msra.mxu0 0
    %1204 = vmatprep.subr.bf16.mxu0 0
    %1205 = vmatpush1.bf16.xpose.msra.mxu0 0
    %1206 = vmatprep.subr.bf16.mxu0 0
    %1207 = vmatpush1.bf16.xpose.msra.mxu0 0
    %1208 = vmatprep.subr.bf16.mxu0 0
    %1209 = vmatpush1.bf16.xpose.msra.mxu0 0
    %1210 = vmatprep.subr.bf16.mxu0 0
    %1211 = vmatpush1.bf16.xpose.msra.mxu0 0
    %1212 = vmatprep.subr.bf16.mxu0 0
    %1213 = vmatpush1.bf16.xpose.msra.mxu0 0
    %1214 = vmatprep.subr.bf16.mxu0 0
    %1215 = vmatpush1.bf16.xpose.msra.mxu0 0
    %1216 = vmatprep.subr.bf16.mxu0 0
    %1217 = vmatpush1.bf16.xpose.msra.mxu0 0
    %1218 = vmatprep.subr.bf16.mxu0 0
    %1219 = vmatpush1.bf16.xpose.msra.mxu0 0
    %1220 = vmatprep.subr.bf16.mxu0 0
    %1221 = vmatpush1.bf16.xpose.msra.mxu0 0
    %1222 = vmatprep.subr.bf16.mxu0 0
    %1223 = vmatpush1.bf16.xpose.msra.mxu0 0
    %1224 = vmatprep.subr.bf16.mxu0 0
    %1225 = vmatpush1.bf16.xpose.msra.mxu0 0
    %1226 = vmatprep.subr.bf16.mxu0 0
    %1227 = vmatpush1.bf16.xpose.msra.mxu0 0
    %1228 = vmatprep.subr.bf16.mxu0 0
    %1229 = vmatpush1.bf16.xpose.msra.mxu0 0
    %1230 = vmatprep.subr.bf16.mxu0 0
    %1231 = vmatpush1.bf16.xpose.msra.mxu0 0
    %1232 = vmatprep.mubr.bf16.mxu0 0
    %1233 = vmatmul.mubr.bf16.gmra.mrb[0].mxu0 %v1195
    %v1234 = vpop.f32.mrb[0].mxu0
    %v1235 = vadd.f32 0.0, %v1234
    %v1236 = vpop.f32.mrb[0].mxu0
    %v1237 = vpop.f32.mrb[0].mxu0
    %v1238 = vpop.f32.mrb[0].mxu0
    %1239 = vdwg.mxu0
    %1241 = vrot.lane.b32.xlu0 %v436, 96
    %v1242 = vpop.permute.xlu0 %1241
    %1244 = vrot.lane.b32.xlu0 %v442, 96
    %v1245 = vpop.permute.xlu0 %1244
    %v1247 = vsel %vm220, %v1242, 0
    %v1250 = vsel %vm220, %v1245, 0
    %1252 = vmatprep.subr.bf16.mxu0 0
    %1253 = vmatpush1.bf16.xpose.msra.mxu0 %v1250
    %1254 = vmatprep.subr.bf16.mxu0 0
    %1255 = vmatpush1.bf16.xpose.msra.mxu0 0
    %1256 = vmatprep.subr.bf16.mxu0 0
    %1257 = vmatpush1.bf16.xpose.msra.mxu0 0
    %1258 = vmatprep.subr.bf16.mxu0 0
    %1259 = vmatpush1.bf16.xpose.msra.mxu0 0
    %1260 = vmatprep.subr.bf16.mxu0 0
    %1261 = vmatpush1.bf16.xpose.msra.mxu0 0
    %1262 = vmatprep.subr.bf16.mxu0 0
    %1263 = vmatpush1.bf16.xpose.msra.mxu0 0
    %1264 = vmatprep.subr.bf16.mxu0 0
    %1265 = vmatpush1.bf16.xpose.msra.mxu0 0
    %1266 = vmatprep.subr.bf16.mxu0 0
    %1267 = vmatpush1.bf16.xpose.msra.mxu0 0
    %1268 = vmatprep.subr.bf16.mxu0 0
    %1269 = vmatpush1.bf16.xpose.msra.mxu0 0
    %1270 = vmatprep.subr.bf16.mxu0 0
    %1271 = vmatpush1.bf16.xpose.msra.mxu0 0
    %1272 = vmatprep.subr.bf16.mxu0 0
    %1273 = vmatpush1.bf16.xpose.msra.mxu0 0
    %1274 = vmatprep.subr.bf16.mxu0 0
    %1275 = vmatpush1.bf16.xpose.msra.mxu0 0
    %1276 = vmatprep.subr.bf16.mxu0 0
    %1277 = vmatpush1.bf16.xpose.msra.mxu0 0
    %1278 = vmatprep.subr.bf16.mxu0 0
    %1279 = vmatpush1.bf16.xpose.msra.mxu0 0
    %1280 = vmatprep.subr.bf16.mxu0 0
    %1281 = vmatpush1.bf16.xpose.msra.mxu0 0
    %1282 = vmatprep.subr.bf16.mxu0 0
    %1283 = vmatpush1.bf16.xpose.msra.mxu0 0
    %1284 = vmatprep.mubr.bf16.mxu0 0
    %1285 = vmatmul.mubr.bf16.gmra.mrb[0].mxu0 %v1247
    %v1286 = vpop.f32.mrb[0].mxu0
    %v1287 = vadd.f32 0.0, %v1286
    %v1288 = vpop.f32.mrb[0].mxu0
    %v1289 = vpop.f32.mrb[0].mxu0
    %v1290 = vpop.f32.mrb[0].mxu0
    %1291 = vdwg.mxu0
    %1293 = vrot.lane.b32.xlu0 %v437, 96
    %v1294 = vpop.permute.xlu0 %1293
    %1296 = vrot.lane.b32.xlu0 %v443, 96
    %v1297 = vpop.permute.xlu0 %1296
    %v1299 = vsel %vm220, %v1294, 0
    %v1302 = vsel %vm220, %v1297, 0
    %1304 = vmatprep.subr.bf16.mxu0 0
    %1305 = vmatpush1.bf16.xpose.msra.mxu0 %v1302
    %1306 = vmatprep.subr.bf16.mxu0 0
    %1307 = vmatpush1.bf16.xpose.msra.mxu0 0
    %1308 = vmatprep.subr.bf16.mxu0 0
    %1309 = vmatpush1.bf16.xpose.msra.mxu0 0
    %1310 = vmatprep.subr.bf16.mxu0 0
    %1311 = vmatpush1.bf16.xpose.msra.mxu0 0
    %1312 = vmatprep.subr.bf16.mxu0 0
    %1313 = vmatpush1.bf16.xpose.msra.mxu0 0
    %1314 = vmatprep.subr.bf16.mxu0 0
    %1315 = vmatpush1.bf16.xpose.msra.mxu0 0
    %1316 = vmatprep.subr.bf16.mxu0 0
    %1317 = vmatpush1.bf16.xpose.msra.mxu0 0
    %1318 = vmatprep.subr.bf16.mxu0 0
    %1319 = vmatpush1.bf16.xpose.msra.mxu0 0
    %1320 = vmatprep.subr.bf16.mxu0 0
    %1321 = vmatpush1.bf16.xpose.msra.mxu0 0
    %1322 = vmatprep.subr.bf16.mxu0 0
    %1323 = vmatpush1.bf16.xpose.msra.mxu0 0
    %1324 = vmatprep.subr.bf16.mxu0 0
    %1325 = vmatpush1.bf16.xpose.msra.mxu0 0
    %1326 = vmatprep.subr.bf16.mxu0 0
    %1327 = vmatpush1.bf16.xpose.msra.mxu0 0
    %1328 = vmatprep.subr.bf16.mxu0 0
    %1329 = vmatpush1.bf16.xpose.msra.mxu0 0
    %1330 = vmatprep.subr.bf16.mxu0 0
    %1331 = vmatpush1.bf16.xpose.msra.mxu0 0
    %1332 = vmatprep.subr.bf16.mxu0 0
    %1333 = vmatpush1.bf16.xpose.msra.mxu0 0
    %1334 = vmatprep.subr.bf16.mxu0 0
    %1335 = vmatpush1.bf16.xpose.msra.mxu0 0
    %1336 = vmatprep.mubr.bf16.mxu0 0
    %1337 = vmatmul.mubr.bf16.gmra.mrb[0].mxu0 %v1299
    %v1338 = vpop.f32.mrb[0].mxu0
    %v1339 = vadd.f32 0.0, %v1338
    %v1340 = vpop.f32.mrb[0].mxu0
    %v1341 = vpop.f32.mrb[0].mxu0
    %v1342 = vpop.f32.mrb[0].mxu0
    %1343 = vdwg.mxu0
    %1345 = vrot.lane.b32.xlu0 %v438, 96
    %v1346 = vpop.permute.xlu0 %1345
    %1348 = vrot.lane.b32.xlu0 %v444, 96
    %v1349 = vpop.permute.xlu0 %1348
    %v1351 = vsel %vm220, %v1346, 0
    %v1354 = vsel %vm220, %v1349, 0
    %1356 = vmatprep.subr.bf16.mxu0 0
    %1357 = vmatpush1.bf16.xpose.msra.mxu0 %v1354
    %1358 = vmatprep.subr.bf16.mxu0 0
    %1359 = vmatpush1.bf16.xpose.msra.mxu0 0
    %1360 = vmatprep.subr.bf16.mxu0 0
    %1361 = vmatpush1.bf16.xpose.msra.mxu0 0
    %1362 = vmatprep.subr.bf16.mxu0 0
    %1363 = vmatpush1.bf16.xpose.msra.mxu0 0
    %1364 = vmatprep.subr.bf16.mxu0 0
    %1365 = vmatpush1.bf16.xpose.msra.mxu0 0
    %1366 = vmatprep.subr.bf16.mxu0 0
    %1367 = vmatpush1.bf16.xpose.msra.mxu0 0
    %1368 = vmatprep.subr.bf16.mxu0 0
    %1369 = vmatpush1.bf16.xpose.msra.mxu0 0
    %1370 = vmatprep.subr.bf16.mxu0 0
    %1371 = vmatpush1.bf16.xpose.msra.mxu0 0
    %1372 = vmatprep.subr.bf16.mxu0 0
    %1373 = vmatpush1.bf16.xpose.msra.mxu0 0
    %1374 = vmatprep.subr.bf16.mxu0 0
    %1375 = vmatpush1.bf16.xpose.msra.mxu0 0
    %1376 = vmatprep.subr.bf16.mxu0 0
    %1377 = vmatpush1.bf16.xpose.msra.mxu0 0
    %1378 = vmatprep.subr.bf16.mxu0 0
    %1379 = vmatpush1.bf16.xpose.msra.mxu0 0
    %1380 = vmatprep.subr.bf16.mxu0 0
    %1381 = vmatpush1.bf16.xpose.msra.mxu0 0
    %1382 = vmatprep.subr.bf16.mxu0 0
    %1383 = vmatpush1.bf16.xpose.msra.mxu0 0
    %1384 = vmatprep.subr.bf16.mxu0 0
    %1385 = vmatpush1.bf16.xpose.msra.mxu0 0
    %1386 = vmatprep.subr.bf16.mxu0 0
    %1387 = vmatpush1.bf16.xpose.msra.mxu0 0
    %1388 = vmatprep.mubr.bf16.mxu0 0
    %1389 = vmatmul.mubr.bf16.gmra.mrb[0].mxu0 %v1351
    %v1390 = vpop.f32.mrb[0].mxu0
    %v1391 = vadd.f32 0.0, %v1390
    %v1392 = vpop.f32.mrb[0].mxu0
    %v1393 = vpop.f32.mrb[0].mxu0
    %v1394 = vpop.f32.mrb[0].mxu0
    %1395 = vdwg.mxu0
    %v1396 = vsel %vm727, %v1131, -inf
    %1397 = vmax.xlane.f32.xlu0 %v1396
    %v1398 = vpop.xlane.xlu0 %1397
    %v1399 = vsel %vm727, %v1183, -inf
    %1400 = vmax.xlane.f32.xlu0 %v1399
    %v1401 = vpop.xlane.xlu0 %1400
    %v1402 = vsel %vm727, %v1235, -inf
    %1403 = vmax.xlane.f32.xlu0 %v1402
    %v1404 = vpop.xlane.xlu0 %1403
    %v1405 = vsel %vm727, %v1287, -inf
    %1406 = vmax.xlane.f32.xlu0 %v1405
    %v1407 = vpop.xlane.xlu0 %1406
    %v1408 = vsel %vm727, %v1339, -inf
    %1409 = vmax.xlane.f32.xlu0 %v1408
    %v1410 = vpop.xlane.xlu0 %1409
    %v1411 = vsel %vm727, %v1391, -inf
    %1412 = vmax.xlane.f32.xlu0 %v1411
    %v1413 = vpop.xlane.xlu0 %1412
    %v1414 = vsub.f32 %v1131, %v1398
    %v1415 = vsub.f32 %v1183, %v1401
    %v1416 = vsub.f32 %v1235, %v1404
    %v1417 = vsub.f32 %v1287, %v1407
    %v1418 = vsub.f32 %v1339, %v1410
    %v1419 = vsub.f32 %v1391, %v1413
    %v1420 = vmul.f32 %v1414, 1.442695
    %v1421 = vpow.pop %v1420
    %v1422 = vmul.f32 %v1415, 1.442695
    %v1423 = vpow.pop %v1422
    %v1424 = vmul.f32 %v1416, 1.442695
    %v1425 = vpow.pop %v1424
    %v1426 = vmul.f32 %v1417, 1.442695
    %v1427 = vpow.pop %v1426
    %v1428 = vmul.f32 %v1418, 1.442695
    %v1429 = vpow.pop %v1428
    %v1430 = vmul.f32 %v1419, 1.442695
    %v1431 = vpow.pop %v1430
    %v1432 = vsel %vm727, %v1421, 0.0
    %1433 = vadd.xlane.f32.xlu0 %v1432
    %v1434 = vpop.xlane.xlu0 %1433
    %v1435 = vsel %vm727, %v1423, 0.0
    %1436 = vadd.xlane.f32.xlu0 %v1435
    %v1437 = vpop.xlane.xlu0 %1436
    %v1438 = vsel %vm727, %v1425, 0.0
    %1439 = vadd.xlane.f32.xlu0 %v1438
    %v1440 = vpop.xlane.xlu0 %1439
    %v1441 = vsel %vm727, %v1427, 0.0
    %1442 = vadd.xlane.f32.xlu0 %v1441
    %v1443 = vpop.xlane.xlu0 %1442
    %v1444 = vsel %vm727, %v1429, 0.0
    %1445 = vadd.xlane.f32.xlu0 %v1444
    %v1446 = vpop.xlane.xlu0 %1445
    %v1447 = vsel %vm727, %v1431, 0.0
    %1448 = vadd.xlane.f32.xlu0 %v1447
    %v1449 = vpop.xlane.xlu0 %1448
    %v1450 = vrcp.pop %v1434
    %v1451 = vrcp.pop %v1437
    %v1452 = vrcp.pop %v1440
    %v1453 = vrcp.pop %v1443
    %v1454 = vrcp.pop %v1446
    %v1455 = vrcp.pop %v1449
    %v1456 = vmul.f32 %v1421, %v1450
    %v1457 = vmul.f32 %v1423, %v1451
    %v1458 = vmul.f32 %v1425, %v1452
    %v1459 = vmul.f32 %v1427, %v1453
    %v1460 = vmul.f32 %v1429, %v1454
    %v1461 = vmul.f32 %v1431, %v1455
    %v1462 = vpack.c.bf16 %v1456, %v1456
    %v1463 = vpack.c.bf16 %v1457, %v1457
    %v1464 = vpack.c.bf16 %v1458, %v1458
    %v1465 = vpack.c.bf16 %v1459, %v1459
    %v1466 = vpack.c.bf16 %v1460, %v1460
    %v1467 = vpack.c.bf16 %v1461, %v1461
    %1469 = vrot.lane.b32.xlu0 %v445, 96
    %v1470 = vpop.permute.xlu0 %1469
    %v1472 = vsel %vm727, %v1462, 0
    %v1475 = vsel %vm803, %v1470, 0
    %1477 = vmatprep.subr.bf16.mxu0 0
    %1478 = vmatpush1.bf16.msra.mxu0 %v1475
    %1479 = vmatprep.subr.bf16.mxu0 0
    %1480 = vmatpush1.bf16.msra.mxu0 0
    %1481 = vmatprep.subr.bf16.mxu0 0
    %1482 = vmatpush1.bf16.msra.mxu0 0
    %1483 = vmatprep.subr.bf16.mxu0 0
    %1484 = vmatpush1.bf16.msra.mxu0 0
    %1485 = vmatprep.subr.bf16.mxu0 0
    %1486 = vmatpush1.bf16.msra.mxu0 0
    %1487 = vmatprep.subr.bf16.mxu0 0
    %1488 = vmatpush1.bf16.msra.mxu0 0
    %1489 = vmatprep.subr.bf16.mxu0 0
    %1490 = vmatpush1.bf16.msra.mxu0 0
    %1491 = vmatprep.subr.bf16.mxu0 0
    %1492 = vmatpush1.bf16.msra.mxu0 0
    %1493 = vmatprep.subr.bf16.mxu0 0
    %1494 = vmatpush1.bf16.msra.mxu0 0
    %1495 = vmatprep.subr.bf16.mxu0 0
    %1496 = vmatpush1.bf16.msra.mxu0 0
    %1497 = vmatprep.subr.bf16.mxu0 0
    %1498 = vmatpush1.bf16.msra.mxu0 0
    %1499 = vmatprep.subr.bf16.mxu0 0
    %1500 = vmatpush1.bf16.msra.mxu0 0
    %1501 = vmatprep.subr.bf16.mxu0 0
    %1502 = vmatpush1.bf16.msra.mxu0 0
    %1503 = vmatprep.subr.bf16.mxu0 0
    %1504 = vmatpush1.bf16.msra.mxu0 0
    %1505 = vmatprep.subr.bf16.mxu0 0
    %1506 = vmatpush1.bf16.msra.mxu0 0
    %1507 = vmatprep.subr.bf16.mxu0 0
    %1508 = vmatpush1.bf16.msra.mxu0 0
    %1509 = vmatprep.mubr.bf16.mxu0 0
    %1510 = vmatmul.mubr.bf16.gmra.mrb[0].mxu0 %v1472
    %v1511 = vpop.f32.mrb[0].mxu0
    %v1512 = vadd.f32 0.0, %v1511
    %v1513 = vpop.f32.mrb[0].mxu0
    %v1514 = vpop.f32.mrb[0].mxu0
    %v1515 = vpop.f32.mrb[0].mxu0
    %1516 = vdwg.mxu0
    %1518 = vrot.lane.b32.xlu0 %v446, 96
    %v1519 = vpop.permute.xlu0 %1518
    %v1521 = vsel %vm727, %v1463, 0
    %v1524 = vsel %vm803, %v1519, 0
    %1526 = vmatprep.subr.bf16.mxu0 0
    %1527 = vmatpush1.bf16.msra.mxu0 %v1524
    %1528 = vmatprep.subr.bf16.mxu0 0
    %1529 = vmatpush1.bf16.msra.mxu0 0
    %1530 = vmatprep.subr.bf16.mxu0 0
    %1531 = vmatpush1.bf16.msra.mxu0 0
    %1532 = vmatprep.subr.bf16.mxu0 0
    %1533 = vmatpush1.bf16.msra.mxu0 0
    %1534 = vmatprep.subr.bf16.mxu0 0
    %1535 = vmatpush1.bf16.msra.mxu0 0
    %1536 = vmatprep.subr.bf16.mxu0 0
    %1537 = vmatpush1.bf16.msra.mxu0 0
    %1538 = vmatprep.subr.bf16.mxu0 0
    %1539 = vmatpush1.bf16.msra.mxu0 0
    %1540 = vmatprep.subr.bf16.mxu0 0
    %1541 = vmatpush1.bf16.msra.mxu0 0
    %1542 = vmatprep.subr.bf16.mxu0 0
    %1543 = vmatpush1.bf16.msra.mxu0 0
    %1544 = vmatprep.subr.bf16.mxu0 0
    %1545 = vmatpush1.bf16.msra.mxu0 0
    %1546 = vmatprep.subr.bf16.mxu0 0
    %1547 = vmatpush1.bf16.msra.mxu0 0
    %1548 = vmatprep.subr.bf16.mxu0 0
    %1549 = vmatpush1.bf16.msra.mxu0 0
    %1550 = vmatprep.subr.bf16.mxu0 0
    %1551 = vmatpush1.bf16.msra.mxu0 0
    %1552 = vmatprep.subr.bf16.mxu0 0
    %1553 = vmatpush1.bf16.msra.mxu0 0
    %1554 = vmatprep.subr.bf16.mxu0 0
    %1555 = vmatpush1.bf16.msra.mxu0 0
    %1556 = vmatprep.subr.bf16.mxu0 0
    %1557 = vmatpush1.bf16.msra.mxu0 0
    %1558 = vmatprep.mubr.bf16.mxu0 0
    %1559 = vmatmul.mubr.bf16.gmra.mrb[0].mxu0 %v1521
    %v1560 = vpop.f32.mrb[0].mxu0
    %v1561 = vadd.f32 0.0, %v1560
    %v1562 = vpop.f32.mrb[0].mxu0
    %v1563 = vpop.f32.mrb[0].mxu0
    %v1564 = vpop.f32.mrb[0].mxu0
    %1565 = vdwg.mxu0
    %1567 = vrot.lane.b32.xlu0 %v447, 96
    %v1568 = vpop.permute.xlu0 %1567
    %v1570 = vsel %vm727, %v1464, 0
    %v1573 = vsel %vm803, %v1568, 0
    %1575 = vmatprep.subr.bf16.mxu0 0
    %1576 = vmatpush1.bf16.msra.mxu0 %v1573
    %1577 = vmatprep.subr.bf16.mxu0 0
    %1578 = vmatpush1.bf16.msra.mxu0 0
    %1579 = vmatprep.subr.bf16.mxu0 0
    %1580 = vmatpush1.bf16.msra.mxu0 0
    %1581 = vmatprep.subr.bf16.mxu0 0
    %1582 = vmatpush1.bf16.msra.mxu0 0
    %1583 = vmatprep.subr.bf16.mxu0 0
    %1584 = vmatpush1.bf16.msra.mxu0 0
    %1585 = vmatprep.subr.bf16.mxu0 0
    %1586 = vmatpush1.bf16.msra.mxu0 0
    %1587 = vmatprep.subr.bf16.mxu0 0
    %1588 = vmatpush1.bf16.msra.mxu0 0
    %1589 = vmatprep.subr.bf16.mxu0 0
    %1590 = vmatpush1.bf16.msra.mxu0 0
    %1591 = vmatprep.subr.bf16.mxu0 0
    %1592 = vmatpush1.bf16.msra.mxu0 0
    %1593 = vmatprep.subr.bf16.mxu0 0
    %1594 = vmatpush1.bf16.msra.mxu0 0
    %1595 = vmatprep.subr.bf16.mxu0 0
    %1596 = vmatpush1.bf16.msra.mxu0 0
    %1597 = vmatprep.subr.bf16.mxu0 0
    %1598 = vmatpush1.bf16.msra.mxu0 0
    %1599 = vmatprep.subr.bf16.mxu0 0
    %1600 = vmatpush1.bf16.msra.mxu0 0
    %1601 = vmatprep.subr.bf16.mxu0 0
    %1602 = vmatpush1.bf16.msra.mxu0 0
    %1603 = vmatprep.subr.bf16.mxu0 0
    %1604 = vmatpush1.bf16.msra.mxu0 0
    %1605 = vmatprep.subr.bf16.mxu0 0
    %1606 = vmatpush1.bf16.msra.mxu0 0
    %1607 = vmatprep.mubr.bf16.mxu0 0
    %1608 = vmatmul.mubr.bf16.gmra.mrb[0].mxu0 %v1570
    %v1609 = vpop.f32.mrb[0].mxu0
    %v1610 = vadd.f32 0.0, %v1609
    %v1611 = vpop.f32.mrb[0].mxu0
    %v1612 = vpop.f32.mrb[0].mxu0
    %v1613 = vpop.f32.mrb[0].mxu0
    %1614 = vdwg.mxu0
    %1616 = vrot.lane.b32.xlu0 %v448, 96
    %v1617 = vpop.permute.xlu0 %1616
    %v1619 = vsel %vm727, %v1465, 0
    %v1622 = vsel %vm803, %v1617, 0
    %1624 = vmatprep.subr.bf16.mxu0 0
    %1625 = vmatpush1.bf16.msra.mxu0 %v1622
    %1626 = vmatprep.subr.bf16.mxu0 0
    %1627 = vmatpush1.bf16.msra.mxu0 0
    %1628 = vmatprep.subr.bf16.mxu0 0
    %1629 = vmatpush1.bf16.msra.mxu0 0
    %1630 = vmatprep.subr.bf16.mxu0 0
    %1631 = vmatpush1.bf16.msra.mxu0 0
    %1632 = vmatprep.subr.bf16.mxu0 0
    %1633 = vmatpush1.bf16.msra.mxu0 0
    %1634 = vmatprep.subr.bf16.mxu0 0
    %1635 = vmatpush1.bf16.msra.mxu0 0
    %1636 = vmatprep.subr.bf16.mxu0 0
    %1637 = vmatpush1.bf16.msra.mxu0 0
    %1638 = vmatprep.subr.bf16.mxu0 0
    %1639 = vmatpush1.bf16.msra.mxu0 0
    %1640 = vmatprep.subr.bf16.mxu0 0
    %1641 = vmatpush1.bf16.msra.mxu0 0
    %1642 = vmatprep.subr.bf16.mxu0 0
    %1643 = vmatpush1.bf16.msra.mxu0 0
    %1644 = vmatprep.subr.bf16.mxu0 0
    %1645 = vmatpush1.bf16.msra.mxu0 0
    %1646 = vmatprep.subr.bf16.mxu0 0
    %1647 = vmatpush1.bf16.msra.mxu0 0
    %1648 = vmatprep.subr.bf16.mxu0 0
    %1649 = vmatpush1.bf16.msra.mxu0 0
    %1650 = vmatprep.subr.bf16.mxu0 0
    %1651 = vmatpush1.bf16.msra.mxu0 0
    %1652 = vmatprep.subr.bf16.mxu0 0
    %1653 = vmatpush1.bf16.msra.mxu0 0
    %1654 = vmatprep.subr.bf16.mxu0 0
    %1655 = vmatpush1.bf16.msra.mxu0 0
    %1656 = vmatprep.mubr.bf16.mxu0 0
    %1657 = vmatmul.mubr.bf16.gmra.mrb[0].mxu0 %v1619
    %v1658 = vpop.f32.mrb[0].mxu0
    %v1659 = vadd.f32 0.0, %v1658
    %v1660 = vpop.f32.mrb[0].mxu0
    %v1661 = vpop.f32.mrb[0].mxu0
    %v1662 = vpop.f32.mrb[0].mxu0
    %1663 = vdwg.mxu0
    %1665 = vrot.lane.b32.xlu0 %v449, 96
    %v1666 = vpop.permute.xlu0 %1665
    %v1668 = vsel %vm727, %v1466, 0
    %v1671 = vsel %vm803, %v1666, 0
    %1673 = vmatprep.subr.bf16.mxu0 0
    %1674 = vmatpush1.bf16.msra.mxu0 %v1671
    %1675 = vmatprep.subr.bf16.mxu0 0
    %1676 = vmatpush1.bf16.msra.mxu0 0
    %1677 = vmatprep.subr.bf16.mxu0 0
    %1678 = vmatpush1.bf16.msra.mxu0 0
    %1679 = vmatprep.subr.bf16.mxu0 0
    %1680 = vmatpush1.bf16.msra.mxu0 0
    %1681 = vmatprep.subr.bf16.mxu0 0
    %1682 = vmatpush1.bf16.msra.mxu0 0
    %1683 = vmatprep.subr.bf16.mxu0 0
    %1684 = vmatpush1.bf16.msra.mxu0 0
    %1685 = vmatprep.subr.bf16.mxu0 0
    %1686 = vmatpush1.bf16.msra.mxu0 0
    %1687 = vmatprep.subr.bf16.mxu0 0
    %1688 = vmatpush1.bf16.msra.mxu0 0
    %1689 = vmatprep.subr.bf16.mxu0 0
    %1690 = vmatpush1.bf16.msra.mxu0 0
    %1691 = vmatprep.subr.bf16.mxu0 0
    %1692 = vmatpush1.bf16.msra.mxu0 0
    %1693 = vmatprep.subr.bf16.mxu0 0
    %1694 = vmatpush1.bf16.msra.mxu0 0
    %1695 = vmatprep.subr.bf16.mxu0 0
    %1696 = vmatpush1.bf16.msra.mxu0 0
    %1697 = vmatprep.subr.bf16.mxu0 0
    %1698 = vmatpush1.bf16.msra.mxu0 0
    %1699 = vmatprep.subr.bf16.mxu0 0
    %1700 = vmatpush1.bf16.msra.mxu0 0
    %1701 = vmatprep.subr.bf16.mxu0 0
    %1702 = vmatpush1.bf16.msra.mxu0 0
    %1703 = vmatprep.subr.bf16.mxu0 0
    %1704 = vmatpush1.bf16.msra.mxu0 0
    %1705 = vmatprep.mubr.bf16.mxu0 0
    %1706 = vmatmul.mubr.bf16.gmra.mrb[0].mxu0 %v1668
    %v1707 = vpop.f32.mrb[0].mxu0
    %v1708 = vadd.f32 0.0, %v1707
    %v1709 = vpop.f32.mrb[0].mxu0
    %v1710 = vpop.f32.mrb[0].mxu0
    %v1711 = vpop.f32.mrb[0].mxu0
    %1712 = vdwg.mxu0
    %1714 = vrot.lane.b32.xlu0 %v450, 96
    %v1715 = vpop.permute.xlu0 %1714
    %v1717 = vsel %vm727, %v1467, 0
    %v1720 = vsel %vm803, %v1715, 0
    %1722 = vmatprep.subr.bf16.mxu0 0
    %1723 = vmatpush1.bf16.msra.mxu0 %v1720
    %1724 = vmatprep.subr.bf16.mxu0 0
    %1725 = vmatpush1.bf16.msra.mxu0 0
    %1726 = vmatprep.subr.bf16.mxu0 0
    %1727 = vmatpush1.bf16.msra.mxu0 0
    %1728 = vmatprep.subr.bf16.mxu0 0
    %1729 = vmatpush1.bf16.msra.mxu0 0
    %1730 = vmatprep.subr.bf16.mxu0 0
    %1731 = vmatpush1.bf16.msra.mxu0 0
    %1732 = vmatprep.subr.bf16.mxu0 0
    %1733 = vmatpush1.bf16.msra.mxu0 0
    %1734 = vmatprep.subr.bf16.mxu0 0
    %1735 = vmatpush1.bf16.msra.mxu0 0
    %1736 = vmatprep.subr.bf16.mxu0 0
    %1737 = vmatpush1.bf16.msra.mxu0 0
    %1738 = vmatprep.subr.bf16.mxu0 0
    %1739 = vmatpush1.bf16.msra.mxu0 0
    %1740 = vmatprep.subr.bf16.mxu0 0
    %1741 = vmatpush1.bf16.msra.mxu0 0
    %1742 = vmatprep.subr.bf16.mxu0 0
    %1743 = vmatpush1.bf16.msra.mxu0 0
    %1744 = vmatprep.subr.bf16.mxu0 0
    %1745 = vmatpush1.bf16.msra.mxu0 0
    %1746 = vmatprep.subr.bf16.mxu0 0
    %1747 = vmatpush1.bf16.msra.mxu0 0
    %1748 = vmatprep.subr.bf16.mxu0 0
    %1749 = vmatpush1.bf16.msra.mxu0 0
    %1750 = vmatprep.subr.bf16.mxu0 0
    %1751 = vmatpush1.bf16.msra.mxu0 0
    %1752 = vmatprep.subr.bf16.mxu0 0
    %1753 = vmatpush1.bf16.msra.mxu0 0
    %1754 = vmatprep.mubr.bf16.mxu0 0
    %1755 = vmatmul.mubr.bf16.gmra.mrb[0].mxu0 %v1717
    %v1756 = vpop.f32.mrb[0].mxu0
    %v1757 = vadd.f32 0.0, %v1756
    %v1758 = vpop.f32.mrb[0].mxu0
    %v1759 = vpop.f32.mrb[0].mxu0
    %v1760 = vpop.f32.mrb[0].mxu0
    %1761 = vdwg.mxu0
    %v1762 = vpack.c.bf16 %v1561, %v1512
    %v1763 = vpack.c.bf16 %v1659, %v1610
    %v1764 = vpack.c.bf16 %v1757, %v1708
    %v1765 = vld [vmem:[#allocation4 + $0x80] sm:$0xf]
    %v1766 = vld [vmem:[#allocation4 + $0x84] sm:$0xf]
    %v1767 = vld [vmem:[#allocation4 + $0x88] sm:$0xf]
    %v1768 = vld [vmem:[#allocation4 + $0x8c] sm:$0xf]
    %v1773 = vunpack.c.l.b16 %v1765
    %v1774 = vunpack.c.l.b16 %v1766
    %v1775 = vunpack.c.l.b16 %v1767
    %v1776 = vunpack.c.l.b16 %v1768
    %v1777 = vpack.c.b16 %v1774, %v1773
    %v1778 = vpack.c.b16 %v1776, %v1775
    %v1782 = vsel %vm220, %v1762, 0
    %v1785 = vsel %vm220, %v1763, 0
    %v1788 = vsel %vm220, %v1764, 0
    %1790 = vmatprep.subr.bf16.mxu0 0
    %1791 = vmatpush1.bf16.msra.mxu0 %v1777
    %1792 = vmatprep.subr.bf16.mxu0 0
    %1793 = vmatpush1.bf16.msra.mxu0 %v1778
    %1794 = vmatprep.subr.bf16.mxu0 0
    %1795 = vmatpush1.bf16.msra.mxu0 0
    %1796 = vmatprep.subr.bf16.mxu0 0
    %1797 = vmatpush1.bf16.msra.mxu0 0
    %1798 = vmatprep.subr.bf16.mxu0 0
    %1799 = vmatpush1.bf16.msra.mxu0 0
    %1800 = vmatprep.subr.bf16.mxu0 0
    %1801 = vmatpush1.bf16.msra.mxu0 0
    %1802 = vmatprep.subr.bf16.mxu0 0
    %1803 = vmatpush1.bf16.msra.mxu0 0
    %1804 = vmatprep.subr.bf16.mxu0 0
    %1805 = vmatpush1.bf16.msra.mxu0 0
    %1806 = vmatprep.subr.bf16.mxu0 0
    %1807 = vmatpush1.bf16.msra.mxu0 0
    %1808 = vmatprep.subr.bf16.mxu0 0
    %1809 = vmatpush1.bf16.msra.mxu0 0
    %1810 = vmatprep.subr.bf16.mxu0 0
    %1811 = vmatpush1.bf16.msra.mxu0 0
    %1812 = vmatprep.subr.bf16.mxu0 0
    %1813 = vmatpush1.bf16.msra.mxu0 0
    %1814 = vmatprep.subr.bf16.mxu0 0
    %1815 = vmatpush1.bf16.msra.mxu0 0
    %1816 = vmatprep.subr.bf16.mxu0 0
    %1817 = vmatpush1.bf16.msra.mxu0 0
    %1818 = vmatprep.subr.bf16.mxu0 0
    %1819 = vmatpush1.bf16.msra.mxu0 0
    %1820 = vmatprep.subr.bf16.mxu0 0
    %1821 = vmatpush1.bf16.msra.mxu0 0
    %1822 = vmatprep.mubr.bf16.mxu0 0
    %1823 = vmatmul.mubr.bf16.gmra.mrb[0].mxu0 %v1782
    %v1824 = vpop.f32.mrb[0].mxu0
    %v1825 = vadd.f32 0.0, %v1824
    %v1826 = vpop.f32.mrb[0].mxu0
    %v1827 = vpop.f32.mrb[0].mxu0
    %v1828 = vadd.f32 0.0, %v1827
    %v1829 = vpop.f32.mrb[0].mxu0
    %1830 = vmatprep.mubr.bf16.mxu0 0
    %1831 = vmatmul.mubr.bf16.gmra.mrb[0].mxu0 %v1785
    %v1832 = vpop.f32.mrb[0].mxu0
    %v1833 = vadd.f32 0.0, %v1832
    %v1834 = vpop.f32.mrb[0].mxu0
    %v1835 = vpop.f32.mrb[0].mxu0
    %v1836 = vadd.f32 0.0, %v1835
    %v1837 = vpop.f32.mrb[0].mxu0
    %1838 = vmatprep.mubr.bf16.mxu0 0
    %1839 = vmatmul.mubr.bf16.gmra.mrb[0].mxu0 %v1788
    %v1840 = vpop.f32.mrb[0].mxu0
    %v1841 = vadd.f32 0.0, %v1840
    %v1842 = vpop.f32.mrb[0].mxu0
    %v1843 = vpop.f32.mrb[0].mxu0
    %v1844 = vadd.f32 0.0, %v1843
    %v1845 = vpop.f32.mrb[0].mxu0
    %1846 = vdwg.mxu0
    %v1851 = vunpack.c.l.b16 %v1080
    %v1852 = vunpack.c.l.b16 %v1081
    %v1853 = vunpack.c.l.b16 %v1082
    %v1854 = vunpack.c.l.b16 %v1083
    %v1855 = vpack.c.b16 %v1852, %v1851
    %v1856 = vpack.c.b16 %v1854, %v1853
    %v1860 = vsel %vm220, %v1077, 0
    %v1863 = vsel %vm220, %v1078, 0
    %v1866 = vsel %vm220, %v1079, 0
    %1868 = vmatprep.subr.bf16.mxu0 0
    %1869 = vmatpush1.bf16.msra.mxu0 %v1855
    %1870 = vmatprep.subr.bf16.mxu0 0
    %1871 = vmatpush1.bf16.msra.mxu0 %v1856
    %1872 = vmatprep.subr.bf16.mxu0 0
    %1873 = vmatpush1.bf16.msra.mxu0 0
    %1874 = vmatprep.subr.bf16.mxu0 0
    %1875 = vmatpush1.bf16.msra.mxu0 0
    %1876 = vmatprep.subr.bf16.mxu0 0
    %1877 = vmatpush1.bf16.msra.mxu0 0
    %1878 = vmatprep.subr.bf16.mxu0 0
    %1879 = vmatpush1.bf16.msra.mxu0 0
    %1880 = vmatprep.subr.bf16.mxu0 0
    %1881 = vmatpush1.bf16.msra.mxu0 0
    %1882 = vmatprep.subr.bf16.mxu0 0
    %1883 = vmatpush1.bf16.msra.mxu0 0
    %1884 = vmatprep.subr.bf16.mxu0 0
    %1885 = vmatpush1.bf16.msra.mxu0 0
    %1886 = vmatprep.subr.bf16.mxu0 0
    %1887 = vmatpush1.bf16.msra.mxu0 0
    %1888 = vmatprep.subr.bf16.mxu0 0
    %1889 = vmatpush1.bf16.msra.mxu0 0
    %1890 = vmatprep.subr.bf16.mxu0 0
    %1891 = vmatpush1.bf16.msra.mxu0 0
    %1892 = vmatprep.subr.bf16.mxu0 0
    %1893 = vmatpush1.bf16.msra.mxu0 0
    %1894 = vmatprep.subr.bf16.mxu0 0
    %1895 = vmatpush1.bf16.msra.mxu0 0
    %1896 = vmatprep.subr.bf16.mxu0 0
    %1897 = vmatpush1.bf16.msra.mxu0 0
    %1898 = vmatprep.subr.bf16.mxu0 0
    %1899 = vmatpush1.bf16.msra.mxu0 0
    %1900 = vmatprep.mubr.bf16.mxu0 0
    %1901 = vmatmul.mubr.bf16.gmra.mrb[0].mxu0 %v1860
    %v1902 = vpop.f32.mrb[0].mxu0
    %v1903 = vadd.f32 %v1825, %v1902
    %v1904 = vpop.f32.mrb[0].mxu0
    %v1905 = vpop.f32.mrb[0].mxu0
    %v1906 = vadd.f32 %v1828, %v1905
    %v1907 = vpop.f32.mrb[0].mxu0
    %1908 = vmatprep.mubr.bf16.mxu0 0
    %1909 = vmatmul.mubr.bf16.gmra.mrb[0].mxu0 %v1863
    %v1910 = vpop.f32.mrb[0].mxu0
    %v1911 = vadd.f32 %v1833, %v1910
    %v1912 = vpop.f32.mrb[0].mxu0
    %v1913 = vpop.f32.mrb[0].mxu0
    %v1914 = vadd.f32 %v1836, %v1913
    %v1915 = vpop.f32.mrb[0].mxu0
    %1916 = vmatprep.mubr.bf16.mxu0 0
    %1917 = vmatmul.mubr.bf16.gmra.mrb[0].mxu0 %v1866
    %v1918 = vpop.f32.mrb[0].mxu0
    %v1919 = vadd.f32 %v1841, %v1918
    %v1920 = vpop.f32.mrb[0].mxu0
    %v1921 = vpop.f32.mrb[0].mxu0
    %v1922 = vadd.f32 %v1844, %v1921
    %v1923 = vpop.f32.mrb[0].mxu0
    %1924 = vdwg.mxu0
    %v1925 = vld [vmem:[#allocation6] sm:$0x1]
    %v1926 = vlaneseq
    %v1927 = vshrl.u32 %v1926, 7
    %v1928 = vsub.s32 0, %v1927
    %v1929 = vrot.slane %v1925, %v1928
    %v1930 = vadd.f32 %v1903, %v1929
    %v1931 = vadd.f32 %v1906, %v1929
    %v1932 = vadd.f32 %v1911, %v1929
    %v1933 = vadd.f32 %v1914, %v1929
    %v1934 = vadd.f32 %v1919, %v1929
    %v1935 = vadd.f32 %v1922, %v1929
    %v1936 = vadd.f32 %v1930, %v179
    %v1937 = vadd.f32 %v1931, %v182
    %v1938 = vadd.f32 %v1932, %v187
    %v1939 = vadd.f32 %v1933, %v190
    %v1940 = vadd.f32 %v1934, %v195
    %v1941 = vadd.f32 %v1935, %v198
    %v1942 = vld [vmem:[#allocation6 + $0x1] sm:$0x1]
    %v1943 = vld [vmem:[#allocation6 + $0x2] sm:$0x1]
    %v1944 = vsel %vm220, %v1936, 0.0
    %1945 = vadd.xlane.f32.xlu0 %v1944
    %v1946 = vpop.xlane.xlu0 %1945
    %v1947 = vsel %vm220, %v1937, 0.0
    %1948 = vadd.xlane.f32.xlu0 %v1947
    %v1949 = vpop.xlane.xlu0 %1948
    %v1950 = vsel %vm220, %v1938, 0.0
    %1951 = vadd.xlane.f32.xlu0 %v1950
    %v1952 = vpop.xlane.xlu0 %1951
    %v1953 = vsel %vm220, %v1939, 0.0
    %1954 = vadd.xlane.f32.xlu0 %v1953
    %v1955 = vpop.xlane.xlu0 %1954
    %v1956 = vsel %vm220, %v1940, 0.0
    %1957 = vadd.xlane.f32.xlu0 %v1956
    %v1958 = vpop.xlane.xlu0 %1957
    %v1959 = vsel %vm220, %v1941, 0.0
    %1960 = vadd.xlane.f32.xlu0 %v1959
    %v1961 = vpop.xlane.xlu0 %1960
    %v1962 = vrcp.pop 32.0
    %v1963 = vmul.f32 %v1946, %v1962
    %v1964 = vmul.f32 %v1949, %v1962
    %v1965 = vmul.f32 %v1952, %v1962
    %v1966 = vmul.f32 %v1955, %v1962
    %v1967 = vmul.f32 %v1958, %v1962
    %v1968 = vmul.f32 %v1961, %v1962
    %v1969 = vsub.f32 %v1936, %v1963
    %v1970 = vsub.f32 %v1937, %v1964
    %v1971 = vsub.f32 %v1938, %v1965
    %v1972 = vsub.f32 %v1939, %v1966
    %v1973 = vsub.f32 %v1940, %v1967
    %v1974 = vsub.f32 %v1941, %v1968
    %v1975 = vmul.f32 %v1969, %v1969
    %v1976 = vmul.f32 %v1970, %v1970
    %v1977 = vmul.f32 %v1971, %v1971
    %v1978 = vmul.f32 %v1972, %v1972
    %v1979 = vmul.f32 %v1973, %v1973
    %v1980 = vmul.f32 %v1974, %v1974
    %v1981 = vsel %vm220, %v1975, 0.0
    %1982 = vadd.xlane.f32.xlu0 %v1981
    %v1983 = vpop.xlane.xlu0 %1982
    %v1984 = vsel %vm220, %v1976, 0.0
    %1985 = vadd.xlane.f32.xlu0 %v1984
    %v1986 = vpop.xlane.xlu0 %1985
    %v1987 = vsel %vm220, %v1977, 0.0
    %1988 = vadd.xlane.f32.xlu0 %v1987
    %v1989 = vpop.xlane.xlu0 %1988
    %v1990 = vsel %vm220, %v1978, 0.0
    %1991 = vadd.xlane.f32.xlu0 %v1990
    %v1992 = vpop.xlane.xlu0 %1991
    %v1993 = vsel %vm220, %v1979, 0.0
    %1994 = vadd.xlane.f32.xlu0 %v1993
    %v1995 = vpop.xlane.xlu0 %1994
    %v1996 = vsel %vm220, %v1980, 0.0
    %1997 = vadd.xlane.f32.xlu0 %v1996
    %v1998 = vpop.xlane.xlu0 %1997
    %v1999 = vmul.f32 %v1983, %v1962
    %v2000 = vmul.f32 %v1986, %v1962
    %v2001 = vmul.f32 %v1989, %v1962
    %v2002 = vmul.f32 %v1992, %v1962
    %v2003 = vmul.f32 %v1995, %v1962
    %v2004 = vmul.f32 %v1998, %v1962
    %v2005 = vadd.f32 %v1999, 1e-05
    %v2006 = vadd.f32 %v2000, 1e-05
    %v2007 = vadd.f32 %v2001, 1e-05
    %v2008 = vadd.f32 %v2002, 1e-05
    %v2009 = vadd.f32 %v2003, 1e-05
    %v2010 = vadd.f32 %v2004, 1e-05
    %v2011 = vrsqrt.pop %v2005
    %v2012 = vrsqrt.pop %v2006
    %v2013 = vrsqrt.pop %v2007
    %v2014 = vrsqrt.pop %v2008
    %v2015 = vrsqrt.pop %v2009
    %v2016 = vrsqrt.pop %v2010
    %v2017 = vmul.f32 %v1969, %v2011
    %v2018 = vmul.f32 %v1970, %v2012
    %v2019 = vmul.f32 %v1971, %v2013
    %v2020 = vmul.f32 %v1972, %v2014
    %v2021 = vmul.f32 %v1973, %v2015
    %v2022 = vmul.f32 %v1974, %v2016
    %v2023 = vlaneseq
    %v2024 = vshrl.u32 %v2023, 7
    %v2025 = vsub.s32 0, %v2024
    %v2026 = vrot.slane %v1942, %v2025
    %v2027 = vmul.f32 %v2017, %v2026
    %v2028 = vmul.f32 %v2018, %v2026
    %v2029 = vmul.f32 %v2019, %v2026
    %v2030 = vmul.f32 %v2020, %v2026
    %v2031 = vmul.f32 %v2021, %v2026
    %v2032 = vmul.f32 %v2022, %v2026
    %v2033 = vlaneseq
    %v2034 = vshrl.u32 %v2033, 7
    %v2035 = vsub.s32 0, %v2034
    %v2036 = vrot.slane %v1943, %v2035
    %v2037 = vadd.f32 %v2027, %v2036
    %v2038 = vadd.f32 %v2028, %v2036
    %v2039 = vadd.f32 %v2029, %v2036
    %v2040 = vadd.f32 %v2030, %v2036
    %v2041 = vadd.f32 %v2031, %v2036
    %v2042 = vadd.f32 %v2032, %v2036
    %v2043 = vpack.c.bf16 %v2038, %v2037
    %v2044 = vpack.c.bf16 %v2040, %v2039
    %v2045 = vpack.c.bf16 %v2042, %v2041
    %v2046 = vld [vmem:[#allocation4 + $0x90] sm:$0xf]
    %v2047 = vld [vmem:[#allocation4 + $0x94] sm:$0xf]
    %v2048 = vld [vmem:[#allocation4 + $0x98] sm:$0xf]
    %v2049 = vld [vmem:[#allocation4 + $0x9c] sm:$0xf]
    %v2050 = vld [vmem:[#allocation6 + $0x3] sm:$0x1]
    %v2051 = vlaneseq
    %v2052 = vshrl.u32 %v2051, 7
    %v2053 = vsub.s32 0, %v2052
    %v2054 = vrot.slane %v2050, %v2053
    %v2059 = vunpack.c.l.b16 %v2046
    %v2060 = vunpack.c.l.b16 %v2047
    %v2061 = vunpack.c.l.b16 %v2048
    %v2062 = vunpack.c.l.b16 %v2049
    %v2063 = vpack.c.b16 %v2060, %v2059
    %v2064 = vpack.c.b16 %v2062, %v2061
    %v2068 = vsel %vm220, %v2043, 0
    %v2071 = vsel %vm220, %v2044, 0
    %v2074 = vsel %vm220, %v2045, 0
    %2076 = vmatprep.subr.bf16.mxu0 0
    %2077 = vmatpush1.bf16.msra.mxu0 %v2063
    %2078 = vmatprep.subr.bf16.mxu0 0
    %2079 = vmatpush1.bf16.msra.mxu0 %v2064
    %2080 = vmatprep.subr.bf16.mxu0 0
    %2081 = vmatpush1.bf16.msra.mxu0 0
    %2082 = vmatprep.subr.bf16.mxu0 0
    %2083 = vmatpush1.bf16.msra.mxu0 0
    %2084 = vmatprep.subr.bf16.mxu0 0
    %2085 = vmatpush1.bf16.msra.mxu0 0
    %2086 = vmatprep.subr.bf16.mxu0 0
    %2087 = vmatpush1.bf16.msra.mxu0 0
    %2088 = vmatprep.subr.bf16.mxu0 0
    %2089 = vmatpush1.bf16.msra.mxu0 0
    %2090 = vmatprep.subr.bf16.mxu0 0
    %2091 = vmatpush1.bf16.msra.mxu0 0
    %2092 = vmatprep.subr.bf16.mxu0 0
    %2093 = vmatpush1.bf16.msra.mxu0 0
    %2094 = vmatprep.subr.bf16.mxu0 0
    %2095 = vmatpush1.bf16.msra.mxu0 0
    %2096 = vmatprep.subr.bf16.mxu0 0
    %2097 = vmatpush1.bf16.msra.mxu0 0
    %2098 = vmatprep.subr.bf16.mxu0 0
    %2099 = vmatpush1.bf16.msra.mxu0 0
    %2100 = vmatprep.subr.bf16.mxu0 0
    %2101 = vmatpush1.bf16.msra.mxu0 0
    %2102 = vmatprep.subr.bf16.mxu0 0
    %2103 = vmatpush1.bf16.msra.mxu0 0
    %2104 = vmatprep.subr.bf16.mxu0 0
    %2105 = vmatpush1.bf16.msra.mxu0 0
    %2106 = vmatprep.subr.bf16.mxu0 0
    %2107 = vmatpush1.bf16.msra.mxu0 0
    %2108 = vmatprep.mubr.bf16.mxu0 0
    %2109 = vmatmul.mubr.bf16.gmra.mrb[0].mxu0 %v2068
    %v2110 = vpop.f32.mrb[0].mxu0
    %v2111 = vadd.f32 %v2054, %v2110
    %v2112 = vpop.f32.mrb[0].mxu0
    %v2113 = vpop.f32.mrb[0].mxu0
    %v2114 = vadd.f32 %v2054, %v2113
    %v2115 = vpop.f32.mrb[0].mxu0
    %2116 = vmatprep.mubr.bf16.mxu0 0
    %2117 = vmatmul.mubr.bf16.gmra.mrb[0].mxu0 %v2071
    %v2118 = vpop.f32.mrb[0].mxu0
    %v2119 = vadd.f32 %v2054, %v2118
    %v2120 = vpop.f32.mrb[0].mxu0
    %v2121 = vpop.f32.mrb[0].mxu0
    %v2122 = vadd.f32 %v2054, %v2121
    %v2123 = vpop.f32.mrb[0].mxu0
    %2124 = vmatprep.mubr.bf16.mxu0 0
    %2125 = vmatmul.mubr.bf16.gmra.mrb[0].mxu0 %v2074
    %v2126 = vpop.f32.mrb[0].mxu0
    %v2127 = vadd.f32 %v2054, %v2126
    %v2128 = vpop.f32.mrb[0].mxu0
    %v2129 = vpop.f32.mrb[0].mxu0
    %v2130 = vadd.f32 %v2054, %v2129
    %v2131 = vpop.f32.mrb[0].mxu0
    %2132 = vdwg.mxu0
    %v2133 = vmax.f32 %v2111, 0.0
    %v2134 = vmax.f32 %v2114, 0.0
    %v2135 = vmax.f32 %v2119, 0.0
    %v2136 = vmax.f32 %v2122, 0.0
    %v2137 = vmax.f32 %v2127, 0.0
    %v2138 = vmax.f32 %v2130, 0.0
    %v2139 = vpack.c.bf16 %v2134, %v2133
    %v2140 = vpack.c.bf16 %v2136, %v2135
    %v2141 = vpack.c.bf16 %v2138, %v2137
    %v2142 = vld [vmem:[#allocation4 + $0xa0] sm:$0xf]
    %v2143 = vld [vmem:[#allocation4 + $0xa4] sm:$0xf]
    %v2144 = vld [vmem:[#allocation4 + $0xa8] sm:$0xf]
    %v2145 = vld [vmem:[#allocation4 + $0xac] sm:$0xf]
    %v2146 = vld [vmem:[#allocation4 + $0xb0] sm:$0xf]
    %v2147 = vld [vmem:[#allocation4 + $0xb4] sm:$0xf]
    %v2148 = vld [vmem:[#allocation4 + $0xb8] sm:$0xf]
    %v2149 = vld [vmem:[#allocation4 + $0xbc] sm:$0xf]
    %v2150 = vld [vmem:[#allocation4 + $0xc0] sm:$0xf]
    %v2151 = vld [vmem:[#allocation4 + $0xc4] sm:$0xf]
    %v2152 = vld [vmem:[#allocation4 + $0xc8] sm:$0xf]
    %v2153 = vld [vmem:[#allocation4 + $0xcc] sm:$0xf]
    %v2154 = vld [vmem:[#allocation4 + $0xd0] sm:$0xf]
    %v2155 = vld [vmem:[#allocation4 + $0xd4] sm:$0xf]
    %v2156 = vld [vmem:[#allocation4 + $0xd8] sm:$0xf]
    %v2157 = vld [vmem:[#allocation4 + $0xdc] sm:$0xf]
    %v2158 = vld [vmem:[#allocation6 + $0x4] sm:$0x1]
    %v2159 = vlaneseq
    %v2160 = vshrl.u32 %v2159, 7
    %v2161 = vsub.s32 0, %v2160
    %v2162 = vrot.slane %v2158, %v2161
    %v2179 = vunpack.c.l.b16 %v2142
    %v2180 = vunpack.c.l.b16 %v2143
    %v2181 = vunpack.c.l.b16 %v2144
    %v2182 = vunpack.c.l.b16 %v2145
    %v2183 = vunpack.c.l.b16 %v2146
    %v2184 = vunpack.c.l.b16 %v2147
    %v2185 = vunpack.c.l.b16 %v2148
    %v2186 = vunpack.c.l.b16 %v2149
    %v2187 = vunpack.c.l.b16 %v2150
    %v2188 = vunpack.c.l.b16 %v2151
    %v2189 = vunpack.c.l.b16 %v2152
    %v2190 = vunpack.c.l.b16 %v2153
    %v2191 = vunpack.c.l.b16 %v2154
    %v2192 = vunpack.c.l.b16 %v2155
    %v2193 = vunpack.c.l.b16 %v2156
    %v2194 = vunpack.c.l.b16 %v2157
    %v2195 = vpack.c.b16 %v2180, %v2179
    %v2196 = vpack.c.b16 %v2182, %v2181
    %v2197 = vpack.c.b16 %v2184, %v2183
    %v2198 = vpack.c.b16 %v2186, %v2185
    %v2199 = vpack.c.b16 %v2188, %v2187
    %v2200 = vpack.c.b16 %v2190, %v2189
    %v2201 = vpack.c.b16 %v2192, %v2191
    %v2202 = vpack.c.b16 %v2194, %v2193
    %2211 = vmatprep.subr.bf16.mxu0 0
    %2212 = vmatpush1.bf16.msra.mxu0 %v2195
    %2213 = vmatprep.subr.bf16.mxu0 0
    %2214 = vmatpush1.bf16.msra.mxu0 %v2196
    %2215 = vmatprep.subr.bf16.mxu0 0
    %2216 = vmatpush1.bf16.msra.mxu0 %v2197
    %2217 = vmatprep.subr.bf16.mxu0 0
    %2218 = vmatpush1.bf16.msra.mxu0 %v2198
    %2219 = vmatprep.subr.bf16.mxu0 0
    %2220 = vmatpush1.bf16.msra.mxu0 %v2199
    %2221 = vmatprep.subr.bf16.mxu0 0
    %2222 = vmatpush1.bf16.msra.mxu0 %v2200
    %2223 = vmatprep.subr.bf16.mxu0 0
    %2224 = vmatpush1.bf16.msra.mxu0 %v2201
    %2225 = vmatprep.subr.bf16.mxu0 0
    %2226 = vmatpush1.bf16.msra.mxu0 %v2202
    %2227 = vmatprep.subr.bf16.mxu0 0
    %2228 = vmatpush1.bf16.msra.mxu0 0
    %2229 = vmatprep.subr.bf16.mxu0 0
    %2230 = vmatpush1.bf16.msra.mxu0 0
    %2231 = vmatprep.subr.bf16.mxu0 0
    %2232 = vmatpush1.bf16.msra.mxu0 0
    %2233 = vmatprep.subr.bf16.mxu0 0
    %2234 = vmatpush1.bf16.msra.mxu0 0
    %2235 = vmatprep.subr.bf16.mxu0 0
    %2236 = vmatpush1.bf16.msra.mxu0 0
    %2237 = vmatprep.subr.bf16.mxu0 0
    %2238 = vmatpush1.bf16.msra.mxu0 0
    %2239 = vmatprep.subr.bf16.mxu0 0
    %2240 = vmatpush1.bf16.msra.mxu0 0
    %2241 = vmatprep.subr.bf16.mxu0 0
    %2242 = vmatpush1.bf16.msra.mxu0 0
    %2243 = vmatprep.mubr.bf16.mxu0 0
    %2244 = vmatmul.mubr.bf16.gmra.mrb[0].mxu0 %v2139
    %v2245 = vpop.f32.mrb[0].mxu0
    %v2246 = vadd.f32 %v2162, %v2245
    %v2247 = vpop.f32.mrb[0].mxu0
    %v2248 = vpop.f32.mrb[0].mxu0
    %v2249 = vadd.f32 %v2162, %v2248
    %v2250 = vpop.f32.mrb[0].mxu0
    %2251 = vmatprep.mubr.bf16.mxu0 0
    %2252 = vmatmul.mubr.bf16.gmra.mrb[0].mxu0 %v2140
    %v2253 = vpop.f32.mrb[0].mxu0
    %v2254 = vadd.f32 %v2162, %v2253
    %v2255 = vpop.f32.mrb[0].mxu0
    %v2256 = vpop.f32.mrb[0].mxu0
    %v2257 = vadd.f32 %v2162, %v2256
    %v2258 = vpop.f32.mrb[0].mxu0
    %2259 = vmatprep.mubr.bf16.mxu0 0
    %2260 = vmatmul.mubr.bf16.gmra.mrb[0].mxu0 %v2141
    %v2261 = vpop.f32.mrb[0].mxu0
    %v2262 = vadd.f32 %v2162, %v2261
    %v2263 = vpop.f32.mrb[0].mxu0
    %v2264 = vpop.f32.mrb[0].mxu0
    %v2265 = vadd.f32 %v2162, %v2264
    %v2266 = vpop.f32.mrb[0].mxu0
    %2267 = vdwg.mxu0
    %v2268 = vadd.f32 %v2246, %v2037
    %v2269 = vadd.f32 %v2249, %v2038
    %v2270 = vadd.f32 %v2254, %v2039
    %v2271 = vadd.f32 %v2257, %v2040
    %v2272 = vadd.f32 %v2262, %v2041
    %v2273 = vadd.f32 %v2265, %v2042
    %v2274 = vld [vmem:[#allocation6 + $0x5] sm:$0x1]
    %v2275 = vld [vmem:[#allocation6 + $0x6] sm:$0x1]
    %v2276 = vsel %vm220, %v2268, 0.0
    %2277 = vadd.xlane.f32.xlu0 %v2276
    %v2278 = vpop.xlane.xlu0 %2277
    %v2279 = vsel %vm220, %v2269, 0.0
    %2280 = vadd.xlane.f32.xlu0 %v2279
    %v2281 = vpop.xlane.xlu0 %2280
    %v2282 = vsel %vm220, %v2270, 0.0
    %2283 = vadd.xlane.f32.xlu0 %v2282
    %v2284 = vpop.xlane.xlu0 %2283
    %v2285 = vsel %vm220, %v2271, 0.0
    %2286 = vadd.xlane.f32.xlu0 %v2285
    %v2287 = vpop.xlane.xlu0 %2286
    %v2288 = vsel %vm220, %v2272, 0.0
    %2289 = vadd.xlane.f32.xlu0 %v2288
    %v2290 = vpop.xlane.xlu0 %2289
    %v2291 = vsel %vm220, %v2273, 0.0
    %2292 = vadd.xlane.f32.xlu0 %v2291
    %v2293 = vpop.xlane.xlu0 %2292
    %v2294 = vmul.f32 %v2278, %v1962
    %v2295 = vmul.f32 %v2281, %v1962
    %v2296 = vmul.f32 %v2284, %v1962
    %v2297 = vmul.f32 %v2287, %v1962
    %v2298 = vmul.f32 %v2290, %v1962
    %v2299 = vmul.f32 %v2293, %v1962
    %v2300 = vsub.f32 %v2268, %v2294
    %v2301 = vsub.f32 %v2269, %v2295
    %v2302 = vsub.f32 %v2270, %v2296
    %v2303 = vsub.f32 %v2271, %v2297
    %v2304 = vsub.f32 %v2272, %v2298
    %v2305 = vsub.f32 %v2273, %v2299
    %v2306 = vmul.f32 %v2300, %v2300
    %v2307 = vmul.f32 %v2301, %v2301
    %v2308 = vmul.f32 %v2302, %v2302
    %v2309 = vmul.f32 %v2303, %v2303
    %v2310 = vmul.f32 %v2304, %v2304
    %v2311 = vmul.f32 %v2305, %v2305
    %v2312 = vsel %vm220, %v2306, 0.0
    %2313 = vadd.xlane.f32.xlu0 %v2312
    %v2314 = vpop.xlane.xlu0 %2313
    %v2315 = vsel %vm220, %v2307, 0.0
    %2316 = vadd.xlane.f32.xlu0 %v2315
    %v2317 = vpop.xlane.xlu0 %2316
    %v2318 = vsel %vm220, %v2308, 0.0
    %2319 = vadd.xlane.f32.xlu0 %v2318
    %v2320 = vpop.xlane.xlu0 %2319
    %v2321 = vsel %vm220, %v2309, 0.0
    %2322 = vadd.xlane.f32.xlu0 %v2321
    %v2323 = vpop.xlane.xlu0 %2322
    %v2324 = vsel %vm220, %v2310, 0.0
    %2325 = vadd.xlane.f32.xlu0 %v2324
    %v2326 = vpop.xlane.xlu0 %2325
    %v2327 = vsel %vm220, %v2311, 0.0
    %2328 = vadd.xlane.f32.xlu0 %v2327
    %v2329 = vpop.xlane.xlu0 %2328
    %v2330 = vmul.f32 %v2314, %v1962
    %v2331 = vmul.f32 %v2317, %v1962
    %v2332 = vmul.f32 %v2320, %v1962
    %v2333 = vmul.f32 %v2323, %v1962
    %v2334 = vmul.f32 %v2326, %v1962
    %v2335 = vmul.f32 %v2329, %v1962
    %v2336 = vadd.f32 %v2330, 1e-05
    %v2337 = vadd.f32 %v2331, 1e-05
    %v2338 = vadd.f32 %v2332, 1e-05
    %v2339 = vadd.f32 %v2333, 1e-05
    %v2340 = vadd.f32 %v2334, 1e-05
    %v2341 = vadd.f32 %v2335, 1e-05
    %v2342 = vrsqrt.pop %v2336
    %v2343 = vrsqrt.pop %v2337
    %v2344 = vrsqrt.pop %v2338
    %v2345 = vrsqrt.pop %v2339
    %v2346 = vrsqrt.pop %v2340
    %v2347 = vrsqrt.pop %v2341
    %v2348 = vmul.f32 %v2300, %v2342
    %v2349 = vmul.f32 %v2301, %v2343
    %v2350 = vmul.f32 %v2302, %v2344
    %v2351 = vmul.f32 %v2303, %v2345
    %v2352 = vmul.f32 %v2304, %v2346
    %v2353 = vmul.f32 %v2305, %v2347
    %v2354 = vlaneseq
    %v2355 = vshrl.u32 %v2354, 7
    %v2356 = vsub.s32 0, %v2355
    %v2357 = vrot.slane %v2274, %v2356
    %v2358 = vmul.f32 %v2348, %v2357
    %v2359 = vmul.f32 %v2349, %v2357
    %v2360 = vmul.f32 %v2350, %v2357
    %v2361 = vmul.f32 %v2351, %v2357
    %v2362 = vmul.f32 %v2352, %v2357
    %v2363 = vmul.f32 %v2353, %v2357
    %v2364 = vlaneseq
    %v2365 = vshrl.u32 %v2364, 7
    %v2366 = vsub.s32 0, %v2365
    %v2367 = vrot.slane %v2275, %v2366
    %v2368 = vadd.f32 %v2358, %v2367
    %v2369 = vadd.f32 %v2359, %v2367
    %v2370 = vadd.f32 %v2360, %v2367
    %v2371 = vadd.f32 %v2361, %v2367
    %v2372 = vadd.f32 %v2362, %v2367
    %v2373 = vadd.f32 %v2363, %v2367
    %v2374 = vpack.c.bf16 %v2369, %v2368
    %v2375 = vpack.c.bf16 %v2371, %v2370
    %v2376 = vpack.c.bf16 %v2373, %v2372
    %v2377 = vld [vmem:[#allocation4 + $0xe0] sm:$0xf]
    %v2378 = vld [vmem:[#allocation4 + $0xe4] sm:$0xf]
    %v2379 = vld [vmem:[#allocation4 + $0xe8] sm:$0xf]
    %v2380 = vld [vmem:[#allocation4 + $0xec] sm:$0xf]
    %v2385 = vunpack.c.l.b16 %v2377
    %v2386 = vunpack.c.l.b16 %v2378
    %v2387 = vunpack.c.l.b16 %v2379
    %v2388 = vunpack.c.l.b16 %v2380
    %v2389 = vpack.c.b16 %v2386, %v2385
    %v2390 = vpack.c.b16 %v2388, %v2387
    %v2394 = vsel %vm220, %v2374, 0
    %v2397 = vsel %vm220, %v2375, 0
    %v2400 = vsel %vm220, %v2376, 0
    %2402 = vmatprep.subr.bf16.mxu0 0
    %2403 = vmatpush1.bf16.msra.mxu0 %v2389
    %2404 = vmatprep.subr.bf16.mxu0 0
    %2405 = vmatpush1.bf16.msra.mxu0 %v2390
    %2406 = vmatprep.subr.bf16.mxu0 0
    %2407 = vmatpush1.bf16.msra.mxu0 0
    %2408 = vmatprep.subr.bf16.mxu0 0
    %2409 = vmatpush1.bf16.msra.mxu0 0
    %2410 = vmatprep.subr.bf16.mxu0 0
    %2411 = vmatpush1.bf16.msra.mxu0 0
    %2412 = vmatprep.subr.bf16.mxu0 0
    %2413 = vmatpush1.bf16.msra.mxu0 0
    %2414 = vmatprep.subr.bf16.mxu0 0
    %2415 = vmatpush1.bf16.msra.mxu0 0
    %2416 = vmatprep.subr.bf16.mxu0 0
    %2417 = vmatpush1.bf16.msra.mxu0 0
    %2418 = vmatprep.subr.bf16.mxu0 0
    %2419 = vmatpush1.bf16.msra.mxu0 0
    %2420 = vmatprep.subr.bf16.mxu0 0
    %2421 = vmatpush1.bf16.msra.mxu0 0
    %2422 = vmatprep.subr.bf16.mxu0 0
    %2423 = vmatpush1.bf16.msra.mxu0 0
    %2424 = vmatprep.subr.bf16.mxu0 0
    %2425 = vmatpush1.bf16.msra.mxu0 0
    %2426 = vmatprep.subr.bf16.mxu0 0
    %2427 = vmatpush1.bf16.msra.mxu0 0
    %2428 = vmatprep.subr.bf16.mxu0 0
    %2429 = vmatpush1.bf16.msra.mxu0 0
    %2430 = vmatprep.subr.bf16.mxu0 0
    %2431 = vmatpush1.bf16.msra.mxu0 0
    %2432 = vmatprep.subr.bf16.mxu0 0
    %2433 = vmatpush1.bf16.msra.mxu0 0
    %2434 = vmatprep.mubr.bf16.mxu0 0
    %2435 = vmatmul.mubr.bf16.gmra.mrb[0].mxu0 %v2394
    %v2436 = vpop.f32.mrb[0].mxu0
    %v2437 = vadd.f32 0.0, %v2436
    %v2438 = vpop.f32.mrb[0].mxu0
    %v2439 = vpop.f32.mrb[0].mxu0
    %v2440 = vadd.f32 0.0, %v2439
    %v2441 = vpop.f32.mrb[0].mxu0
    %2442 = vmatprep.mubr.bf16.mxu0 0
    %2443 = vmatmul.mubr.bf16.gmra.mrb[0].mxu0 %v2397
    %v2444 = vpop.f32.mrb[0].mxu0
    %v2445 = vadd.f32 0.0, %v2444
    %v2446 = vpop.f32.mrb[0].mxu0
    %v2447 = vpop.f32.mrb[0].mxu0
    %v2448 = vadd.f32 0.0, %v2447
    %v2449 = vpop.f32.mrb[0].mxu0
    %2450 = vmatprep.mubr.bf16.mxu0 0
    %2451 = vmatmul.mubr.bf16.gmra.mrb[0].mxu0 %v2400
    %v2452 = vpop.f32.mrb[0].mxu0
    %v2453 = vadd.f32 0.0, %v2452
    %v2454 = vpop.f32.mrb[0].mxu0
    %v2455 = vpop.f32.mrb[0].mxu0
    %v2456 = vadd.f32 0.0, %v2455
    %v2457 = vpop.f32.mrb[0].mxu0
    %2458 = vdwg.mxu0
    %v2459 = vld [vmem:[#allocation4 + $0xf0] sm:$0xf]
    %v2460 = vld [vmem:[#allocation4 + $0xf4] sm:$0xf]
    %v2461 = vld [vmem:[#allocation4 + $0xf8] sm:$0xf]
    %v2462 = vld [vmem:[#allocation4 + $0xfc] sm:$0xf]
    %v2467 = vunpack.c.l.b16 %v2459
    %v2468 = vunpack.c.l.b16 %v2460
    %v2469 = vunpack.c.l.b16 %v2461
    %v2470 = vunpack.c.l.b16 %v2462
    %v2471 = vpack.c.b16 %v2468, %v2467
    %v2472 = vpack.c.b16 %v2470, %v2469
    %2475 = vmatprep.subr.bf16.mxu0 0
    %2476 = vmatpush1.bf16.msra.mxu0 %v2471
    %2477 = vmatprep.subr.bf16.mxu0 0
    %2478 = vmatpush1.bf16.msra.mxu0 %v2472
    %2479 = vmatprep.subr.bf16.mxu0 0
    %2480 = vmatpush1.bf16.msra.mxu0 0
    %2481 = vmatprep.subr.bf16.mxu0 0
    %2482 = vmatpush1.bf16.msra.mxu0 0
    %2483 = vmatprep.subr.bf16.mxu0 0
    %2484 = vmatpush1.bf16.msra.mxu0 0
    %2485 = vmatprep.subr.bf16.mxu0 0
    %2486 = vmatpush1.bf16.msra.mxu0 0
    %2487 = vmatprep.subr.bf16.mxu0 0
    %2488 = vmatpush1.bf16.msra.mxu0 0
    %2489 = vmatprep.subr.bf16.mxu0 0
    %2490 = vmatpush1.bf16.msra.mxu0 0
    %2491 = vmatprep.subr.bf16.mxu0 0
    %2492 = vmatpush1.bf16.msra.mxu0 0
    %2493 = vmatprep.subr.bf16.mxu0 0
    %2494 = vmatpush1.bf16.msra.mxu0 0
    %2495 = vmatprep.subr.bf16.mxu0 0
    %2496 = vmatpush1.bf16.msra.mxu0 0
    %2497 = vmatprep.subr.bf16.mxu0 0
    %2498 = vmatpush1.bf16.msra.mxu0 0
    %2499 = vmatprep.subr.bf16.mxu0 0
    %2500 = vmatpush1.bf16.msra.mxu0 0
    %2501 = vmatprep.subr.bf16.mxu0 0
    %2502 = vmatpush1.bf16.msra.mxu0 0
    %2503 = vmatprep.subr.bf16.mxu0 0
    %2504 = vmatpush1.bf16.msra.mxu0 0
    %2505 = vmatprep.subr.bf16.mxu0 0
    %2506 = vmatpush1.bf16.msra.mxu0 0
    %2507 = vmatprep.mubr.bf16.mxu0 0
    %2508 = vmatmul.mubr.bf16.gmra.mrb[0].mxu0 %v2394
    %v2509 = vpop.f32.mrb[0].mxu0
    %v2510 = vadd.f32 0.0, %v2509
    %v2511 = vpop.f32.mrb[0].mxu0
    %v2512 = vpop.f32.mrb[0].mxu0
    %v2513 = vadd.f32 0.0, %v2512
    %v2514 = vpop.f32.mrb[0].mxu0
    %2515 = vmatprep.mubr.bf16.mxu0 0
    %2516 = vmatmul.mubr.bf16.gmra.mrb[0].mxu0 %v2397
    %v2517 = vpop.f32.mrb[0].mxu0
    %v2518 = vadd.f32 0.0, %v2517
    %v2519 = vpop.f32.mrb[0].mxu0
    %v2520 = vpop.f32.mrb[0].mxu0
    %v2521 = vadd.f32 0.0, %v2520
    %v2522 = vpop.f32.mrb[0].mxu0
    %2523 = vmatprep.mubr.bf16.mxu0 0
    %2524 = vmatmul.mubr.bf16.gmra.mrb[0].mxu0 %v2400
    %v2525 = vpop.f32.mrb[0].mxu0
    %v2526 = vadd.f32 0.0, %v2525
    %v2527 = vpop.f32.mrb[0].mxu0
    %v2528 = vpop.f32.mrb[0].mxu0
    %v2529 = vadd.f32 0.0, %v2528
    %v2530 = vpop.f32.mrb[0].mxu0
    %2531 = vdwg.mxu0
    %v2532 = vld [vmem:[#allocation4 + $0x100] sm:$0xf]
    %v2533 = vld [vmem:[#allocation4 + $0x104] sm:$0xf]
    %v2534 = vld [vmem:[#allocation4 + $0x108] sm:$0xf]
    %v2535 = vld [vmem:[#allocation4 + $0x10c] sm:$0xf]
    %v2540 = vunpack.c.l.b16 %v2532
    %v2541 = vunpack.c.l.b16 %v2533
    %v2542 = vunpack.c.l.b16 %v2534
    %v2543 = vunpack.c.l.b16 %v2535
    %v2544 = vpack.c.b16 %v2541, %v2540
    %v2545 = vpack.c.b16 %v2543, %v2542
    %2548 = vmatprep.subr.bf16.mxu0 0
    %2549 = vmatpush1.bf16.msra.mxu0 %v2544
    %2550 = vmatprep.subr.bf16.mxu0 0
    %2551 = vmatpush1.bf16.msra.mxu0 %v2545
    %2552 = vmatprep.subr.bf16.mxu0 0
    %2553 = vmatpush1.bf16.msra.mxu0 0
    %2554 = vmatprep.subr.bf16.mxu0 0
    %2555 = vmatpush1.bf16.msra.mxu0 0
    %2556 = vmatprep.subr.bf16.mxu0 0
    %2557 = vmatpush1.bf16.msra.mxu0 0
    %2558 = vmatprep.subr.bf16.mxu0 0
    %2559 = vmatpush1.bf16.msra.mxu0 0
    %2560 = vmatprep.subr.bf16.mxu0 0
    %2561 = vmatpush1.bf16.msra.mxu0 0
    %2562 = vmatprep.subr.bf16.mxu0 0
    %2563 = vmatpush1.bf16.msra.mxu0 0
    %2564 = vmatprep.subr.bf16.mxu0 0
    %2565 = vmatpush1.bf16.msra.mxu0 0
    %2566 = vmatprep.subr.bf16.mxu0 0
    %2567 = vmatpush1.bf16.msra.mxu0 0
    %2568 = vmatprep.subr.bf16.mxu0 0
    %2569 = vmatpush1.bf16.msra.mxu0 0
    %2570 = vmatprep.subr.bf16.mxu0 0
    %2571 = vmatpush1.bf16.msra.mxu0 0
    %2572 = vmatprep.subr.bf16.mxu0 0
    %2573 = vmatpush1.bf16.msra.mxu0 0
    %2574 = vmatprep.subr.bf16.mxu0 0
    %2575 = vmatpush1.bf16.msra.mxu0 0
    %2576 = vmatprep.subr.bf16.mxu0 0
    %2577 = vmatpush1.bf16.msra.mxu0 0
    %2578 = vmatprep.subr.bf16.mxu0 0
    %2579 = vmatpush1.bf16.msra.mxu0 0
    %2580 = vmatprep.mubr.bf16.mxu0 0
    %2581 = vmatmul.mubr.bf16.gmra.mrb[0].mxu0 %v2394
    %v2582 = vpop.f32.mrb[0].mxu0
    %v2583 = vadd.f32 0.0, %v2582
    %v2584 = vpop.f32.mrb[0].mxu0
    %v2585 = vpop.f32.mrb[0].mxu0
    %v2586 = vadd.f32 0.0, %v2585
    %v2587 = vpop.f32.mrb[0].mxu0
    %2588 = vmatprep.mubr.bf16.mxu0 0
    %2589 = vmatmul.mubr.bf16.gmra.mrb[0].mxu0 %v2397
    %v2590 = vpop.f32.mrb[0].mxu0
    %v2591 = vadd.f32 0.0, %v2590
    %v2592 = vpop.f32.mrb[0].mxu0
    %v2593 = vpop.f32.mrb[0].mxu0
    %v2594 = vadd.f32 0.0, %v2593
    %v2595 = vpop.f32.mrb[0].mxu0
    %2596 = vmatprep.mubr.bf16.mxu0 0
    %2597 = vmatmul.mubr.bf16.gmra.mrb[0].mxu0 %v2400
    %v2598 = vpop.f32.mrb[0].mxu0
    %v2599 = vadd.f32 0.0, %v2598
    %v2600 = vpop.f32.mrb[0].mxu0
    %v2601 = vpop.f32.mrb[0].mxu0
    %v2602 = vadd.f32 0.0, %v2601
    %v2603 = vpop.f32.mrb[0].mxu0
    %2604 = vdwg.mxu0
    %v2605 = vpack.c.bf16 %v2437, %v2437
    %v2606 = vpack.c.bf16 %v2440, %v2440
    %v2607 = vpack.c.bf16 %v2445, %v2445
    %v2608 = vpack.c.bf16 %v2448, %v2448
    %v2609 = vpack.c.bf16 %v2453, %v2453
    %v2610 = vpack.c.bf16 %v2456, %v2456
    %v2611 = vpack.c.bf16 %v2510, %v2510
    %v2612 = vpack.c.bf16 %v2513, %v2513
    %v2613 = vpack.c.bf16 %v2518, %v2518
    %v2614 = vpack.c.bf16 %v2521, %v2521
    %v2615 = vpack.c.bf16 %v2526, %v2526
    %v2616 = vpack.c.bf16 %v2529, %v2529
    %v2617 = vpack.c.bf16 %v2583, %v2583
    %v2618 = vpack.c.bf16 %v2586, %v2586
    %v2619 = vpack.c.bf16 %v2591, %v2591
    %v2620 = vpack.c.bf16 %v2594, %v2594
    %v2621 = vpack.c.bf16 %v2599, %v2599
    %v2622 = vpack.c.bf16 %v2602, %v2602
    %v2624 = vsel %vm220, %v2605, 0
    %v2627 = vsel %vm220, %v2611, 0
    %2629 = vmatprep.subr.bf16.mxu0 0
    %2630 = vmatpush1.bf16.xpose.msra.mxu0 %v2627
    %2631 = vmatprep.subr.bf16.mxu0 0
    %2632 = vmatpush1.bf16.xpose.msra.mxu0 0
    %2633 = vmatprep.subr.bf16.mxu0 0
    %2634 = vmatpush1.bf16.xpose.msra.mxu0 0
    %2635 = vmatprep.subr.bf16.mxu0 0
    %2636 = vmatpush1.bf16.xpose.msra.mxu0 0
    %2637 = vmatprep.subr.bf16.mxu0 0
    %2638 = vmatpush1.bf16.xpose.msra.mxu0 0
    %2639 = vmatprep.subr.bf16.mxu0 0
    %2640 = vmatpush1.bf16.xpose.msra.mxu0 0
    %2641 = vmatprep.subr.bf16.mxu0 0
    %2642 = vmatpush1.bf16.xpose.msra.mxu0 0
    %2643 = vmatprep.subr.bf16.mxu0 0
    %2644 = vmatpush1.bf16.xpose.msra.mxu0 0
    %2645 = vmatprep.subr.bf16.mxu0 0
    %2646 = vmatpush1.bf16.xpose.msra.mxu0 0
    %2647 = vmatprep.subr.bf16.mxu0 0
    %2648 = vmatpush1.bf16.xpose.msra.mxu0 0
    %2649 = vmatprep.subr.bf16.mxu0 0
    %2650 = vmatpush1.bf16.xpose.msra.mxu0 0
    %2651 = vmatprep.subr.bf16.mxu0 0
    %2652 = vmatpush1.bf16.xpose.msra.mxu0 0
    %2653 = vmatprep.subr.bf16.mxu0 0
    %2654 = vmatpush1.bf16.xpose.msra.mxu0 0
    %2655 = vmatprep.subr.bf16.mxu0 0
    %2656 = vmatpush1.bf16.xpose.msra.mxu0 0
    %2657 = vmatprep.subr.bf16.mxu0 0
    %2658 = vmatpush1.bf16.xpose.msra.mxu0 0
    %2659 = vmatprep.subr.bf16.mxu0 0
    %2660 = vmatpush1.bf16.xpose.msra.mxu0 0
    %2661 = vmatprep.mubr.bf16.mxu0 0
    %2662 = vmatmul.mubr.bf16.gmra.mrb[0].mxu0 %v2624
    %v2663 = vpop.f32.mrb[0].mxu0
    %v2664 = vadd.f32 0.0, %v2663
    %v2665 = vpop.f32.mrb[0].mxu0
    %v2666 = vpop.f32.mrb[0].mxu0
    %v2667 = vpop.f32.mrb[0].mxu0
    %2668 = vdwg.mxu0
    %v2670 = vsel %vm220, %v2606, 0
    %v2673 = vsel %vm220, %v2612, 0
    %2675 = vmatprep.subr.bf16.mxu0 0
    %2676 = vmatpush1.bf16.xpose.msra.mxu0 %v2673
    %2677 = vmatprep.subr.bf16.mxu0 0
    %2678 = vmatpush1.bf16.xpose.msra.mxu0 0
    %2679 = vmatprep.subr.bf16.mxu0 0
    %2680 = vmatpush1.bf16.xpose.msra.mxu0 0
    %2681 = vmatprep.subr.bf16.mxu0 0
    %2682 = vmatpush1.bf16.xpose.msra.mxu0 0
    %2683 = vmatprep.subr.bf16.mxu0 0
    %2684 = vmatpush1.bf16.xpose.msra.mxu0 0
    %2685 = vmatprep.subr.bf16.mxu0 0
    %2686 = vmatpush1.bf16.xpose.msra.mxu0 0
    %2687 = vmatprep.subr.bf16.mxu0 0
    %2688 = vmatpush1.bf16.xpose.msra.mxu0 0
    %2689 = vmatprep.subr.bf16.mxu0 0
    %2690 = vmatpush1.bf16.xpose.msra.mxu0 0
    %2691 = vmatprep.subr.bf16.mxu0 0
    %2692 = vmatpush1.bf16.xpose.msra.mxu0 0
    %2693 = vmatprep.subr.bf16.mxu0 0
    %2694 = vmatpush1.bf16.xpose.msra.mxu0 0
    %2695 = vmatprep.subr.bf16.mxu0 0
    %2696 = vmatpush1.bf16.xpose.msra.mxu0 0
    %2697 = vmatprep.subr.bf16.mxu0 0
    %2698 = vmatpush1.bf16.xpose.msra.mxu0 0
    %2699 = vmatprep.subr.bf16.mxu0 0
    %2700 = vmatpush1.bf16.xpose.msra.mxu0 0
    %2701 = vmatprep.subr.bf16.mxu0 0
    %2702 = vmatpush1.bf16.xpose.msra.mxu0 0
    %2703 = vmatprep.subr.bf16.mxu0 0
    %2704 = vmatpush1.bf16.xpose.msra.mxu0 0
    %2705 = vmatprep.subr.bf16.mxu0 0
    %2706 = vmatpush1.bf16.xpose.msra.mxu0 0
    %2707 = vmatprep.mubr.bf16.mxu0 0
    %2708 = vmatmul.mubr.bf16.gmra.mrb[0].mxu0 %v2670
    %v2709 = vpop.f32.mrb[0].mxu0
    %v2710 = vadd.f32 0.0, %v2709
    %v2711 = vpop.f32.mrb[0].mxu0
    %v2712 = vpop.f32.mrb[0].mxu0
    %v2713 = vpop.f32.mrb[0].mxu0
    %2714 = vdwg.mxu0
    %v2716 = vsel %vm220, %v2607, 0
    %v2719 = vsel %vm220, %v2613, 0
    %2721 = vmatprep.subr.bf16.mxu0 0
    %2722 = vmatpush1.bf16.xpose.msra.mxu0 %v2719
    %2723 = vmatprep.subr.bf16.mxu0 0
    %2724 = vmatpush1.bf16.xpose.msra.mxu0 0
    %2725 = vmatprep.subr.bf16.mxu0 0
    %2726 = vmatpush1.bf16.xpose.msra.mxu0 0
    %2727 = vmatprep.subr.bf16.mxu0 0
    %2728 = vmatpush1.bf16.xpose.msra.mxu0 0
    %2729 = vmatprep.subr.bf16.mxu0 0
    %2730 = vmatpush1.bf16.xpose.msra.mxu0 0
    %2731 = vmatprep.subr.bf16.mxu0 0
    %2732 = vmatpush1.bf16.xpose.msra.mxu0 0
    %2733 = vmatprep.subr.bf16.mxu0 0
    %2734 = vmatpush1.bf16.xpose.msra.mxu0 0
    %2735 = vmatprep.subr.bf16.mxu0 0
    %2736 = vmatpush1.bf16.xpose.msra.mxu0 0
    %2737 = vmatprep.subr.bf16.mxu0 0
    %2738 = vmatpush1.bf16.xpose.msra.mxu0 0
    %2739 = vmatprep.subr.bf16.mxu0 0
    %2740 = vmatpush1.bf16.xpose.msra.mxu0 0
    %2741 = vmatprep.subr.bf16.mxu0 0
    %2742 = vmatpush1.bf16.xpose.msra.mxu0 0
    %2743 = vmatprep.subr.bf16.mxu0 0
    %2744 = vmatpush1.bf16.xpose.msra.mxu0 0
    %2745 = vmatprep.subr.bf16.mxu0 0
    %2746 = vmatpush1.bf16.xpose.msra.mxu0 0
    %2747 = vmatprep.subr.bf16.mxu0 0
    %2748 = vmatpush1.bf16.xpose.msra.mxu0 0
    %2749 = vmatprep.subr.bf16.mxu0 0
    %2750 = vmatpush1.bf16.xpose.msra.mxu0 0
    %2751 = vmatprep.subr.bf16.mxu0 0
    %2752 = vmatpush1.bf16.xpose.msra.mxu0 0
    %2753 = vmatprep.mubr.bf16.mxu0 0
    %2754 = vmatmul.mubr.bf16.gmra.mrb[0].mxu0 %v2716
    %v2755 = vpop.f32.mrb[0].mxu0
    %v2756 = vadd.f32 0.0, %v2755
    %v2757 = vpop.f32.mrb[0].mxu0
    %v2758 = vpop.f32.mrb[0].mxu0
    %v2759 = vpop.f32.mrb[0].mxu0
    %2760 = vdwg.mxu0
    %v2762 = vsel %vm220, %v2608, 0
    %v2765 = vsel %vm220, %v2614, 0
    %2767 = vmatprep.subr.bf16.mxu0 0
    %2768 = vmatpush1.bf16.xpose.msra.mxu0 %v2765
    %2769 = vmatprep.subr.bf16.mxu0 0
    %2770 = vmatpush1.bf16.xpose.msra.mxu0 0
    %2771 = vmatprep.subr.bf16.mxu0 0
    %2772 = vmatpush1.bf16.xpose.msra.mxu0 0
    %2773 = vmatprep.subr.bf16.mxu0 0
    %2774 = vmatpush1.bf16.xpose.msra.mxu0 0
    %2775 = vmatprep.subr.bf16.mxu0 0
    %2776 = vmatpush1.bf16.xpose.msra.mxu0 0
    %2777 = vmatprep.subr.bf16.mxu0 0
    %2778 = vmatpush1.bf16.xpose.msra.mxu0 0
    %2779 = vmatprep.subr.bf16.mxu0 0
    %2780 = vmatpush1.bf16.xpose.msra.mxu0 0
    %2781 = vmatprep.subr.bf16.mxu0 0
    %2782 = vmatpush1.bf16.xpose.msra.mxu0 0
    %2783 = vmatprep.subr.bf16.mxu0 0
    %2784 = vmatpush1.bf16.xpose.msra.mxu0 0
    %2785 = vmatprep.subr.bf16.mxu0 0
    %2786 = vmatpush1.bf16.xpose.msra.mxu0 0
    %2787 = vmatprep.subr.bf16.mxu0 0
    %2788 = vmatpush1.bf16.xpose.msra.mxu0 0
    %2789 = vmatprep.subr.bf16.mxu0 0
    %2790 = vmatpush1.bf16.xpose.msra.mxu0 0
    %2791 = vmatprep.subr.bf16.mxu0 0
    %2792 = vmatpush1.bf16.xpose.msra.mxu0 0
    %2793 = vmatprep.subr.bf16.mxu0 0
    %2794 = vmatpush1.bf16.xpose.msra.mxu0 0
    %2795 = vmatprep.subr.bf16.mxu0 0
    %2796 = vmatpush1.bf16.xpose.msra.mxu0 0
    %2797 = vmatprep.subr.bf16.mxu0 0
    %2798 = vmatpush1.bf16.xpose.msra.mxu0 0
    %2799 = vmatprep.mubr.bf16.mxu0 0
    %2800 = vmatmul.mubr.bf16.gmra.mrb[0].mxu0 %v2762
    %v2801 = vpop.f32.mrb[0].mxu0
    %v2802 = vadd.f32 0.0, %v2801
    %v2803 = vpop.f32.mrb[0].mxu0
    %v2804 = vpop.f32.mrb[0].mxu0
    %v2805 = vpop.f32.mrb[0].mxu0
    %2806 = vdwg.mxu0
    %v2808 = vsel %vm220, %v2609, 0
    %v2811 = vsel %vm220, %v2615, 0
    %2813 = vmatprep.subr.bf16.mxu0 0
    %2814 = vmatpush1.bf16.xpose.msra.mxu0 %v2811
    %2815 = vmatprep.subr.bf16.mxu0 0
    %2816 = vmatpush1.bf16.xpose.msra.mxu0 0
    %2817 = vmatprep.subr.bf16.mxu0 0
    %2818 = vmatpush1.bf16.xpose.msra.mxu0 0
    %2819 = vmatprep.subr.bf16.mxu0 0
    %2820 = vmatpush1.bf16.xpose.msra.mxu0 0
    %2821 = vmatprep.subr.bf16.mxu0 0
    %2822 = vmatpush1.bf16.xpose.msra.mxu0 0
    %2823 = vmatprep.subr.bf16.mxu0 0
    %2824 = vmatpush1.bf16.xpose.msra.mxu0 0
    %2825 = vmatprep.subr.bf16.mxu0 0
    %2826 = vmatpush1.bf16.xpose.msra.mxu0 0
    %2827 = vmatprep.subr.bf16.mxu0 0
    %2828 = vmatpush1.bf16.xpose.msra.mxu0 0
    %2829 = vmatprep.subr.bf16.mxu0 0
    %2830 = vmatpush1.bf16.xpose.msra.mxu0 0
    %2831 = vmatprep.subr.bf16.mxu0 0
    %2832 = vmatpush1.bf16.xpose.msra.mxu0 0
    %2833 = vmatprep.subr.bf16.mxu0 0
    %2834 = vmatpush1.bf16.xpose.msra.mxu0 0
    %2835 = vmatprep.subr.bf16.mxu0 0
    %2836 = vmatpush1.bf16.xpose.msra.mxu0 0
    %2837 = vmatprep.subr.bf16.mxu0 0
    %2838 = vmatpush1.bf16.xpose.msra.mxu0 0
    %2839 = vmatprep.subr.bf16.mxu0 0
    %2840 = vmatpush1.bf16.xpose.msra.mxu0 0
    %2841 = vmatprep.subr.bf16.mxu0 0
    %2842 = vmatpush1.bf16.xpose.msra.mxu0 0
    %2843 = vmatprep.subr.bf16.mxu0 0
    %2844 = vmatpush1.bf16.xpose.msra.mxu0 0
    %2845 = vmatprep.mubr.bf16.mxu0 0
    %2846 = vmatmul.mubr.bf16.gmra.mrb[0].mxu0 %v2808
    %v2847 = vpop.f32.mrb[0].mxu0
    %v2848 = vadd.f32 0.0, %v2847
    %v2849 = vpop.f32.mrb[0].mxu0
    %v2850 = vpop.f32.mrb[0].mxu0
    %v2851 = vpop.f32.mrb[0].mxu0
    %2852 = vdwg.mxu0
    %v2854 = vsel %vm220, %v2610, 0
    %v2857 = vsel %vm220, %v2616, 0
    %2859 = vmatprep.subr.bf16.mxu0 0
    %2860 = vmatpush1.bf16.xpose.msra.mxu0 %v2857
    %2861 = vmatprep.subr.bf16.mxu0 0
    %2862 = vmatpush1.bf16.xpose.msra.mxu0 0
    %2863 = vmatprep.subr.bf16.mxu0 0
    %2864 = vmatpush1.bf16.xpose.msra.mxu0 0
    %2865 = vmatprep.subr.bf16.mxu0 0
    %2866 = vmatpush1.bf16.xpose.msra.mxu0 0
    %2867 = vmatprep.subr.bf16.mxu0 0
    %2868 = vmatpush1.bf16.xpose.msra.mxu0 0
    %2869 = vmatprep.subr.bf16.mxu0 0
    %2870 = vmatpush1.bf16.xpose.msra.mxu0 0
    %2871 = vmatprep.subr.bf16.mxu0 0
    %2872 = vmatpush1.bf16.xpose.msra.mxu0 0
    %2873 = vmatprep.subr.bf16.mxu0 0
    %2874 = vmatpush1.bf16.xpose.msra.mxu0 0
    %2875 = vmatprep.subr.bf16.mxu0 0
    %2876 = vmatpush1.bf16.xpose.msra.mxu0 0
    %2877 = vmatprep.subr.bf16.mxu0 0
    %2878 = vmatpush1.bf16.xpose.msra.mxu0 0
    %2879 = vmatprep.subr.bf16.mxu0 0
    %2880 = vmatpush1.bf16.xpose.msra.mxu0 0
    %2881 = vmatprep.subr.bf16.mxu0 0
    %2882 = vmatpush1.bf16.xpose.msra.mxu0 0
    %2883 = vmatprep.subr.bf16.mxu0 0
    %2884 = vmatpush1.bf16.xpose.msra.mxu0 0
    %2885 = vmatprep.subr.bf16.mxu0 0
    %2886 = vmatpush1.bf16.xpose.msra.mxu0 0
    %2887 = vmatprep.subr.bf16.mxu0 0
    %2888 = vmatpush1.bf16.xpose.msra.mxu0 0
    %2889 = vmatprep.subr.bf16.mxu0 0
    %2890 = vmatpush1.bf16.xpose.msra.mxu0 0
    %2891 = vmatprep.mubr.bf16.mxu0 0
    %2892 = vmatmul.mubr.bf16.gmra.mrb[0].mxu0 %v2854
    %v2893 = vpop.f32.mrb[0].mxu0
    %v2894 = vadd.f32 0.0, %v2893
    %v2895 = vpop.f32.mrb[0].mxu0
    %v2896 = vpop.f32.mrb[0].mxu0
    %v2897 = vpop.f32.mrb[0].mxu0
    %2898 = vdwg.mxu0
    %v2899 = vsel %vm727, %v2664, -inf
    %2900 = vmax.xlane.f32.xlu0 %v2899
    %v2901 = vpop.xlane.xlu0 %2900
    %v2902 = vsel %vm727, %v2710, -inf
    %2903 = vmax.xlane.f32.xlu0 %v2902
    %v2904 = vpop.xlane.xlu0 %2903
    %v2905 = vsel %vm727, %v2756, -inf
    %2906 = vmax.xlane.f32.xlu0 %v2905
    %v2907 = vpop.xlane.xlu0 %2906
    %v2908 = vsel %vm727, %v2802, -inf
    %2909 = vmax.xlane.f32.xlu0 %v2908
    %v2910 = vpop.xlane.xlu0 %2909
    %v2911 = vsel %vm727, %v2848, -inf
    %2912 = vmax.xlane.f32.xlu0 %v2911
    %v2913 = vpop.xlane.xlu0 %2912
    %v2914 = vsel %vm727, %v2894, -inf
    %2915 = vmax.xlane.f32.xlu0 %v2914
    %v2916 = vpop.xlane.xlu0 %2915
    %v2917 = vsub.f32 %v2664, %v2901
    %v2918 = vsub.f32 %v2710, %v2904
    %v2919 = vsub.f32 %v2756, %v2907
    %v2920 = vsub.f32 %v2802, %v2910
    %v2921 = vsub.f32 %v2848, %v2913
    %v2922 = vsub.f32 %v2894, %v2916
    %v2923 = vmul.f32 %v2917, 1.442695
    %v2924 = vpow.pop %v2923
    %v2925 = vmul.f32 %v2918, 1.442695
    %v2926 = vpow.pop %v2925
    %v2927 = vmul.f32 %v2919, 1.442695
    %v2928 = vpow.pop %v2927
    %v2929 = vmul.f32 %v2920, 1.442695
    %v2930 = vpow.pop %v2929
    %v2931 = vmul.f32 %v2921, 1.442695
    %v2932 = vpow.pop %v2931
    %v2933 = vmul.f32 %v2922, 1.442695
    %v2934 = vpow.pop %v2933
    %v2935 = vsel %vm727, %v2924, 0.0
    %2936 = vadd.xlane.f32.xlu0 %v2935
    %v2937 = vpop.xlane.xlu0 %2936
    %v2938 = vsel %vm727, %v2926, 0.0
    %2939 = vadd.xlane.f32.xlu0 %v2938
    %v2940 = vpop.xlane.xlu0 %2939
    %v2941 = vsel %vm727, %v2928, 0.0
    %2942 = vadd.xlane.f32.xlu0 %v2941
    %v2943 = vpop.xlane.xlu0 %2942
    %v2944 = vsel %vm727, %v2930, 0.0
    %2945 = vadd.xlane.f32.xlu0 %v2944
    %v2946 = vpop.xlane.xlu0 %2945
    %v2947 = vsel %vm727, %v2932, 0.0
    %2948 = vadd.xlane.f32.xlu0 %v2947
    %v2949 = vpop.xlane.xlu0 %2948
    %v2950 = vsel %vm727, %v2934, 0.0
    %2951 = vadd.xlane.f32.xlu0 %v2950
    %v2952 = vpop.xlane.xlu0 %2951
    %v2953 = vrcp.pop %v2937
    %v2954 = vrcp.pop %v2940
    %v2955 = vrcp.pop %v2943
    %v2956 = vrcp.pop %v2946
    %v2957 = vrcp.pop %v2949
    %v2958 = vrcp.pop %v2952
    %v2959 = vmul.f32 %v2924, %v2953
    %v2960 = vmul.f32 %v2926, %v2954
    %v2961 = vmul.f32 %v2928, %v2955
    %v2962 = vmul.f32 %v2930, %v2956
    %v2963 = vmul.f32 %v2932, %v2957
    %v2964 = vmul.f32 %v2934, %v2958
    %v2965 = vpack.c.bf16 %v2959, %v2959
    %v2966 = vpack.c.bf16 %v2960, %v2960
    %v2967 = vpack.c.bf16 %v2961, %v2961
    %v2968 = vpack.c.bf16 %v2962, %v2962
    %v2969 = vpack.c.bf16 %v2963, %v2963
    %v2970 = vpack.c.bf16 %v2964, %v2964
    %v2972 = vsel %vm727, %v2965, 0
    %v2975 = vsel %vm803, %v2617, 0
    %2977 = vmatprep.subr.bf16.mxu0 0
    %2978 = vmatpush1.bf16.msra.mxu0 %v2975
    %2979 = vmatprep.subr.bf16.mxu0 0
    %2980 = vmatpush1.bf16.msra.mxu0 0
    %2981 = vmatprep.subr.bf16.mxu0 0
    %2982 = vmatpush1.bf16.msra.mxu0 0
    %2983 = vmatprep.subr.bf16.mxu0 0
    %2984 = vmatpush1.bf16.msra.mxu0 0
    %2985 = vmatprep.subr.bf16.mxu0 0
    %2986 = vmatpush1.bf16.msra.mxu0 0
    %2987 = vmatprep.subr.bf16.mxu0 0
    %2988 = vmatpush1.bf16.msra.mxu0 0
    %2989 = vmatprep.subr.bf16.mxu0 0
    %2990 = vmatpush1.bf16.msra.mxu0 0
    %2991 = vmatprep.subr.bf16.mxu0 0
    %2992 = vmatpush1.bf16.msra.mxu0 0
    %2993 = vmatprep.subr.bf16.mxu0 0
    %2994 = vmatpush1.bf16.msra.mxu0 0
    %2995 = vmatprep.subr.bf16.mxu0 0
    %2996 = vmatpush1.bf16.msra.mxu0 0
    %2997 = vmatprep.subr.bf16.mxu0 0
    %2998 = vmatpush1.bf16.msra.mxu0 0
    %2999 = vmatprep.subr.bf16.mxu0 0
    %3000 = vmatpush1.bf16.msra.mxu0 0
    %3001 = vmatprep.subr.bf16.mxu0 0
    %3002 = vmatpush1.bf16.msra.mxu0 0
    %3003 = vmatprep.subr.bf16.mxu0 0
    %3004 = vmatpush1.bf16.msra.mxu0 0
    %3005 = vmatprep.subr.bf16.mxu0 0
    %3006 = vmatpush1.bf16.msra.mxu0 0
    %3007 = vmatprep.subr.bf16.mxu0 0
    %3008 = vmatpush1.bf16.msra.mxu0 0
    %3009 = vmatprep.mubr.bf16.mxu0 0
    %3010 = vmatmul.mubr.bf16.gmra.mrb[0].mxu0 %v2972
    %v3011 = vpop.f32.mrb[0].mxu0
    %v3012 = vadd.f32 0.0, %v3011
    %v3013 = vpop.f32.mrb[0].mxu0
    %v3014 = vpop.f32.mrb[0].mxu0
    %v3015 = vpop.f32.mrb[0].mxu0
    %3016 = vdwg.mxu0
    %v3018 = vsel %vm727, %v2966, 0
    %v3021 = vsel %vm803, %v2618, 0
    %3023 = vmatprep.subr.bf16.mxu0 0
    %3024 = vmatpush1.bf16.msra.mxu0 %v3021
    %3025 = vmatprep.subr.bf16.mxu0 0
    %3026 = vmatpush1.bf16.msra.mxu0 0
    %3027 = vmatprep.subr.bf16.mxu0 0
    %3028 = vmatpush1.bf16.msra.mxu0 0
    %3029 = vmatprep.subr.bf16.mxu0 0
    %3030 = vmatpush1.bf16.msra.mxu0 0
    %3031 = vmatprep.subr.bf16.mxu0 0
    %3032 = vmatpush1.bf16.msra.mxu0 0
    %3033 = vmatprep.subr.bf16.mxu0 0
    %3034 = vmatpush1.bf16.msra.mxu0 0
    %3035 = vmatprep.subr.bf16.mxu0 0
    %3036 = vmatpush1.bf16.msra.mxu0 0
    %3037 = vmatprep.subr.bf16.mxu0 0
    %3038 = vmatpush1.bf16.msra.mxu0 0
    %3039 = vmatprep.subr.bf16.mxu0 0
    %3040 = vmatpush1.bf16.msra.mxu0 0
    %3041 = vmatprep.subr.bf16.mxu0 0
    %3042 = vmatpush1.bf16.msra.mxu0 0
    %3043 = vmatprep.subr.bf16.mxu0 0
    %3044 = vmatpush1.bf16.msra.mxu0 0
    %3045 = vmatprep.subr.bf16.mxu0 0
    %3046 = vmatpush1.bf16.msra.mxu0 0
    %3047 = vmatprep.subr.bf16.mxu0 0
    %3048 = vmatpush1.bf16.msra.mxu0 0
    %3049 = vmatprep.subr.bf16.mxu0 0
    %3050 = vmatpush1.bf16.msra.mxu0 0
    %3051 = vmatprep.subr.bf16.mxu0 0
    %3052 = vmatpush1.bf16.msra.mxu0 0
    %3053 = vmatprep.subr.bf16.mxu0 0
    %3054 = vmatpush1.bf16.msra.mxu0 0
    %3055 = vmatprep.mubr.bf16.mxu0 0
    %3056 = vmatmul.mubr.bf16.gmra.mrb[0].mxu0 %v3018
    %v3057 = vpop.f32.mrb[0].mxu0
    %v3058 = vadd.f32 0.0, %v3057
    %v3059 = vpop.f32.mrb[0].mxu0
    %v3060 = vpop.f32.mrb[0].mxu0
    %v3061 = vpop.f32.mrb[0].mxu0
    %3062 = vdwg.mxu0
    %v3064 = vsel %vm727, %v2967, 0
    %v3067 = vsel %vm803, %v2619, 0
    %3069 = vmatprep.subr.bf16.mxu0 0
    %3070 = vmatpush1.bf16.msra.mxu0 %v3067
    %3071 = vmatprep.subr.bf16.mxu0 0
    %3072 = vmatpush1.bf16.msra.mxu0 0
    %3073 = vmatprep.subr.bf16.mxu0 0
    %3074 = vmatpush1.bf16.msra.mxu0 0
    %3075 = vmatprep.subr.bf16.mxu0 0
    %3076 = vmatpush1.bf16.msra.mxu0 0
    %3077 = vmatprep.subr.bf16.mxu0 0
    %3078 = vmatpush1.bf16.msra.mxu0 0
    %3079 = vmatprep.subr.bf16.mxu0 0
    %3080 = vmatpush1.bf16.msra.mxu0 0
    %3081 = vmatprep.subr.bf16.mxu0 0
    %3082 = vmatpush1.bf16.msra.mxu0 0
    %3083 = vmatprep.subr.bf16.mxu0 0
    %3084 = vmatpush1.bf16.msra.mxu0 0
    %3085 = vmatprep.subr.bf16.mxu0 0
    %3086 = vmatpush1.bf16.msra.mxu0 0
    %3087 = vmatprep.subr.bf16.mxu0 0
    %3088 = vmatpush1.bf16.msra.mxu0 0
    %3089 = vmatprep.subr.bf16.mxu0 0
    %3090 = vmatpush1.bf16.msra.mxu0 0
    %3091 = vmatprep.subr.bf16.mxu0 0
    %3092 = vmatpush1.bf16.msra.mxu0 0
    %3093 = vmatprep.subr.bf16.mxu0 0
    %3094 = vmatpush1.bf16.msra.mxu0 0
    %3095 = vmatprep.subr.bf16.mxu0 0
    %3096 = vmatpush1.bf16.msra.mxu0 0
    %3097 = vmatprep.subr.bf16.mxu0 0
    %3098 = vmatpush1.bf16.msra.mxu0 0
    %3099 = vmatprep.subr.bf16.mxu0 0
    %3100 = vmatpush1.bf16.msra.mxu0 0
    %3101 = vmatprep.mubr.bf16.mxu0 0
    %3102 = vmatmul.mubr.bf16.gmra.mrb[0].mxu0 %v3064
    %v3103 = vpop.f32.mrb[0].mxu0
    %v3104 = vadd.f32 0.0, %v3103
    %v3105 = vpop.f32.mrb[0].mxu0
    %v3106 = vpop.f32.mrb[0].mxu0
    %v3107 = vpop.f32.mrb[0].mxu0
    %3108 = vdwg.mxu0
    %v3110 = vsel %vm727, %v2968, 0
    %v3113 = vsel %vm803, %v2620, 0
    %3115 = vmatprep.subr.bf16.mxu0 0
    %3116 = vmatpush1.bf16.msra.mxu0 %v3113
    %3117 = vmatprep.subr.bf16.mxu0 0
    %3118 = vmatpush1.bf16.msra.mxu0 0
    %3119 = vmatprep.subr.bf16.mxu0 0
    %3120 = vmatpush1.bf16.msra.mxu0 0
    %3121 = vmatprep.subr.bf16.mxu0 0
    %3122 = vmatpush1.bf16.msra.mxu0 0
    %3123 = vmatprep.subr.bf16.mxu0 0
    %3124 = vmatpush1.bf16.msra.mxu0 0
    %3125 = vmatprep.subr.bf16.mxu0 0
    %3126 = vmatpush1.bf16.msra.mxu0 0
    %3127 = vmatprep.subr.bf16.mxu0 0
    %3128 = vmatpush1.bf16.msra.mxu0 0
    %3129 = vmatprep.subr.bf16.mxu0 0
    %3130 = vmatpush1.bf16.msra.mxu0 0
    %3131 = vmatprep.subr.bf16.mxu0 0
    %3132 = vmatpush1.bf16.msra.mxu0 0
    %3133 = vmatprep.subr.bf16.mxu0 0
    %3134 = vmatpush1.bf16.msra.mxu0 0
    %3135 = vmatprep.subr.bf16.mxu0 0
    %3136 = vmatpush1.bf16.msra.mxu0 0
    %3137 = vmatprep.subr.bf16.mxu0 0
    %3138 = vmatpush1.bf16.msra.mxu0 0
    %3139 = vmatprep.subr.bf16.mxu0 0
    %3140 = vmatpush1.bf16.msra.mxu0 0
    %3141 = vmatprep.subr.bf16.mxu0 0
    %3142 = vmatpush1.bf16.msra.mxu0 0
    %3143 = vmatprep.subr.bf16.mxu0 0
    %3144 = vmatpush1.bf16.msra.mxu0 0
    %3145 = vmatprep.subr.bf16.mxu0 0
    %3146 = vmatpush1.bf16.msra.mxu0 0
    %3147 = vmatprep.mubr.bf16.mxu0 0
    %3148 = vmatmul.mubr.bf16.gmra.mrb[0].mxu0 %v3110
    %v3149 = vpop.f32.mrb[0].mxu0
    %v3150 = vadd.f32 0.0, %v3149
    %v3151 = vpop.f32.mrb[0].mxu0
    %v3152 = vpop.f32.mrb[0].mxu0
    %v3153 = vpop.f32.mrb[0].mxu0
    %3154 = vdwg.mxu0
    %v3156 = vsel %vm727, %v2969, 0
    %v3159 = vsel %vm803, %v2621, 0
    %3161 = vmatprep.subr.bf16.mxu0 0
    %3162 = vmatpush1.bf16.msra.mxu0 %v3159
    %3163 = vmatprep.subr.bf16.mxu0 0
    %3164 = vmatpush1.bf16.msra.mxu0 0
    %3165 = vmatprep.subr.bf16.mxu0 0
    %3166 = vmatpush1.bf16.msra.mxu0 0
    %3167 = vmatprep.subr.bf16.mxu0 0
    %3168 = vmatpush1.bf16.msra.mxu0 0
    %3169 = vmatprep.subr.bf16.mxu0 0
    %3170 = vmatpush1.bf16.msra.mxu0 0
    %3171 = vmatprep.subr.bf16.mxu0 0
    %3172 = vmatpush1.bf16.msra.mxu0 0
    %3173 = vmatprep.subr.bf16.mxu0 0
    %3174 = vmatpush1.bf16.msra.mxu0 0
    %3175 = vmatprep.subr.bf16.mxu0 0
    %3176 = vmatpush1.bf16.msra.mxu0 0
    %3177 = vmatprep.subr.bf16.mxu0 0
    %3178 = vmatpush1.bf16.msra.mxu0 0
    %3179 = vmatprep.subr.bf16.mxu0 0
    %3180 = vmatpush1.bf16.msra.mxu0 0
    %3181 = vmatprep.subr.bf16.mxu0 0
    %3182 = vmatpush1.bf16.msra.mxu0 0
    %3183 = vmatprep.subr.bf16.mxu0 0
    %3184 = vmatpush1.bf16.msra.mxu0 0
    %3185 = vmatprep.subr.bf16.mxu0 0
    %3186 = vmatpush1.bf16.msra.mxu0 0
    %3187 = vmatprep.subr.bf16.mxu0 0
    %3188 = vmatpush1.bf16.msra.mxu0 0
    %3189 = vmatprep.subr.bf16.mxu0 0
    %3190 = vmatpush1.bf16.msra.mxu0 0
    %3191 = vmatprep.subr.bf16.mxu0 0
    %3192 = vmatpush1.bf16.msra.mxu0 0
    %3193 = vmatprep.mubr.bf16.mxu0 0
    %3194 = vmatmul.mubr.bf16.gmra.mrb[0].mxu0 %v3156
    %v3195 = vpop.f32.mrb[0].mxu0
    %v3196 = vadd.f32 0.0, %v3195
    %v3197 = vpop.f32.mrb[0].mxu0
    %v3198 = vpop.f32.mrb[0].mxu0
    %v3199 = vpop.f32.mrb[0].mxu0
    %3200 = vdwg.mxu0
    %v3202 = vsel %vm727, %v2970, 0
    %v3205 = vsel %vm803, %v2622, 0
    %3207 = vmatprep.subr.bf16.mxu0 0
    %3208 = vmatpush1.bf16.msra.mxu0 %v3205
    %3209 = vmatprep.subr.bf16.mxu0 0
    %3210 = vmatpush1.bf16.msra.mxu0 0
    %3211 = vmatprep.subr.bf16.mxu0 0
    %3212 = vmatpush1.bf16.msra.mxu0 0
    %3213 = vmatprep.subr.bf16.mxu0 0
    %3214 = vmatpush1.bf16.msra.mxu0 0
    %3215 = vmatprep.subr.bf16.mxu0 0
    %3216 = vmatpush1.bf16.msra.mxu0 0
    %3217 = vmatprep.subr.bf16.mxu0 0
    %3218 = vmatpush1.bf16.msra.mxu0 0
    %3219 = vmatprep.subr.bf16.mxu0 0
    %3220 = vmatpush1.bf16.msra.mxu0 0
    %3221 = vmatprep.subr.bf16.mxu0 0
    %3222 = vmatpush1.bf16.msra.mxu0 0
    %3223 = vmatprep.subr.bf16.mxu0 0
    %3224 = vmatpush1.bf16.msra.mxu0 0
    %3225 = vmatprep.subr.bf16.mxu0 0
    %3226 = vmatpush1.bf16.msra.mxu0 0
    %3227 = vmatprep.subr.bf16.mxu0 0
    %3228 = vmatpush1.bf16.msra.mxu0 0
    %3229 = vmatprep.subr.bf16.mxu0 0
    %3230 = vmatpush1.bf16.msra.mxu0 0
    %3231 = vmatprep.subr.bf16.mxu0 0
    %3232 = vmatpush1.bf16.msra.mxu0 0
    %3233 = vmatprep.subr.bf16.mxu0 0
    %3234 = vmatpush1.bf16.msra.mxu0 0
    %3235 = vmatprep.subr.bf16.mxu0 0
    %3236 = vmatpush1.bf16.msra.mxu0 0
    %3237 = vmatprep.subr.bf16.mxu0 0
    %3238 = vmatpush1.bf16.msra.mxu0 0
    %3239 = vmatprep.mubr.bf16.mxu0 0
    %3240 = vmatmul.mubr.bf16.gmra.mrb[0].mxu0 %v3202
    %v3241 = vpop.f32.mrb[0].mxu0
    %v3242 = vadd.f32 0.0, %v3241
    %v3243 = vpop.f32.mrb[0].mxu0
    %v3244 = vpop.f32.mrb[0].mxu0
    %v3245 = vpop.f32.mrb[0].mxu0
    %3246 = vdwg.mxu0
    %v3247 = vpack.c.bf16 %v3058, %v3012
    %v3248 = vpack.c.bf16 %v3150, %v3104
    %v3249 = vpack.c.bf16 %v3242, %v3196
    %v3250 = vld [vmem:[#allocation4 + $0x110] sm:$0xf]
    %v3251 = vld [vmem:[#allocation4 + $0x114] sm:$0xf]
    %v3252 = vld [vmem:[#allocation4 + $0x118] sm:$0xf]
    %v3253 = vld [vmem:[#allocation4 + $0x11c] sm:$0xf]
    %3255 = vrot.lane.b32.xlu0 %v2605, 96
    %v3256 = vpop.permute.xlu0 %3255
    %3258 = vrot.lane.b32.xlu0 %v2611, 96
    %v3259 = vpop.permute.xlu0 %3258
    %v3261 = vsel %vm220, %v3256, 0
    %v3264 = vsel %vm220, %v3259, 0
    %3266 = vmatprep.subr.bf16.mxu0 0
    %3267 = vmatpush1.bf16.xpose.msra.mxu0 %v3264
    %3268 = vmatprep.subr.bf16.mxu0 0
    %3269 = vmatpush1.bf16.xpose.msra.mxu0 0
    %3270 = vmatprep.subr.bf16.mxu0 0
    %3271 = vmatpush1.bf16.xpose.msra.mxu0 0
    %3272 = vmatprep.subr.bf16.mxu0 0
    %3273 = vmatpush1.bf16.xpose.msra.mxu0 0
    %3274 = vmatprep.subr.bf16.mxu0 0
    %3275 = vmatpush1.bf16.xpose.msra.mxu0 0
    %3276 = vmatprep.subr.bf16.mxu0 0
    %3277 = vmatpush1.bf16.xpose.msra.mxu0 0
    %3278 = vmatprep.subr.bf16.mxu0 0
    %3279 = vmatpush1.bf16.xpose.msra.mxu0 0
    %3280 = vmatprep.subr.bf16.mxu0 0
    %3281 = vmatpush1.bf16.xpose.msra.mxu0 0
    %3282 = vmatprep.subr.bf16.mxu0 0
    %3283 = vmatpush1.bf16.xpose.msra.mxu0 0
    %3284 = vmatprep.subr.bf16.mxu0 0
    %3285 = vmatpush1.bf16.xpose.msra.mxu0 0
    %3286 = vmatprep.subr.bf16.mxu0 0
    %3287 = vmatpush1.bf16.xpose.msra.mxu0 0
    %3288 = vmatprep.subr.bf16.mxu0 0
    %3289 = vmatpush1.bf16.xpose.msra.mxu0 0
    %3290 = vmatprep.subr.bf16.mxu0 0
    %3291 = vmatpush1.bf16.xpose.msra.mxu0 0
    %3292 = vmatprep.subr.bf16.mxu0 0
    %3293 = vmatpush1.bf16.xpose.msra.mxu0 0
    %3294 = vmatprep.subr.bf16.mxu0 0
    %3295 = vmatpush1.bf16.xpose.msra.mxu0 0
    %3296 = vmatprep.subr.bf16.mxu0 0
    %3297 = vmatpush1.bf16.xpose.msra.mxu0 0
    %3298 = vmatprep.mubr.bf16.mxu0 0
    %3299 = vmatmul.mubr.bf16.gmra.mrb[0].mxu0 %v3261
    %v3300 = vpop.f32.mrb[0].mxu0
    %v3301 = vadd.f32 0.0, %v3300
    %v3302 = vpop.f32.mrb[0].mxu0
    %v3303 = vpop.f32.mrb[0].mxu0
    %v3304 = vpop.f32.mrb[0].mxu0
    %3305 = vdwg.mxu0
    %3307 = vrot.lane.b32.xlu0 %v2606, 96
    %v3308 = vpop.permute.xlu0 %3307
    %3310 = vrot.lane.b32.xlu0 %v2612, 96
    %v3311 = vpop.permute.xlu0 %3310
    %v3313 = vsel %vm220, %v3308, 0
    %v3316 = vsel %vm220, %v3311, 0
    %3318 = vmatprep.subr.bf16.mxu0 0
    %3319 = vmatpush1.bf16.xpose.msra.mxu0 %v3316
    %3320 = vmatprep.subr.bf16.mxu0 0
    %3321 = vmatpush1.bf16.xpose.msra.mxu0 0
    %3322 = vmatprep.subr.bf16.mxu0 0
    %3323 = vmatpush1.bf16.xpose.msra.mxu0 0
    %3324 = vmatprep.subr.bf16.mxu0 0
    %3325 = vmatpush1.bf16.xpose.msra.mxu0 0
    %3326 = vmatprep.subr.bf16.mxu0 0
    %3327 = vmatpush1.bf16.xpose.msra.mxu0 0
    %3328 = vmatprep.subr.bf16.mxu0 0
    %3329 = vmatpush1.bf16.xpose.msra.mxu0 0
    %3330 = vmatprep.subr.bf16.mxu0 0
    %3331 = vmatpush1.bf16.xpose.msra.mxu0 0
    %3332 = vmatprep.subr.bf16.mxu0 0
    %3333 = vmatpush1.bf16.xpose.msra.mxu0 0
    %3334 = vmatprep.subr.bf16.mxu0 0
    %3335 = vmatpush1.bf16.xpose.msra.mxu0 0
    %3336 = vmatprep.subr.bf16.mxu0 0
    %3337 = vmatpush1.bf16.xpose.msra.mxu0 0
    %3338 = vmatprep.subr.bf16.mxu0 0
    %3339 = vmatpush1.bf16.xpose.msra.mxu0 0
    %3340 = vmatprep.subr.bf16.mxu0 0
    %3341 = vmatpush1.bf16.xpose.msra.mxu0 0
    %3342 = vmatprep.subr.bf16.mxu0 0
    %3343 = vmatpush1.bf16.xpose.msra.mxu0 0
    %3344 = vmatprep.subr.bf16.mxu0 0
    %3345 = vmatpush1.bf16.xpose.msra.mxu0 0
    %3346 = vmatprep.subr.bf16.mxu0 0
    %3347 = vmatpush1.bf16.xpose.msra.mxu0 0
    %3348 = vmatprep.subr.bf16.mxu0 0
    %3349 = vmatpush1.bf16.xpose.msra.mxu0 0
    %3350 = vmatprep.mubr.bf16.mxu0 0
    %3351 = vmatmul.mubr.bf16.gmra.mrb[0].mxu0 %v3313
    %v3352 = vpop.f32.mrb[0].mxu0
    %v3353 = vadd.f32 0.0, %v3352
    %v3354 = vpop.f32.mrb[0].mxu0
    %v3355 = vpop.f32.mrb[0].mxu0
    %v3356 = vpop.f32.mrb[0].mxu0
    %3357 = vdwg.mxu0
    %3359 = vrot.lane.b32.xlu0 %v2607, 96
    %v3360 = vpop.permute.xlu0 %3359
    %3362 = vrot.lane.b32.xlu0 %v2613, 96
    %v3363 = vpop.permute.xlu0 %3362
    %v3365 = vsel %vm220, %v3360, 0
    %v3368 = vsel %vm220, %v3363, 0
    %3370 = vmatprep.subr.bf16.mxu0 0
    %3371 = vmatpush1.bf16.xpose.msra.mxu0 %v3368
    %3372 = vmatprep.subr.bf16.mxu0 0
    %3373 = vmatpush1.bf16.xpose.msra.mxu0 0
    %3374 = vmatprep.subr.bf16.mxu0 0
    %3375 = vmatpush1.bf16.xpose.msra.mxu0 0
    %3376 = vmatprep.subr.bf16.mxu0 0
    %3377 = vmatpush1.bf16.xpose.msra.mxu0 0
    %3378 = vmatprep.subr.bf16.mxu0 0
    %3379 = vmatpush1.bf16.xpose.msra.mxu0 0
    %3380 = vmatprep.subr.bf16.mxu0 0
    %3381 = vmatpush1.bf16.xpose.msra.mxu0 0
    %3382 = vmatprep.subr.bf16.mxu0 0
    %3383 = vmatpush1.bf16.xpose.msra.mxu0 0
    %3384 = vmatprep.subr.bf16.mxu0 0
    %3385 = vmatpush1.bf16.xpose.msra.mxu0 0
    %3386 = vmatprep.subr.bf16.mxu0 0
    %3387 = vmatpush1.bf16.xpose.msra.mxu0 0
    %3388 = vmatprep.subr.bf16.mxu0 0
    %3389 = vmatpush1.bf16.xpose.msra.mxu0 0
    %3390 = vmatprep.subr.bf16.mxu0 0
    %3391 = vmatpush1.bf16.xpose.msra.mxu0 0
    %3392 = vmatprep.subr.bf16.mxu0 0
    %3393 = vmatpush1.bf16.xpose.msra.mxu0 0
    %3394 = vmatprep.subr.bf16.mxu0 0
    %3395 = vmatpush1.bf16.xpose.msra.mxu0 0
    %3396 = vmatprep.subr.bf16.mxu0 0
    %3397 = vmatpush1.bf16.xpose.msra.mxu0 0
    %3398 = vmatprep.subr.bf16.mxu0 0
    %3399 = vmatpush1.bf16.xpose.msra.mxu0 0
    %3400 = vmatprep.subr.bf16.mxu0 0
    %3401 = vmatpush1.bf16.xpose.msra.mxu0 0
    %3402 = vmatprep.mubr.bf16.mxu0 0
    %3403 = vmatmul.mubr.bf16.gmra.mrb[0].mxu0 %v3365
    %v3404 = vpop.f32.mrb[0].mxu0
    %v3405 = vadd.f32 0.0, %v3404
    %v3406 = vpop.f32.mrb[0].mxu0
    %v3407 = vpop.f32.mrb[0].mxu0
    %v3408 = vpop.f32.mrb[0].mxu0
    %3409 = vdwg.mxu0
    %3411 = vrot.lane.b32.xlu0 %v2608, 96
    %v3412 = vpop.permute.xlu0 %3411
    %3414 = vrot.lane.b32.xlu0 %v2614, 96
    %v3415 = vpop.permute.xlu0 %3414
    %v3417 = vsel %vm220, %v3412, 0
    %v3420 = vsel %vm220, %v3415, 0
    %3422 = vmatprep.subr.bf16.mxu0 0
    %3423 = vmatpush1.bf16.xpose.msra.mxu0 %v3420
    %3424 = vmatprep.subr.bf16.mxu0 0
    %3425 = vmatpush1.bf16.xpose.msra.mxu0 0
    %3426 = vmatprep.subr.bf16.mxu0 0
    %3427 = vmatpush1.bf16.xpose.msra.mxu0 0
    %3428 = vmatprep.subr.bf16.mxu0 0
    %3429 = vmatpush1.bf16.xpose.msra.mxu0 0
    %3430 = vmatprep.subr.bf16.mxu0 0
    %3431 = vmatpush1.bf16.xpose.msra.mxu0 0
    %3432 = vmatprep.subr.bf16.mxu0 0
    %3433 = vmatpush1.bf16.xpose.msra.mxu0 0
    %3434 = vmatprep.subr.bf16.mxu0 0
    %3435 = vmatpush1.bf16.xpose.msra.mxu0 0
    %3436 = vmatprep.subr.bf16.mxu0 0
    %3437 = vmatpush1.bf16.xpose.msra.mxu0 0
    %3438 = vmatprep.subr.bf16.mxu0 0
    %3439 = vmatpush1.bf16.xpose.msra.mxu0 0
    %3440 = vmatprep.subr.bf16.mxu0 0
    %3441 = vmatpush1.bf16.xpose.msra.mxu0 0
    %3442 = vmatprep.subr.bf16.mxu0 0
    %3443 = vmatpush1.bf16.xpose.msra.mxu0 0
    %3444 = vmatprep.subr.bf16.mxu0 0
    %3445 = vmatpush1.bf16.xpose.msra.mxu0 0
    %3446 = vmatprep.subr.bf16.mxu0 0
    %3447 = vmatpush1.bf16.xpose.msra.mxu0 0
    %3448 = vmatprep.subr.bf16.mxu0 0
    %3449 = vmatpush1.bf16.xpose.msra.mxu0 0
    %3450 = vmatprep.subr.bf16.mxu0 0
    %3451 = vmatpush1.bf16.xpose.msra.mxu0 0
    %3452 = vmatprep.subr.bf16.mxu0 0
    %3453 = vmatpush1.bf16.xpose.msra.mxu0 0
    %3454 = vmatprep.mubr.bf16.mxu0 0
    %3455 = vmatmul.mubr.bf16.gmra.mrb[0].mxu0 %v3417
    %v3456 = vpop.f32.mrb[0].mxu0
    %v3457 = vadd.f32 0.0, %v3456
    %v3458 = vpop.f32.mrb[0].mxu0
    %v3459 = vpop.f32.mrb[0].mxu0
    %v3460 = vpop.f32.mrb[0].mxu0
    %3461 = vdwg.mxu0
    %3463 = vrot.lane.b32.xlu0 %v2609, 96
    %v3464 = vpop.permute.xlu0 %3463
    %3466 = vrot.lane.b32.xlu0 %v2615, 96
    %v3467 = vpop.permute.xlu0 %3466
    %v3469 = vsel %vm220, %v3464, 0
    %v3472 = vsel %vm220, %v3467, 0
    %3474 = vmatprep.subr.bf16.mxu0 0
    %3475 = vmatpush1.bf16.xpose.msra.mxu0 %v3472
    %3476 = vmatprep.subr.bf16.mxu0 0
    %3477 = vmatpush1.bf16.xpose.msra.mxu0 0
    %3478 = vmatprep.subr.bf16.mxu0 0
    %3479 = vmatpush1.bf16.xpose.msra.mxu0 0
    %3480 = vmatprep.subr.bf16.mxu0 0
    %3481 = vmatpush1.bf16.xpose.msra.mxu0 0
    %3482 = vmatprep.subr.bf16.mxu0 0
    %3483 = vmatpush1.bf16.xpose.msra.mxu0 0
    %3484 = vmatprep.subr.bf16.mxu0 0
    %3485 = vmatpush1.bf16.xpose.msra.mxu0 0
    %3486 = vmatprep.subr.bf16.mxu0 0
    %3487 = vmatpush1.bf16.xpose.msra.mxu0 0
    %3488 = vmatprep.subr.bf16.mxu0 0
    %3489 = vmatpush1.bf16.xpose.msra.mxu0 0
    %3490 = vmatprep.subr.bf16.mxu0 0
    %3491 = vmatpush1.bf16.xpose.msra.mxu0 0
    %3492 = vmatprep.subr.bf16.mxu0 0
    %3493 = vmatpush1.bf16.xpose.msra.mxu0 0
    %3494 = vmatprep.subr.bf16.mxu0 0
    %3495 = vmatpush1.bf16.xpose.msra.mxu0 0
    %3496 = vmatprep.subr.bf16.mxu0 0
    %3497 = vmatpush1.bf16.xpose.msra.mxu0 0
    %3498 = vmatprep.subr.bf16.mxu0 0
    %3499 = vmatpush1.bf16.xpose.msra.mxu0 0
    %3500 = vmatprep.subr.bf16.mxu0 0
    %3501 = vmatpush1.bf16.xpose.msra.mxu0 0
    %3502 = vmatprep.subr.bf16.mxu0 0
    %3503 = vmatpush1.bf16.xpose.msra.mxu0 0
    %3504 = vmatprep.subr.bf16.mxu0 0
    %3505 = vmatpush1.bf16.xpose.msra.mxu0 0
    %3506 = vmatprep.mubr.bf16.mxu0 0
    %3507 = vmatmul.mubr.bf16.gmra.mrb[0].mxu0 %v3469
    %v3508 = vpop.f32.mrb[0].mxu0
    %v3509 = vadd.f32 0.0, %v3508
    %v3510 = vpop.f32.mrb[0].mxu0
    %v3511 = vpop.f32.mrb[0].mxu0
    %v3512 = vpop.f32.mrb[0].mxu0
    %3513 = vdwg.mxu0
    %3515 = vrot.lane.b32.xlu0 %v2610, 96
    %v3516 = vpop.permute.xlu0 %3515
    %3518 = vrot.lane.b32.xlu0 %v2616, 96
    %v3519 = vpop.permute.xlu0 %3518
    %v3521 = vsel %vm220, %v3516, 0
    %v3524 = vsel %vm220, %v3519, 0
    %3526 = vmatprep.subr.bf16.mxu0 0
    %3527 = vmatpush1.bf16.xpose.msra.mxu0 %v3524
    %3528 = vmatprep.subr.bf16.mxu0 0
    %3529 = vmatpush1.bf16.xpose.msra.mxu0 0
    %3530 = vmatprep.subr.bf16.mxu0 0
    %3531 = vmatpush1.bf16.xpose.msra.mxu0 0
    %3532 = vmatprep.subr.bf16.mxu0 0
    %3533 = vmatpush1.bf16.xpose.msra.mxu0 0
    %3534 = vmatprep.subr.bf16.mxu0 0
    %3535 = vmatpush1.bf16.xpose.msra.mxu0 0
    %3536 = vmatprep.subr.bf16.mxu0 0
    %3537 = vmatpush1.bf16.xpose.msra.mxu0 0
    %3538 = vmatprep.subr.bf16.mxu0 0
    %3539 = vmatpush1.bf16.xpose.msra.mxu0 0
    %3540 = vmatprep.subr.bf16.mxu0 0
    %3541 = vmatpush1.bf16.xpose.msra.mxu0 0
    %3542 = vmatprep.subr.bf16.mxu0 0
    %3543 = vmatpush1.bf16.xpose.msra.mxu0 0
    %3544 = vmatprep.subr.bf16.mxu0 0
    %3545 = vmatpush1.bf16.xpose.msra.mxu0 0
    %3546 = vmatprep.subr.bf16.mxu0 0
    %3547 = vmatpush1.bf16.xpose.msra.mxu0 0
    %3548 = vmatprep.subr.bf16.mxu0 0
    %3549 = vmatpush1.bf16.xpose.msra.mxu0 0
    %3550 = vmatprep.subr.bf16.mxu0 0
    %3551 = vmatpush1.bf16.xpose.msra.mxu0 0
    %3552 = vmatprep.subr.bf16.mxu0 0
    %3553 = vmatpush1.bf16.xpose.msra.mxu0 0
    %3554 = vmatprep.subr.bf16.mxu0 0
    %3555 = vmatpush1.bf16.xpose.msra.mxu0 0
    %3556 = vmatprep.subr.bf16.mxu0 0
    %3557 = vmatpush1.bf16.xpose.msra.mxu0 0
    %3558 = vmatprep.mubr.bf16.mxu0 0
    %3559 = vmatmul.mubr.bf16.gmra.mrb[0].mxu0 %v3521
    %v3560 = vpop.f32.mrb[0].mxu0
    %v3561 = vadd.f32 0.0, %v3560
    %v3562 = vpop.f32.mrb[0].mxu0
    %v3563 = vpop.f32.mrb[0].mxu0
    %v3564 = vpop.f32.mrb[0].mxu0
    %3565 = vdwg.mxu0
    %v3566 = vsel %vm727, %v3301, -inf
    %3567 = vmax.xlane.f32.xlu0 %v3566
    %v3568 = vpop.xlane.xlu0 %3567
    %v3569 = vsel %vm727, %v3353, -inf
    %3570 = vmax.xlane.f32.xlu0 %v3569
    %v3571 = vpop.xlane.xlu0 %3570
    %v3572 = vsel %vm727, %v3405, -inf
    %3573 = vmax.xlane.f32.xlu0 %v3572
    %v3574 = vpop.xlane.xlu0 %3573
    %v3575 = vsel %vm727, %v3457, -inf
    %3576 = vmax.xlane.f32.xlu0 %v3575
    %v3577 = vpop.xlane.xlu0 %3576
    %v3578 = vsel %vm727, %v3509, -inf
    %3579 = vmax.xlane.f32.xlu0 %v3578
    %v3580 = vpop.xlane.xlu0 %3579
    %v3581 = vsel %vm727, %v3561, -inf
    %3582 = vmax.xlane.f32.xlu0 %v3581
    %v3583 = vpop.xlane.xlu0 %3582
    %v3584 = vsub.f32 %v3301, %v3568
    %v3585 = vsub.f32 %v3353, %v3571
    %v3586 = vsub.f32 %v3405, %v3574
    %v3587 = vsub.f32 %v3457, %v3577
    %v3588 = vsub.f32 %v3509, %v3580
    %v3589 = vsub.f32 %v3561, %v3583
    %v3590 = vmul.f32 %v3584, 1.442695
    %v3591 = vpow.pop %v3590
    %v3592 = vmul.f32 %v3585, 1.442695
    %v3593 = vpow.pop %v3592
    %v3594 = vmul.f32 %v3586, 1.442695
    %v3595 = vpow.pop %v3594
    %v3596 = vmul.f32 %v3587, 1.442695
    %v3597 = vpow.pop %v3596
    %v3598 = vmul.f32 %v3588, 1.442695
    %v3599 = vpow.pop %v3598
    %v3600 = vmul.f32 %v3589, 1.442695
    %v3601 = vpow.pop %v3600
    %v3602 = vsel %vm727, %v3591, 0.0
    %3603 = vadd.xlane.f32.xlu0 %v3602
    %v3604 = vpop.xlane.xlu0 %3603
    %v3605 = vsel %vm727, %v3593, 0.0
    %3606 = vadd.xlane.f32.xlu0 %v3605
    %v3607 = vpop.xlane.xlu0 %3606
    %v3608 = vsel %vm727, %v3595, 0.0
    %3609 = vadd.xlane.f32.xlu0 %v3608
    %v3610 = vpop.xlane.xlu0 %3609
    %v3611 = vsel %vm727, %v3597, 0.0
    %3612 = vadd.xlane.f32.xlu0 %v3611
    %v3613 = vpop.xlane.xlu0 %3612
    %v3614 = vsel %vm727, %v3599, 0.0
    %3615 = vadd.xlane.f32.xlu0 %v3614
    %v3616 = vpop.xlane.xlu0 %3615
    %v3617 = vsel %vm727, %v3601, 0.0
    %3618 = vadd.xlane.f32.xlu0 %v3617
    %v3619 = vpop.xlane.xlu0 %3618
    %v3620 = vrcp.pop %v3604
    %v3621 = vrcp.pop %v3607
    %v3622 = vrcp.pop %v3610
    %v3623 = vrcp.pop %v3613
    %v3624 = vrcp.pop %v3616
    %v3625 = vrcp.pop %v3619
    %v3626 = vmul.f32 %v3591, %v3620
    %v3627 = vmul.f32 %v3593, %v3621
    %v3628 = vmul.f32 %v3595, %v3622
    %v3629 = vmul.f32 %v3597, %v3623
    %v3630 = vmul.f32 %v3599, %v3624
    %v3631 = vmul.f32 %v3601, %v3625
    %v3632 = vpack.c.bf16 %v3626, %v3626
    %v3633 = vpack.c.bf16 %v3627, %v3627
    %v3634 = vpack.c.bf16 %v3628, %v3628
    %v3635 = vpack.c.bf16 %v3629, %v3629
    %v3636 = vpack.c.bf16 %v3630, %v3630
    %v3637 = vpack.c.bf16 %v3631, %v3631
    %3639 = vrot.lane.b32.xlu0 %v2617, 96
    %v3640 = vpop.permute.xlu0 %3639
    %v3642 = vsel %vm727, %v3632, 0
    %v3645 = vsel %vm803, %v3640, 0
    %3647 = vmatprep.subr.bf16.mxu0 0
    %3648 = vmatpush1.bf16.msra.mxu0 %v3645
    %3649 = vmatprep.subr.bf16.mxu0 0
    %3650 = vmatpush1.bf16.msra.mxu0 0
    %3651 = vmatprep.subr.bf16.mxu0 0
    %3652 = vmatpush1.bf16.msra.mxu0 0
    %3653 = vmatprep.subr.bf16.mxu0 0
    %3654 = vmatpush1.bf16.msra.mxu0 0
    %3655 = vmatprep.subr.bf16.mxu0 0
    %3656 = vmatpush1.bf16.msra.mxu0 0
    %3657 = vmatprep.subr.bf16.mxu0 0
    %3658 = vmatpush1.bf16.msra.mxu0 0
    %3659 = vmatprep.subr.bf16.mxu0 0
    %3660 = vmatpush1.bf16.msra.mxu0 0
    %3661 = vmatprep.subr.bf16.mxu0 0
    %3662 = vmatpush1.bf16.msra.mxu0 0
    %3663 = vmatprep.subr.bf16.mxu0 0
    %3664 = vmatpush1.bf16.msra.mxu0 0
    %3665 = vmatprep.subr.bf16.mxu0 0
    %3666 = vmatpush1.bf16.msra.mxu0 0
    %3667 = vmatprep.subr.bf16.mxu0 0
    %3668 = vmatpush1.bf16.msra.mxu0 0
    %3669 = vmatprep.subr.bf16.mxu0 0
    %3670 = vmatpush1.bf16.msra.mxu0 0
    %3671 = vmatprep.subr.bf16.mxu0 0
    %3672 = vmatpush1.bf16.msra.mxu0 0
    %3673 = vmatprep.subr.bf16.mxu0 0
    %3674 = vmatpush1.bf16.msra.mxu0 0
    %3675 = vmatprep.subr.bf16.mxu0 0
    %3676 = vmatpush1.bf16.msra.mxu0 0
    %3677 = vmatprep.subr.bf16.mxu0 0
    %3678 = vmatpush1.bf16.msra.mxu0 0
    %3679 = vmatprep.mubr.bf16.mxu0 0
    %3680 = vmatmul.mubr.bf16.gmra.mrb[0].mxu0 %v3642
    %v3681 = vpop.f32.mrb[0].mxu0
    %v3682 = vadd.f32 0.0, %v3681
    %v3683 = vpop.f32.mrb[0].mxu0
    %v3684 = vpop.f32.mrb[0].mxu0
    %v3685 = vpop.f32.mrb[0].mxu0
    %3686 = vdwg.mxu0
    %3688 = vrot.lane.b32.xlu0 %v2618, 96
    %v3689 = vpop.permute.xlu0 %3688
    %v3691 = vsel %vm727, %v3633, 0
    %v3694 = vsel %vm803, %v3689, 0
    %3696 = vmatprep.subr.bf16.mxu0 0
    %3697 = vmatpush1.bf16.msra.mxu0 %v3694
    %3698 = vmatprep.subr.bf16.mxu0 0
    %3699 = vmatpush1.bf16.msra.mxu0 0
    %3700 = vmatprep.subr.bf16.mxu0 0
    %3701 = vmatpush1.bf16.msra.mxu0 0
    %3702 = vmatprep.subr.bf16.mxu0 0
    %3703 = vmatpush1.bf16.msra.mxu0 0
    %3704 = vmatprep.subr.bf16.mxu0 0
    %3705 = vmatpush1.bf16.msra.mxu0 0
    %3706 = vmatprep.subr.bf16.mxu0 0
    %3707 = vmatpush1.bf16.msra.mxu0 0
    %3708 = vmatprep.subr.bf16.mxu0 0
    %3709 = vmatpush1.bf16.msra.mxu0 0
    %3710 = vmatprep.subr.bf16.mxu0 0
    %3711 = vmatpush1.bf16.msra.mxu0 0
    %3712 = vmatprep.subr.bf16.mxu0 0
    %3713 = vmatpush1.bf16.msra.mxu0 0
    %3714 = vmatprep.subr.bf16.mxu0 0
    %3715 = vmatpush1.bf16.msra.mxu0 0
    %3716 = vmatprep.subr.bf16.mxu0 0
    %3717 = vmatpush1.bf16.msra.mxu0 0
    %3718 = vmatprep.subr.bf16.mxu0 0
    %3719 = vmatpush1.bf16.msra.mxu0 0
    %3720 = vmatprep.subr.bf16.mxu0 0
    %3721 = vmatpush1.bf16.msra.mxu0 0
    %3722 = vmatprep.subr.bf16.mxu0 0
    %3723 = vmatpush1.bf16.msra.mxu0 0
    %3724 = vmatprep.subr.bf16.mxu0 0
    %3725 = vmatpush1.bf16.msra.mxu0 0
    %3726 = vmatprep.subr.bf16.mxu0 0
    %3727 = vmatpush1.bf16.msra.mxu0 0
    %3728 = vmatprep.mubr.bf16.mxu0 0
    %3729 = vmatmul.mubr.bf16.gmra.mrb[0].mxu0 %v3691
    %v3730 = vpop.f32.mrb[0].mxu0
    %v3731 = vadd.f32 0.0, %v3730
    %v3732 = vpop.f32.mrb[0].mxu0
    %v3733 = vpop.f32.mrb[0].mxu0
    %v3734 = vpop.f32.mrb[0].mxu0
    %3735 = vdwg.mxu0
    %3737 = vrot.lane.b32.xlu0 %v2619, 96
    %v3738 = vpop.permute.xlu0 %3737
    %v3740 = vsel %vm727, %v3634, 0
    %v3743 = vsel %vm803, %v3738, 0
    %3745 = vmatprep.subr.bf16.mxu0 0
    %3746 = vmatpush1.bf16.msra.mxu0 %v3743
    %3747 = vmatprep.subr.bf16.mxu0 0
    %3748 = vmatpush1.bf16.msra.mxu0 0
    %3749 = vmatprep.subr.bf16.mxu0 0
    %3750 = vmatpush1.bf16.msra.mxu0 0
    %3751 = vmatprep.subr.bf16.mxu0 0
    %3752 = vmatpush1.bf16.msra.mxu0 0
    %3753 = vmatprep.subr.bf16.mxu0 0
    %3754 = vmatpush1.bf16.msra.mxu0 0
    %3755 = vmatprep.subr.bf16.mxu0 0
    %3756 = vmatpush1.bf16.msra.mxu0 0
    %3757 = vmatprep.subr.bf16.mxu0 0
    %3758 = vmatpush1.bf16.msra.mxu0 0
    %3759 = vmatprep.subr.bf16.mxu0 0
    %3760 = vmatpush1.bf16.msra.mxu0 0
    %3761 = vmatprep.subr.bf16.mxu0 0
    %3762 = vmatpush1.bf16.msra.mxu0 0
    %3763 = vmatprep.subr.bf16.mxu0 0
    %3764 = vmatpush1.bf16.msra.mxu0 0
    %3765 = vmatprep.subr.bf16.mxu0 0
    %3766 = vmatpush1.bf16.msra.mxu0 0
    %3767 = vmatprep.subr.bf16.mxu0 0
    %3768 = vmatpush1.bf16.msra.mxu0 0
    %3769 = vmatprep.subr.bf16.mxu0 0
    %3770 = vmatpush1.bf16.msra.mxu0 0
    %3771 = vmatprep.subr.bf16.mxu0 0
    %3772 = vmatpush1.bf16.msra.mxu0 0
    %3773 = vmatprep.subr.bf16.mxu0 0
    %3774 = vmatpush1.bf16.msra.mxu0 0
    %3775 = vmatprep.subr.bf16.mxu0 0
    %3776 = vmatpush1.bf16.msra.mxu0 0
    %3777 = vmatprep.mubr.bf16.mxu0 0
    %3778 = vmatmul.mubr.bf16.gmra.mrb[0].mxu0 %v3740
    %v3779 = vpop.f32.mrb[0].mxu0
    %v3780 = vadd.f32 0.0, %v3779
    %v3781 = vpop.f32.mrb[0].mxu0
    %v3782 = vpop.f32.mrb[0].mxu0
    %v3783 = vpop.f32.mrb[0].mxu0
    %3784 = vdwg.mxu0
    %3786 = vrot.lane.b32.xlu0 %v2620, 96
    %v3787 = vpop.permute.xlu0 %3786
    %v3789 = vsel %vm727, %v3635, 0
    %v3792 = vsel %vm803, %v3787, 0
    %3794 = vmatprep.subr.bf16.mxu0 0
    %3795 = vmatpush1.bf16.msra.mxu0 %v3792
    %3796 = vmatprep.subr.bf16.mxu0 0
    %3797 = vmatpush1.bf16.msra.mxu0 0
    %3798 = vmatprep.subr.bf16.mxu0 0
    %3799 = vmatpush1.bf16.msra.mxu0 0
    %3800 = vmatprep.subr.bf16.mxu0 0
    %3801 = vmatpush1.bf16.msra.mxu0 0
    %3802 = vmatprep.subr.bf16.mxu0 0
    %3803 = vmatpush1.bf16.msra.mxu0 0
    %3804 = vmatprep.subr.bf16.mxu0 0
    %3805 = vmatpush1.bf16.msra.mxu0 0
    %3806 = vmatprep.subr.bf16.mxu0 0
    %3807 = vmatpush1.bf16.msra.mxu0 0
    %3808 = vmatprep.subr.bf16.mxu0 0
    %3809 = vmatpush1.bf16.msra.mxu0 0
    %3810 = vmatprep.subr.bf16.mxu0 0
    %3811 = vmatpush1.bf16.msra.mxu0 0
    %3812 = vmatprep.subr.bf16.mxu0 0
    %3813 = vmatpush1.bf16.msra.mxu0 0
    %3814 = vmatprep.subr.bf16.mxu0 0
    %3815 = vmatpush1.bf16.msra.mxu0 0
    %3816 = vmatprep.subr.bf16.mxu0 0
    %3817 = vmatpush1.bf16.msra.mxu0 0
    %3818 = vmatprep.subr.bf16.mxu0 0
    %3819 = vmatpush1.bf16.msra.mxu0 0
    %3820 = vmatprep.subr.bf16.mxu0 0
    %3821 = vmatpush1.bf16.msra.mxu0 0
    %3822 = vmatprep.subr.bf16.mxu0 0
    %3823 = vmatpush1.bf16.msra.mxu0 0
    %3824 = vmatprep.subr.bf16.mxu0 0
    %3825 = vmatpush1.bf16.msra.mxu0 0
    %3826 = vmatprep.mubr.bf16.mxu0 0
    %3827 = vmatmul.mubr.bf16.gmra.mrb[0].mxu0 %v3789
    %v3828 = vpop.f32.mrb[0].mxu0
    %v3829 = vadd.f32 0.0, %v3828
    %v3830 = vpop.f32.mrb[0].mxu0
    %v3831 = vpop.f32.mrb[0].mxu0
    %v3832 = vpop.f32.mrb[0].mxu0
    %3833 = vdwg.mxu0
    %3835 = vrot.lane.b32.xlu0 %v2621, 96
    %v3836 = vpop.permute.xlu0 %3835
    %v3838 = vsel %vm727, %v3636, 0
    %v3841 = vsel %vm803, %v3836, 0
    %3843 = vmatprep.subr.bf16.mxu0 0
    %3844 = vmatpush1.bf16.msra.mxu0 %v3841
    %3845 = vmatprep.subr.bf16.mxu0 0
    %3846 = vmatpush1.bf16.msra.mxu0 0
    %3847 = vmatprep.subr.bf16.mxu0 0
    %3848 = vmatpush1.bf16.msra.mxu0 0
    %3849 = vmatprep.subr.bf16.mxu0 0
    %3850 = vmatpush1.bf16.msra.mxu0 0
    %3851 = vmatprep.subr.bf16.mxu0 0
    %3852 = vmatpush1.bf16.msra.mxu0 0
    %3853 = vmatprep.subr.bf16.mxu0 0
    %3854 = vmatpush1.bf16.msra.mxu0 0
    %3855 = vmatprep.subr.bf16.mxu0 0
    %3856 = vmatpush1.bf16.msra.mxu0 0
    %3857 = vmatprep.subr.bf16.mxu0 0
    %3858 = vmatpush1.bf16.msra.mxu0 0
    %3859 = vmatprep.subr.bf16.mxu0 0
    %3860 = vmatpush1.bf16.msra.mxu0 0
    %3861 = vmatprep.subr.bf16.mxu0 0
    %3862 = vmatpush1.bf16.msra.mxu0 0
    %3863 = vmatprep.subr.bf16.mxu0 0
    %3864 = vmatpush1.bf16.msra.mxu0 0
    %3865 = vmatprep.subr.bf16.mxu0 0
    %3866 = vmatpush1.bf16.msra.mxu0 0
    %3867 = vmatprep.subr.bf16.mxu0 0
    %3868 = vmatpush1.bf16.msra.mxu0 0
    %3869 = vmatprep.subr.bf16.mxu0 0
    %3870 = vmatpush1.bf16.msra.mxu0 0
    %3871 = vmatprep.subr.bf16.mxu0 0
    %3872 = vmatpush1.bf16.msra.mxu0 0
    %3873 = vmatprep.subr.bf16.mxu0 0
    %3874 = vmatpush1.bf16.msra.mxu0 0
    %3875 = vmatprep.mubr.bf16.mxu0 0
    %3876 = vmatmul.mubr.bf16.gmra.mrb[0].mxu0 %v3838
    %v3877 = vpop.f32.mrb[0].mxu0
    %v3878 = vadd.f32 0.0, %v3877
    %v3879 = vpop.f32.mrb[0].mxu0
    %v3880 = vpop.f32.mrb[0].mxu0
    %v3881 = vpop.f32.mrb[0].mxu0
    %3882 = vdwg.mxu0
    %3884 = vrot.lane.b32.xlu0 %v2622, 96
    %v3885 = vpop.permute.xlu0 %3884
    %v3887 = vsel %vm727, %v3637, 0
    %v3890 = vsel %vm803, %v3885, 0
    %3892 = vmatprep.subr.bf16.mxu0 0
    %3893 = vmatpush1.bf16.msra.mxu0 %v3890
    %3894 = vmatprep.subr.bf16.mxu0 0
    %3895 = vmatpush1.bf16.msra.mxu0 0
    %3896 = vmatprep.subr.bf16.mxu0 0
    %3897 = vmatpush1.bf16.msra.mxu0 0
    %3898 = vmatprep.subr.bf16.mxu0 0
    %3899 = vmatpush1.bf16.msra.mxu0 0
    %3900 = vmatprep.subr.bf16.mxu0 0
    %3901 = vmatpush1.bf16.msra.mxu0 0
    %3902 = vmatprep.subr.bf16.mxu0 0
    %3903 = vmatpush1.bf16.msra.mxu0 0
    %3904 = vmatprep.subr.bf16.mxu0 0
    %3905 = vmatpush1.bf16.msra.mxu0 0
    %3906 = vmatprep.subr.bf16.mxu0 0
    %3907 = vmatpush1.bf16.msra.mxu0 0
    %3908 = vmatprep.subr.bf16.mxu0 0
    %3909 = vmatpush1.bf16.msra.mxu0 0
    %3910 = vmatprep.subr.bf16.mxu0 0
    %3911 = vmatpush1.bf16.msra.mxu0 0
    %3912 = vmatprep.subr.bf16.mxu0 0
    %3913 = vmatpush1.bf16.msra.mxu0 0
    %3914 = vmatprep.subr.bf16.mxu0 0
    %3915 = vmatpush1.bf16.msra.mxu0 0
    %3916 = vmatprep.subr.bf16.mxu0 0
    %3917 = vmatpush1.bf16.msra.mxu0 0
    %3918 = vmatprep.subr.bf16.mxu0 0
    %3919 = vmatpush1.bf16.msra.mxu0 0
    %3920 = vmatprep.subr.bf16.mxu0 0
    %3921 = vmatpush1.bf16.msra.mxu0 0
    %3922 = vmatprep.subr.bf16.mxu0 0
    %3923 = vmatpush1.bf16.msra.mxu0 0
    %3924 = vmatprep.mubr.bf16.mxu0 0
    %3925 = vmatmul.mubr.bf16.gmra.mrb[0].mxu0 %v3887
    %v3926 = vpop.f32.mrb[0].mxu0
    %v3927 = vadd.f32 0.0, %v3926
    %v3928 = vpop.f32.mrb[0].mxu0
    %v3929 = vpop.f32.mrb[0].mxu0
    %v3930 = vpop.f32.mrb[0].mxu0
    %3931 = vdwg.mxu0
    %v3932 = vpack.c.bf16 %v3731, %v3682
    %v3933 = vpack.c.bf16 %v3829, %v3780
    %v3934 = vpack.c.bf16 %v3927, %v3878
    %v3935 = vld [vmem:[#allocation4 + $0x120] sm:$0xf]
    %v3936 = vld [vmem:[#allocation4 + $0x124] sm:$0xf]
    %v3937 = vld [vmem:[#allocation4 + $0x128] sm:$0xf]
    %v3938 = vld [vmem:[#allocation4 + $0x12c] sm:$0xf]
    %v3943 = vunpack.c.l.b16 %v3935
    %v3944 = vunpack.c.l.b16 %v3936
    %v3945 = vunpack.c.l.b16 %v3937
    %v3946 = vunpack.c.l.b16 %v3938
    %v3947 = vpack.c.b16 %v3944, %v3943
    %v3948 = vpack.c.b16 %v3946, %v3945
    %v3952 = vsel %vm220, %v3932, 0
    %v3955 = vsel %vm220, %v3933, 0
    %v3958 = vsel %vm220, %v3934, 0
    %3960 = vmatprep.subr.bf16.mxu0 0
    %3961 = vmatpush1.bf16.msra.mxu0 %v3947
    %3962 = vmatprep.subr.bf16.mxu0 0
    %3963 = vmatpush1.bf16.msra.mxu0 %v3948
    %3964 = vmatprep.subr.bf16.mxu0 0
    %3965 = vmatpush1.bf16.msra.mxu0 0
    %3966 = vmatprep.subr.bf16.mxu0 0
    %3967 = vmatpush1.bf16.msra.mxu0 0
    %3968 = vmatprep.subr.bf16.mxu0 0
    %3969 = vmatpush1.bf16.msra.mxu0 0
    %3970 = vmatprep.subr.bf16.mxu0 0
    %3971 = vmatpush1.bf16.msra.mxu0 0
    %3972 = vmatprep.subr.bf16.mxu0 0
    %3973 = vmatpush1.bf16.msra.mxu0 0
    %3974 = vmatprep.subr.bf16.mxu0 0
    %3975 = vmatpush1.bf16.msra.mxu0 0
    %3976 = vmatprep.subr.bf16.mxu0 0
    %3977 = vmatpush1.bf16.msra.mxu0 0
    %3978 = vmatprep.subr.bf16.mxu0 0
    %3979 = vmatpush1.bf16.msra.mxu0 0
    %3980 = vmatprep.subr.bf16.mxu0 0
    %3981 = vmatpush1.bf16.msra.mxu0 0
    %3982 = vmatprep.subr.bf16.mxu0 0
    %3983 = vmatpush1.bf16.msra.mxu0 0
    %3984 = vmatprep.subr.bf16.mxu0 0
    %3985 = vmatpush1.bf16.msra.mxu0 0
    %3986 = vmatprep.subr.bf16.mxu0 0
    %3987 = vmatpush1.bf16.msra.mxu0 0
    %3988 = vmatprep.subr.bf16.mxu0 0
    %3989 = vmatpush1.bf16.msra.mxu0 0
    %3990 = vmatprep.subr.bf16.mxu0 0
    %3991 = vmatpush1.bf16.msra.mxu0 0
    %3992 = vmatprep.mubr.bf16.mxu0 0
    %3993 = vmatmul.mubr.bf16.gmra.mrb[0].mxu0 %v3952
    %v3994 = vpop.f32.mrb[0].mxu0
    %v3995 = vadd.f32 0.0, %v3994
    %v3996 = vpop.f32.mrb[0].mxu0
    %v3997 = vpop.f32.mrb[0].mxu0
    %v3998 = vadd.f32 0.0, %v3997
    %v3999 = vpop.f32.mrb[0].mxu0
    %4000 = vmatprep.mubr.bf16.mxu0 0
    %4001 = vmatmul.mubr.bf16.gmra.mrb[0].mxu0 %v3955
    %v4002 = vpop.f32.mrb[0].mxu0
    %v4003 = vadd.f32 0.0, %v4002
    %v4004 = vpop.f32.mrb[0].mxu0
    %v4005 = vpop.f32.mrb[0].mxu0
    %v4006 = vadd.f32 0.0, %v4005
    %v4007 = vpop.f32.mrb[0].mxu0
    %4008 = vmatprep.mubr.bf16.mxu0 0
    %4009 = vmatmul.mubr.bf16.gmra.mrb[0].mxu0 %v3958
    %v4010 = vpop.f32.mrb[0].mxu0
    %v4011 = vadd.f32 0.0, %v4010
    %v4012 = vpop.f32.mrb[0].mxu0
    %v4013 = vpop.f32.mrb[0].mxu0
    %v4014 = vadd.f32 0.0, %v4013
    %v4015 = vpop.f32.mrb[0].mxu0
    %4016 = vdwg.mxu0
    %v4021 = vunpack.c.l.b16 %v3250
    %v4022 = vunpack.c.l.b16 %v3251
    %v4023 = vunpack.c.l.b16 %v3252
    %v4024 = vunpack.c.l.b16 %v3253
    %v4025 = vpack.c.b16 %v4022, %v4021
    %v4026 = vpack.c.b16 %v4024, %v4023
    %v4030 = vsel %vm220, %v3247, 0
    %v4033 = vsel %vm220, %v3248, 0
    %v4036 = vsel %vm220, %v3249, 0
    %4038 = vmatprep.subr.bf16.mxu0 0
    %4039 = vmatpush1.bf16.msra.mxu0 %v4025
    %4040 = vmatprep.subr.bf16.mxu0 0
    %4041 = vmatpush1.bf16.msra.mxu0 %v4026
    %4042 = vmatprep.subr.bf16.mxu0 0
    %4043 = vmatpush1.bf16.msra.mxu0 0
    %4044 = vmatprep.subr.bf16.mxu0 0
    %4045 = vmatpush1.bf16.msra.mxu0 0
    %4046 = vmatprep.subr.bf16.mxu0 0
    %4047 = vmatpush1.bf16.msra.mxu0 0
    %4048 = vmatprep.subr.bf16.mxu0 0
    %4049 = vmatpush1.bf16.msra.mxu0 0
    %4050 = vmatprep.subr.bf16.mxu0 0
    %4051 = vmatpush1.bf16.msra.mxu0 0
    %4052 = vmatprep.subr.bf16.mxu0 0
    %4053 = vmatpush1.bf16.msra.mxu0 0
    %4054 = vmatprep.subr.bf16.mxu0 0
    %4055 = vmatpush1.bf16.msra.mxu0 0
    %4056 = vmatprep.subr.bf16.mxu0 0
    %4057 = vmatpush1.bf16.msra.mxu0 0
    %4058 = vmatprep.subr.bf16.mxu0 0
    %4059 = vmatpush1.bf16.msra.mxu0 0
    %4060 = vmatprep.subr.bf16.mxu0 0
    %4061 = vmatpush1.bf16.msra.mxu0 0
    %4062 = vmatprep.subr.bf16.mxu0 0
    %4063 = vmatpush1.bf16.msra.mxu0 0
    %4064 = vmatprep.subr.bf16.mxu0 0
    %4065 = vmatpush1.bf16.msra.mxu0 0
    %4066 = vmatprep.subr.bf16.mxu0 0
    %4067 = vmatpush1.bf16.msra.mxu0 0
    %4068 = vmatprep.subr.bf16.mxu0 0
    %4069 = vmatpush1.bf16.msra.mxu0 0
    %4070 = vmatprep.mubr.bf16.mxu0 0
    %4071 = vmatmul.mubr.bf16.gmra.mrb[0].mxu0 %v4030
    %v4072 = vpop.f32.mrb[0].mxu0
    %v4073 = vadd.f32 %v3995, %v4072
    %v4074 = vpop.f32.mrb[0].mxu0
    %v4075 = vpop.f32.mrb[0].mxu0
    %v4076 = vadd.f32 %v3998, %v4075
    %v4077 = vpop.f32.mrb[0].mxu0
    %4078 = vmatprep.mubr.bf16.mxu0 0
    %4079 = vmatmul.mubr.bf16.gmra.mrb[0].mxu0 %v4033
    %v4080 = vpop.f32.mrb[0].mxu0
    %v4081 = vadd.f32 %v4003, %v4080
    %v4082 = vpop.f32.mrb[0].mxu0
    %v4083 = vpop.f32.mrb[0].mxu0
    %v4084 = vadd.f32 %v4006, %v4083
    %v4085 = vpop.f32.mrb[0].mxu0
    %4086 = vmatprep.mubr.bf16.mxu0 0
    %4087 = vmatmul.mubr.bf16.gmra.mrb[0].mxu0 %v4036
    %v4088 = vpop.f32.mrb[0].mxu0
    %v4089 = vadd.f32 %v4011, %v4088
    %v4090 = vpop.f32.mrb[0].mxu0
    %v4091 = vpop.f32.mrb[0].mxu0
    %v4092 = vadd.f32 %v4014, %v4091
    %v4093 = vpop.f32.mrb[0].mxu0
    %4094 = vdwg.mxu0
    %v4095 = vld [vmem:[#allocation6 + $0x7] sm:$0x1]
    %v4096 = vlaneseq
    %v4097 = vshrl.u32 %v4096, 7
    %v4098 = vsub.s32 0, %v4097
    %v4099 = vrot.slane %v4095, %v4098
    %v4100 = vadd.f32 %v4073, %v4099
    %v4101 = vadd.f32 %v4076, %v4099
    %v4102 = vadd.f32 %v4081, %v4099
    %v4103 = vadd.f32 %v4084, %v4099
    %v4104 = vadd.f32 %v4089, %v4099
    %v4105 = vadd.f32 %v4092, %v4099
    %v4106 = vadd.f32 %v4100, %v2368
    %v4107 = vadd.f32 %v4101, %v2369
    %v4108 = vadd.f32 %v4102, %v2370
    %v4109 = vadd.f32 %v4103, %v2371
    %v4110 = vadd.f32 %v4104, %v2372
    %v4111 = vadd.f32 %v4105, %v2373
    %v4112 = vld [vmem:[#allocation6 + $0x8] sm:$0x1]
    %v4113 = vld [vmem:[#allocation6 + $0x9] sm:$0x1]
    %v4114 = vsel %vm220, %v4106, 0.0
    %4115 = vadd.xlane.f32.xlu0 %v4114
    %v4116 = vpop.xlane.xlu0 %4115
    %v4117 = vsel %vm220, %v4107, 0.0
    %4118 = vadd.xlane.f32.xlu0 %v4117
    %v4119 = vpop.xlane.xlu0 %4118
    %v4120 = vsel %vm220, %v4108, 0.0
    %4121 = vadd.xlane.f32.xlu0 %v4120
    %v4122 = vpop.xlane.xlu0 %4121
    %v4123 = vsel %vm220, %v4109, 0.0
    %4124 = vadd.xlane.f32.xlu0 %v4123
    %v4125 = vpop.xlane.xlu0 %4124
    %v4126 = vsel %vm220, %v4110, 0.0
    %4127 = vadd.xlane.f32.xlu0 %v4126
    %v4128 = vpop.xlane.xlu0 %4127
    %v4129 = vsel %vm220, %v4111, 0.0
    %4130 = vadd.xlane.f32.xlu0 %v4129
    %v4131 = vpop.xlane.xlu0 %4130
    %v4132 = vmul.f32 %v4116, %v1962
    %v4133 = vmul.f32 %v4119, %v1962
    %v4134 = vmul.f32 %v4122, %v1962
    %v4135 = vmul.f32 %v4125, %v1962
    %v4136 = vmul.f32 %v4128, %v1962
    %v4137 = vmul.f32 %v4131, %v1962
    %v4138 = vsub.f32 %v4106, %v4132
    %v4139 = vsub.f32 %v4107, %v4133
    %v4140 = vsub.f32 %v4108, %v4134
    %v4141 = vsub.f32 %v4109, %v4135
    %v4142 = vsub.f32 %v4110, %v4136
    %v4143 = vsub.f32 %v4111, %v4137
    %v4144 = vmul.f32 %v4138, %v4138
    %v4145 = vmul.f32 %v4139, %v4139
    %v4146 = vmul.f32 %v4140, %v4140
    %v4147 = vmul.f32 %v4141, %v4141
    %v4148 = vmul.f32 %v4142, %v4142
    %v4149 = vmul.f32 %v4143, %v4143
    %v4150 = vsel %vm220, %v4144, 0.0
    %4151 = vadd.xlane.f32.xlu0 %v4150
    %v4152 = vpop.xlane.xlu0 %4151
    %v4153 = vsel %vm220, %v4145, 0.0
    %4154 = vadd.xlane.f32.xlu0 %v4153
    %v4155 = vpop.xlane.xlu0 %4154
    %v4156 = vsel %vm220, %v4146, 0.0
    %4157 = vadd.xlane.f32.xlu0 %v4156
    %v4158 = vpop.xlane.xlu0 %4157
    %v4159 = vsel %vm220, %v4147, 0.0
    %4160 = vadd.xlane.f32.xlu0 %v4159
    %v4161 = vpop.xlane.xlu0 %4160
    %v4162 = vsel %vm220, %v4148, 0.0
    %4163 = vadd.xlane.f32.xlu0 %v4162
    %v4164 = vpop.xlane.xlu0 %4163
    %v4165 = vsel %vm220, %v4149, 0.0
    %4166 = vadd.xlane.f32.xlu0 %v4165
    %v4167 = vpop.xlane.xlu0 %4166
    %v4168 = vmul.f32 %v4152, %v1962
    %v4169 = vmul.f32 %v4155, %v1962
    %v4170 = vmul.f32 %v4158, %v1962
    %v4171 = vmul.f32 %v4161, %v1962
    %v4172 = vmul.f32 %v4164, %v1962
    %v4173 = vmul.f32 %v4167, %v1962
    %v4174 = vadd.f32 %v4168, 1e-05
    %v4175 = vadd.f32 %v4169, 1e-05
    %v4176 = vadd.f32 %v4170, 1e-05
    %v4177 = vadd.f32 %v4171, 1e-05
    %v4178 = vadd.f32 %v4172, 1e-05
    %v4179 = vadd.f32 %v4173, 1e-05
    %v4180 = vrsqrt.pop %v4174
    %v4181 = vrsqrt.pop %v4175
    %v4182 = vrsqrt.pop %v4176
    %v4183 = vrsqrt.pop %v4177
    %v4184 = vrsqrt.pop %v4178
    %v4185 = vrsqrt.pop %v4179
    %v4186 = vmul.f32 %v4138, %v4180
    %v4187 = vmul.f32 %v4139, %v4181
    %v4188 = vmul.f32 %v4140, %v4182
    %v4189 = vmul.f32 %v4141, %v4183
    %v4190 = vmul.f32 %v4142, %v4184
    %v4191 = vmul.f32 %v4143, %v4185
    %v4192 = vlaneseq
    %v4193 = vshrl.u32 %v4192, 7
    %v4194 = vsub.s32 0, %v4193
    %v4195 = vrot.slane %v4112, %v4194
    %v4196 = vmul.f32 %v4186, %v4195
    %v4197 = vmul.f32 %v4187, %v4195
    %v4198 = vmul.f32 %v4188, %v4195
    %v4199 = vmul.f32 %v4189, %v4195
    %v4200 = vmul.f32 %v4190, %v4195
    %v4201 = vmul.f32 %v4191, %v4195
    %v4202 = vlaneseq
    %v4203 = vshrl.u32 %v4202, 7
    %v4204 = vsub.s32 0, %v4203
    %v4205 = vrot.slane %v4113, %v4204
    %v4206 = vadd.f32 %v4196, %v4205
    %v4207 = vadd.f32 %v4197, %v4205
    %v4208 = vadd.f32 %v4198, %v4205
    %v4209 = vadd.f32 %v4199, %v4205
    %v4210 = vadd.f32 %v4200, %v4205
    %v4211 = vadd.f32 %v4201, %v4205
    %v4212 = vpack.c.bf16 %v4207, %v4206
    %v4213 = vpack.c.bf16 %v4209, %v4208
    %v4214 = vpack.c.bf16 %v4211, %v4210
    %v4215 = vld [vmem:[#allocation4 + $0x130] sm:$0xf]
    %v4216 = vld [vmem:[#allocation4 + $0x134] sm:$0xf]
    %v4217 = vld [vmem:[#allocation4 + $0x138] sm:$0xf]
    %v4218 = vld [vmem:[#allocation4 + $0x13c] sm:$0xf]
    %v4219 = vld [vmem:[#allocation6 + $0xa] sm:$0x1]
    %v4220 = vlaneseq
    %v4221 = vshrl.u32 %v4220, 7
    %v4222 = vsub.s32 0, %v4221
    %v4223 = vrot.slane %v4219, %v4222
    %v4228 = vunpack.c.l.b16 %v4215
    %v4229 = vunpack.c.l.b16 %v4216
    %v4230 = vunpack.c.l.b16 %v4217
    %v4231 = vunpack.c.l.b16 %v4218
    %v4232 = vpack.c.b16 %v4229, %v4228
    %v4233 = vpack.c.b16 %v4231, %v4230
    %v4237 = vsel %vm220, %v4212, 0
    %v4240 = vsel %vm220, %v4213, 0
    %v4243 = vsel %vm220, %v4214, 0
    %4245 = vmatprep.subr.bf16.mxu0 0
    %4246 = vmatpush1.bf16.msra.mxu0 %v4232
    %4247 = vmatprep.subr.bf16.mxu0 0
    %4248 = vmatpush1.bf16.msra.mxu0 %v4233
    %4249 = vmatprep.subr.bf16.mxu0 0
    %4250 = vmatpush1.bf16.msra.mxu0 0
    %4251 = vmatprep.subr.bf16.mxu0 0
    %4252 = vmatpush1.bf16.msra.mxu0 0
    %4253 = vmatprep.subr.bf16.mxu0 0
    %4254 = vmatpush1.bf16.msra.mxu0 0
    %4255 = vmatprep.subr.bf16.mxu0 0
    %4256 = vmatpush1.bf16.msra.mxu0 0
    %4257 = vmatprep.subr.bf16.mxu0 0
    %4258 = vmatpush1.bf16.msra.mxu0 0
    %4259 = vmatprep.subr.bf16.mxu0 0
    %4260 = vmatpush1.bf16.msra.mxu0 0
    %4261 = vmatprep.subr.bf16.mxu0 0
    %4262 = vmatpush1.bf16.msra.mxu0 0
    %4263 = vmatprep.subr.bf16.mxu0 0
    %4264 = vmatpush1.bf16.msra.mxu0 0
    %4265 = vmatprep.subr.bf16.mxu0 0
    %4266 = vmatpush1.bf16.msra.mxu0 0
    %4267 = vmatprep.subr.bf16.mxu0 0
    %4268 = vmatpush1.bf16.msra.mxu0 0
    %4269 = vmatprep.subr.bf16.mxu0 0
    %4270 = vmatpush1.bf16.msra.mxu0 0
    %4271 = vmatprep.subr.bf16.mxu0 0
    %4272 = vmatpush1.bf16.msra.mxu0 0
    %4273 = vmatprep.subr.bf16.mxu0 0
    %4274 = vmatpush1.bf16.msra.mxu0 0
    %4275 = vmatprep.subr.bf16.mxu0 0
    %4276 = vmatpush1.bf16.msra.mxu0 0
    %4277 = vmatprep.mubr.bf16.mxu0 0
    %4278 = vmatmul.mubr.bf16.gmra.mrb[0].mxu0 %v4237
    %v4279 = vpop.f32.mrb[0].mxu0
    %v4280 = vadd.f32 %v4223, %v4279
    %v4281 = vpop.f32.mrb[0].mxu0
    %v4282 = vpop.f32.mrb[0].mxu0
    %v4283 = vadd.f32 %v4223, %v4282
    %v4284 = vpop.f32.mrb[0].mxu0
    %4285 = vmatprep.mubr.bf16.mxu0 0
    %4286 = vmatmul.mubr.bf16.gmra.mrb[0].mxu0 %v4240
    %v4287 = vpop.f32.mrb[0].mxu0
    %v4288 = vadd.f32 %v4223, %v4287
    %v4289 = vpop.f32.mrb[0].mxu0
    %v4290 = vpop.f32.mrb[0].mxu0
    %v4291 = vadd.f32 %v4223, %v4290
    %v4292 = vpop.f32.mrb[0].mxu0
    %4293 = vmatprep.mubr.bf16.mxu0 0
    %4294 = vmatmul.mubr.bf16.gmra.mrb[0].mxu0 %v4243
    %v4295 = vpop.f32.mrb[0].mxu0
    %v4296 = vadd.f32 %v4223, %v4295
    %v4297 = vpop.f32.mrb[0].mxu0
    %v4298 = vpop.f32.mrb[0].mxu0
    %v4299 = vadd.f32 %v4223, %v4298
    %v4300 = vpop.f32.mrb[0].mxu0
    %4301 = vdwg.mxu0
    %v4302 = vmax.f32 %v4280, 0.0
    %v4303 = vmax.f32 %v4283, 0.0
    %v4304 = vmax.f32 %v4288, 0.0
    %v4305 = vmax.f32 %v4291, 0.0
    %v4306 = vmax.f32 %v4296, 0.0
    %v4307 = vmax.f32 %v4299, 0.0
    %v4308 = vpack.c.bf16 %v4303, %v4302
    %v4309 = vpack.c.bf16 %v4305, %v4304
    %v4310 = vpack.c.bf16 %v4307, %v4306
    %v4311 = vld [vmem:[#allocation4 + $0x140] sm:$0xf]
    %v4312 = vld [vmem:[#allocation4 + $0x144] sm:$0xf]
    %v4313 = vld [vmem:[#allocation4 + $0x148] sm:$0xf]
    %v4314 = vld [vmem:[#allocation4 + $0x14c] sm:$0xf]
    %v4315 = vld [vmem:[#allocation4 + $0x150] sm:$0xf]
    %v4316 = vld [vmem:[#allocation4 + $0x154] sm:$0xf]
    %v4317 = vld [vmem:[#allocation4 + $0x158] sm:$0xf]
    %v4318 = vld [vmem:[#allocation4 + $0x15c] sm:$0xf]
    %v4319 = vld [vmem:[#allocation4 + $0x160] sm:$0xf]
    %v4320 = vld [vmem:[#allocation4 + $0x164] sm:$0xf]
    %v4321 = vld [vmem:[#allocation4 + $0x168] sm:$0xf]
    %v4322 = vld [vmem:[#allocation4 + $0x16c] sm:$0xf]
    %v4323 = vld [vmem:[#allocation4 + $0x170] sm:$0xf]
    %v4324 = vld [vmem:[#allocation4 + $0x174] sm:$0xf]
    %v4325 = vld [vmem:[#allocation4 + $0x178] sm:$0xf]
    %v4326 = vld [vmem:[#allocation4 + $0x17c] sm:$0xf]
    %v4327 = vld [vmem:[#allocation6 + $0xb] sm:$0x1]
    %v4328 = vlaneseq
    %v4329 = vshrl.u32 %v4328, 7
    %v4330 = vsub.s32 0, %v4329
    %v4331 = vrot.slane %v4327, %v4330
    %v4348 = vunpack.c.l.b16 %v4311
    %v4349 = vunpack.c.l.b16 %v4312
    %v4350 = vunpack.c.l.b16 %v4313
    %v4351 = vunpack.c.l.b16 %v4314
    %v4352 = vunpack.c.l.b16 %v4315
    %v4353 = vunpack.c.l.b16 %v4316
    %v4354 = vunpack.c.l.b16 %v4317
    %v4355 = vunpack.c.l.b16 %v4318
    %v4356 = vunpack.c.l.b16 %v4319
    %v4357 = vunpack.c.l.b16 %v4320
    %v4358 = vunpack.c.l.b16 %v4321
    %v4359 = vunpack.c.l.b16 %v4322
    %v4360 = vunpack.c.l.b16 %v4323
    %v4361 = vunpack.c.l.b16 %v4324
    %v4362 = vunpack.c.l.b16 %v4325
    %v4363 = vunpack.c.l.b16 %v4326
    %v4364 = vpack.c.b16 %v4349, %v4348
    %v4365 = vpack.c.b16 %v4351, %v4350
    %v4366 = vpack.c.b16 %v4353, %v4352
    %v4367 = vpack.c.b16 %v4355, %v4354
    %v4368 = vpack.c.b16 %v4357, %v4356
    %v4369 = vpack.c.b16 %v4359, %v4358
    %v4370 = vpack.c.b16 %v4361, %v4360
    %v4371 = vpack.c.b16 %v4363, %v4362
    %4380 = vmatprep.subr.bf16.mxu0 0
    %4381 = vmatpush1.bf16.msra.mxu0 %v4364
    %4382 = vmatprep.subr.bf16.mxu0 0
    %4383 = vmatpush1.bf16.msra.mxu0 %v4365
    %4384 = vmatprep.subr.bf16.mxu0 0
    %4385 = vmatpush1.bf16.msra.mxu0 %v4366
    %4386 = vmatprep.subr.bf16.mxu0 0
    %4387 = vmatpush1.bf16.msra.mxu0 %v4367
    %4388 = vmatprep.subr.bf16.mxu0 0
    %4389 = vmatpush1.bf16.msra.mxu0 %v4368
    %4390 = vmatprep.subr.bf16.mxu0 0
    %4391 = vmatpush1.bf16.msra.mxu0 %v4369
    %4392 = vmatprep.subr.bf16.mxu0 0
    %4393 = vmatpush1.bf16.msra.mxu0 %v4370
    %4394 = vmatprep.subr.bf16.mxu0 0
    %4395 = vmatpush1.bf16.msra.mxu0 %v4371
    %4396 = vmatprep.subr.bf16.mxu0 0
    %4397 = vmatpush1.bf16.msra.mxu0 0
    %4398 = vmatprep.subr.bf16.mxu0 0
    %4399 = vmatpush1.bf16.msra.mxu0 0
    %4400 = vmatprep.subr.bf16.mxu0 0
    %4401 = vmatpush1.bf16.msra.mxu0 0
    %4402 = vmatprep.subr.bf16.mxu0 0
    %4403 = vmatpush1.bf16.msra.mxu0 0
    %4404 = vmatprep.subr.bf16.mxu0 0
    %4405 = vmatpush1.bf16.msra.mxu0 0
    %4406 = vmatprep.subr.bf16.mxu0 0
    %4407 = vmatpush1.bf16.msra.mxu0 0
    %4408 = vmatprep.subr.bf16.mxu0 0
    %4409 = vmatpush1.bf16.msra.mxu0 0
    %4410 = vmatprep.subr.bf16.mxu0 0
    %4411 = vmatpush1.bf16.msra.mxu0 0
    %4412 = vmatprep.mubr.bf16.mxu0 0
    %4413 = vmatmul.mubr.bf16.gmra.mrb[0].mxu0 %v4308
    %v4414 = vpop.f32.mrb[0].mxu0
    %v4415 = vadd.f32 %v4331, %v4414
    %v4416 = vpop.f32.mrb[0].mxu0
    %v4417 = vpop.f32.mrb[0].mxu0
    %v4418 = vadd.f32 %v4331, %v4417
    %v4419 = vpop.f32.mrb[0].mxu0
    %4420 = vmatprep.mubr.bf16.mxu0 0
    %4421 = vmatmul.mubr.bf16.gmra.mrb[0].mxu0 %v4309
    %v4422 = vpop.f32.mrb[0].mxu0
    %v4423 = vadd.f32 %v4331, %v4422
    %v4424 = vpop.f32.mrb[0].mxu0
    %v4425 = vpop.f32.mrb[0].mxu0
    %v4426 = vadd.f32 %v4331, %v4425
    %v4427 = vpop.f32.mrb[0].mxu0
    %4428 = vmatprep.mubr.bf16.mxu0 0
    %4429 = vmatmul.mubr.bf16.gmra.mrb[0].mxu0 %v4310
    %v4430 = vpop.f32.mrb[0].mxu0
    %v4431 = vadd.f32 %v4331, %v4430
    %v4432 = vpop.f32.mrb[0].mxu0
    %v4433 = vpop.f32.mrb[0].mxu0
    %v4434 = vadd.f32 %v4331, %v4433
    %v4435 = vpop.f32.mrb[0].mxu0
    %4436 = vdwg.mxu0
    %v4437 = vadd.f32 %v4415, %v4206
    %v4438 = vadd.f32 %v4418, %v4207
    %v4439 = vadd.f32 %v4423, %v4208
    %v4440 = vadd.f32 %v4426, %v4209
    %v4441 = vadd.f32 %v4431, %v4210
    %v4442 = vadd.f32 %v4434, %v4211
    %v4443 = vld [vmem:[#allocation6 + $0xc] sm:$0x1]
    %v4444 = vld [vmem:[#allocation6 + $0xd] sm:$0x1]
    %v4445 = vsel %vm220, %v4437, 0.0
    %4446 = vadd.xlane.f32.xlu0 %v4445
    %v4447 = vpop.xlane.xlu0 %4446
    %v4448 = vsel %vm220, %v4438, 0.0
    %4449 = vadd.xlane.f32.xlu0 %v4448
    %v4450 = vpop.xlane.xlu0 %4449
    %v4451 = vsel %vm220, %v4439, 0.0
    %4452 = vadd.xlane.f32.xlu0 %v4451
    %v4453 = vpop.xlane.xlu0 %4452
    %v4454 = vsel %vm220, %v4440, 0.0
    %4455 = vadd.xlane.f32.xlu0 %v4454
    %v4456 = vpop.xlane.xlu0 %4455
    %v4457 = vsel %vm220, %v4441, 0.0
    %4458 = vadd.xlane.f32.xlu0 %v4457
    %v4459 = vpop.xlane.xlu0 %4458
    %v4460 = vsel %vm220, %v4442, 0.0
    %4461 = vadd.xlane.f32.xlu0 %v4460
    %v4462 = vpop.xlane.xlu0 %4461
    %v4463 = vmul.f32 %v4447, %v1962
    %v4464 = vmul.f32 %v4450, %v1962
    %v4465 = vmul.f32 %v4453, %v1962
    %v4466 = vmul.f32 %v4456, %v1962
    %v4467 = vmul.f32 %v4459, %v1962
    %v4468 = vmul.f32 %v4462, %v1962
    %v4469 = vsub.f32 %v4437, %v4463
    %v4470 = vsub.f32 %v4438, %v4464
    %v4471 = vsub.f32 %v4439, %v4465
    %v4472 = vsub.f32 %v4440, %v4466
    %v4473 = vsub.f32 %v4441, %v4467
    %v4474 = vsub.f32 %v4442, %v4468
    %v4475 = vmul.f32 %v4469, %v4469
    %v4476 = vmul.f32 %v4470, %v4470
    %v4477 = vmul.f32 %v4471, %v4471
    %v4478 = vmul.f32 %v4472, %v4472
    %v4479 = vmul.f32 %v4473, %v4473
    %v4480 = vmul.f32 %v4474, %v4474
    %v4481 = vsel %vm220, %v4475, 0.0
    %4482 = vadd.xlane.f32.xlu0 %v4481
    %v4483 = vpop.xlane.xlu0 %4482
    %v4484 = vsel %vm220, %v4476, 0.0
    %4485 = vadd.xlane.f32.xlu0 %v4484
    %v4486 = vpop.xlane.xlu0 %4485
    %v4487 = vsel %vm220, %v4477, 0.0
    %4488 = vadd.xlane.f32.xlu0 %v4487
    %v4489 = vpop.xlane.xlu0 %4488
    %v4490 = vsel %vm220, %v4478, 0.0
    %4491 = vadd.xlane.f32.xlu0 %v4490
    %v4492 = vpop.xlane.xlu0 %4491
    %v4493 = vsel %vm220, %v4479, 0.0
    %4494 = vadd.xlane.f32.xlu0 %v4493
    %v4495 = vpop.xlane.xlu0 %4494
    %v4496 = vsel %vm220, %v4480, 0.0
    %4497 = vadd.xlane.f32.xlu0 %v4496
    %v4498 = vpop.xlane.xlu0 %4497
    %v4499 = vmul.f32 %v4483, %v1962
    %v4500 = vmul.f32 %v4486, %v1962
    %v4501 = vmul.f32 %v4489, %v1962
    %v4502 = vmul.f32 %v4492, %v1962
    %v4503 = vmul.f32 %v4495, %v1962
    %v4504 = vmul.f32 %v4498, %v1962
    %v4505 = vadd.f32 %v4499, 1e-05
    %v4506 = vadd.f32 %v4500, 1e-05
    %v4507 = vadd.f32 %v4501, 1e-05
    %v4508 = vadd.f32 %v4502, 1e-05
    %v4509 = vadd.f32 %v4503, 1e-05
    %v4510 = vadd.f32 %v4504, 1e-05
    %v4511 = vrsqrt.pop %v4505
    %v4512 = vrsqrt.pop %v4506
    %v4513 = vrsqrt.pop %v4507
    %v4514 = vrsqrt.pop %v4508
    %v4515 = vrsqrt.pop %v4509
    %v4516 = vrsqrt.pop %v4510
    %v4517 = vmul.f32 %v4469, %v4511
    %v4518 = vmul.f32 %v4470, %v4512
    %v4519 = vmul.f32 %v4471, %v4513
    %v4520 = vmul.f32 %v4472, %v4514
    %v4521 = vmul.f32 %v4473, %v4515
    %v4522 = vmul.f32 %v4474, %v4516
    %v4523 = vlaneseq
    %v4524 = vshrl.u32 %v4523, 7
    %v4525 = vsub.s32 0, %v4524
    %v4526 = vrot.slane %v4443, %v4525
    %v4527 = vmul.f32 %v4517, %v4526
    %v4528 = vmul.f32 %v4518, %v4526
    %v4529 = vmul.f32 %v4519, %v4526
    %v4530 = vmul.f32 %v4520, %v4526
    %v4531 = vmul.f32 %v4521, %v4526
    %v4532 = vmul.f32 %v4522, %v4526
    %v4533 = vlaneseq
    %v4534 = vshrl.u32 %v4533, 7
    %v4535 = vsub.s32 0, %v4534
    %v4536 = vrot.slane %v4444, %v4535
    %v4537 = vadd.f32 %v4527, %v4536
    %v4538 = vadd.f32 %v4528, %v4536
    %v4539 = vadd.f32 %v4529, %v4536
    %v4540 = vadd.f32 %v4530, %v4536
    %v4541 = vadd.f32 %v4531, %v4536
    %v4542 = vadd.f32 %v4532, %v4536
    %v4543 = vpack.c.bf16 %v4538, %v4537
    %v4544 = vpack.c.bf16 %v4540, %v4539
    %v4545 = vpack.c.bf16 %v4542, %v4541
    %v4546 = vld [vmem:[#allocation4 + $0x180] sm:$0xf]
    %v4547 = vld [vmem:[#allocation4 + $0x184] sm:$0xf]
    %v4548 = vld [vmem:[#allocation4 + $0x188] sm:$0xf]
    %v4549 = vld [vmem:[#allocation4 + $0x18c] sm:$0xf]
    %v4550 = vld [vmem:[#allocation6 + $0xe] sm:$0x1]
    %v4551 = vlaneseq
    %v4552 = vshrl.u32 %v4551, 7
    %v4553 = vsub.s32 0, %v4552
    %v4554 = vrot.slane %v4550, %v4553
    %v4559 = vunpack.c.l.b16 %v4546
    %v4560 = vunpack.c.l.b16 %v4547
    %v4561 = vunpack.c.l.b16 %v4548
    %v4562 = vunpack.c.l.b16 %v4549
    %v4563 = vpack.c.b16 %v4560, %v4559
    %v4564 = vpack.c.b16 %v4562, %v4561
    %v4568 = vsel %vm220, %v4543, 0
    %v4571 = vsel %vm220, %v4544, 0
    %v4574 = vsel %vm220, %v4545, 0
    %4576 = vmatprep.subr.bf16.mxu0 0
    %4577 = vmatpush1.bf16.msra.mxu0 %v4563
    %4578 = vmatprep.subr.bf16.mxu0 0
    %4579 = vmatpush1.bf16.msra.mxu0 %v4564
    %4580 = vmatprep.subr.bf16.mxu0 0
    %4581 = vmatpush1.bf16.msra.mxu0 0
    %4582 = vmatprep.subr.bf16.mxu0 0
    %4583 = vmatpush1.bf16.msra.mxu0 0
    %4584 = vmatprep.subr.bf16.mxu0 0
    %4585 = vmatpush1.bf16.msra.mxu0 0
    %4586 = vmatprep.subr.bf16.mxu0 0
    %4587 = vmatpush1.bf16.msra.mxu0 0
    %4588 = vmatprep.subr.bf16.mxu0 0
    %4589 = vmatpush1.bf16.msra.mxu0 0
    %4590 = vmatprep.subr.bf16.mxu0 0
    %4591 = vmatpush1.bf16.msra.mxu0 0
    %4592 = vmatprep.subr.bf16.mxu0 0
    %4593 = vmatpush1.bf16.msra.mxu0 0
    %4594 = vmatprep.subr.bf16.mxu0 0
    %4595 = vmatpush1.bf16.msra.mxu0 0
    %4596 = vmatprep.subr.bf16.mxu0 0
    %4597 = vmatpush1.bf16.msra.mxu0 0
    %4598 = vmatprep.subr.bf16.mxu0 0
    %4599 = vmatpush1.bf16.msra.mxu0 0
    %4600 = vmatprep.subr.bf16.mxu0 0
    %4601 = vmatpush1.bf16.msra.mxu0 0
    %4602 = vmatprep.subr.bf16.mxu0 0
    %4603 = vmatpush1.bf16.msra.mxu0 0
    %4604 = vmatprep.subr.bf16.mxu0 0
    %4605 = vmatpush1.bf16.msra.mxu0 0
    %4606 = vmatprep.subr.bf16.mxu0 0
    %4607 = vmatpush1.bf16.msra.mxu0 0
    %4608 = vmatprep.mubr.bf16.mxu0 0
    %4609 = vmatmul.mubr.bf16.gmra.mrb[0].mxu0 %v4568
    %v4610 = vpop.f32.mrb[0].mxu0
    %v4611 = vadd.f32 %v4554, %v4610
    %v4612 = vpop.f32.mrb[0].mxu0
    %v4613 = vpop.f32.mrb[0].mxu0
    %v4614 = vadd.f32 %v4554, %v4613
    %v4615 = vpop.f32.mrb[0].mxu0
    %4616 = vmatprep.mubr.bf16.mxu0 0
    %4617 = vmatmul.mubr.bf16.gmra.mrb[0].mxu0 %v4571
    %v4618 = vpop.f32.mrb[0].mxu0
    %v4619 = vadd.f32 %v4554, %v4618
    %v4620 = vpop.f32.mrb[0].mxu0
    %v4621 = vpop.f32.mrb[0].mxu0
    %v4622 = vadd.f32 %v4554, %v4621
    %v4623 = vpop.f32.mrb[0].mxu0
    %4624 = vmatprep.mubr.bf16.mxu0 0
    %4625 = vmatmul.mubr.bf16.gmra.mrb[0].mxu0 %v4574
    %v4626 = vpop.f32.mrb[0].mxu0
    %v4627 = vadd.f32 %v4554, %v4626
    %v4628 = vpop.f32.mrb[0].mxu0
    %v4629 = vpop.f32.mrb[0].mxu0
    %v4630 = vadd.f32 %v4554, %v4629
    %v4631 = vpop.f32.mrb[0].mxu0
    %4632 = vdwg.mxu0
    %4633 = vst.msk [vmem:[%s3] sm:$0xff] %vm220, %v4611
    %4634 = vst.msk [vmem:[%s3 + $0x8] sm:$0xff] %vm220, %v4614
    %4635 = vst.msk [vmem:[%s3 + $0x10] sm:$0xff] %vm220, %v4619
    %4636 = vst.msk [vmem:[%s3 + $0x18] sm:$0xff] %vm220, %v4622
    %4637 = vst.msk [vmem:[%s3 + $0x20] sm:$0xff] %vm220, %v4627
    %4638 = vst.msk [vmem:[%s3 + $0x28] sm:$0xff] %vm220, %v4630
    // Predicated region
    $region26: #{tpu_custom_call.1} parent=1 // pred_check
      _
    $region27: #{tpu_custom_call.1} parent=1 // pred_check_branch
      %4640 = sbr.rel (0) target = $region29
    $region28: #{tpu_custom_call.1} parent=1 // pred_region
      _
    $region29: #{tpu_custom_call.1} parent=1 // pred_fallthru
      _
    // Predicated region
    $region30: #{tpu_custom_call.1} parent=1 // pred_check
      _
    $region31: #{tpu_custom_call.1} parent=1 // pred_check_branch
      %4642 = sbr.rel (0) target = $region33
    $region32: #{tpu_custom_call.1} parent=1 // pred_region
      _
    $region33: #{tpu_custom_call.1} parent=1 // pred_fallthru
      _
    %4643 = vsyncpa [#allocation3], 1
    %4644 = vsyncpa [#allocation5], 1

</llo_original>
